<compile_context>
chip_gen: v7x
topology: tpu7x:2x2x1
jax: 0.10.0
libtpu: 0.0.40
codegen_flags: <defaults>
</compile_context>

<pallas_src>
import functools

import jax
import jax.numpy as jnp
from jax.experimental import pallas as pl
from jax.experimental.pallas import tpu as pltpu


def _crf_kernel(x_ref, w_ref, b_ref, trans_t_ref, start_ref, end_ref,
                tags_ref, mask_ref, len_ref, gold_ref,
                llh_ref, best_ref,
                emis_ref, hist_ref, path_ref, *, tag_pad_idx):
    T, D = w_ref.shape
    S = tags_ref.shape[0]
    B = tags_ref.shape[2]

    trans_t = trans_t_ref[...]          # (T, T): trans_t[cur, prev] = transitions[prev, cur]
    start = start_ref[...]              # (T, 1)
    end = end_ref[...]                  # (T, 1)
    lengths = len_ref[...]              # (1, B) int32

    iota_tag = jax.lax.broadcasted_iota(jnp.int32, (T, B), 0)       # tag id per sublane
    iota_prev = jax.lax.broadcasted_iota(jnp.int32, (T, T, B), 1)   # prev-tag id

    # ---- emissions: one fused bf16 MXU matmul; Dropout is eval-mode identity ----
    # TODO(synk): nn.Dropout training-mode randomness not reproduced (identity used).
    emis_all = jnp.dot(w_ref[...], x_ref[...],
                       preferred_element_type=jnp.float32) + b_ref[...]   # (T, S*B) f32
    for t in range(S):   # static layout repack (one pass) into time-major VMEM scratch
        emis_ref[t] = emis_all[:, t * B:(t + 1) * B]

    def gold_emit(t, e_t):
        # emission score of the gold tag at step t, per batch lane -> (1, B)
        return jnp.sum(jnp.where(iota_tag == tags_ref[t], e_t, 0.0),
                       axis=0, keepdims=True)

    # ---- t = 0 ----
    e0 = emis_ref[0]                     # (T, B)
    alpha0 = start + e0                  # forward log-alpha
    score0 = alpha0                      # Viterbi scores
    num0 = gold_emit(0, e0)              # (1, B)

    unroll = True if S <= 16 else 4

    # ---- fused forward (logsumexp) + Viterbi (max/argmax) + gold-emission recurrence ----
    def step(t, carry):
        alpha, score, num_em = carry
        e_t = emis_ref[t]                                   # (T_cur, B)
        m_t = mask_ref[t]                                   # (1, B) f32
        valid = m_t > 0.5

        base = e_t[:, None, :] + trans_t[:, :, None]        # (cur, prev, B), shared tensor

        # forward algorithm (log partition)
        x3 = base + alpha[None, :, :]
        mx = jnp.max(x3, axis=1)                            # (T, B)
        lse = mx + jnp.log(jnp.sum(jnp.exp(x3 - mx[:, None, :]), axis=1))
        alpha = jnp.where(valid, lse, alpha)

        # Viterbi max-product + backpointers, computed in the same pass
        y3 = base + score[None, :, :]
        mv = jnp.max(y3, axis=1)                            # (T, B)
        bp = jnp.min(jnp.where(y3 == mv[:, None, :], iota_prev, T), axis=1)  # first argmax
        hist_ref[t] = bp                                    # (T, B) int32 backpointers
        score = jnp.where(valid, mv, score)

        # gold-path emission score (start/transition/end parts were prefolded in wrapper)
        num_em = num_em + m_t * gold_emit(t, e_t)
        return alpha, score, num_em

    alpha, score, num_em = jax.lax.fori_loop(
        1, S, step, (alpha0, score0, num0), unroll=unroll)

    # ---- log-likelihood ----
    alpha = alpha + end
    mf = jnp.max(alpha, axis=0, keepdims=True)                               # (1, B)
    logz = mf + jnp.log(jnp.sum(jnp.exp(alpha - mf), axis=0, keepdims=True))
    llh_ref[...] = gold_ref[...] + num_em - logz

    # ---- Viterbi backtrace (batch-vectorized over lanes, variable lengths) ----
    score = score + end
    ms = jnp.max(score, axis=0, keepdims=True)
    cur = jnp.min(jnp.where(score == ms, iota_tag, T), axis=0, keepdims=True)  # (1, B) i32
    pad = jnp.full((1, B), tag_pad_idx, jnp.int32)

    path_ref[S - 1] = jnp.where(lengths >= S, cur, pad)

    def back(i, cur):
        t = S - 1 - i                                        # S-2 ... 0
        h = hist_ref[t + 1]                                  # (T, B) backpointers
        prev = jnp.sum(jnp.where(iota_tag == cur, h, 0), axis=0, keepdims=True)
        cur = jnp.where(lengths >= t + 2, prev, cur)
        path_ref[t] = jnp.where(lengths >= t + 1, cur, pad)
        return cur

    jax.lax.fori_loop(1, S, back, cur, unroll=unroll)

    best_ref[...] = path_ref[...]        # single lane-dense slab store of the decoded path


def crf_layer_forward(x, linear_w, linear_b, transitions, start_transitions,
                      end_transitions, tags, tag_pad_idx):
    S, B, D = x.shape
    T = linear_w.shape[0]

    tags_i = tags.astype(jnp.int32)                              # (S, B)
    mask = tags_i != tag_pad_idx
    mask_f = mask.astype(jnp.float32)
    lengths = jnp.sum(mask.astype(jnp.int32), axis=0)            # (B,)

    # Gold-path start/transition/end scores: cheap one-shot XLA gathers in the wrapper
    # (removes all one-hot matmuls from the kernel's numerator). Requires tags[0] valid
    # for every row, as torchcrf does.
    start_gold = start_transitions[tags_i[0]]                                   # (B,)
    if S > 1:
        trans_gold = jnp.sum(transitions[tags_i[:-1], tags_i[1:]] * mask_f[1:], axis=0)
    else:
        trans_gold = jnp.zeros((B,), jnp.float32)
    last_tag = tags_i[jnp.maximum(lengths - 1, 0), jnp.arange(B)]               # (B,)
    end_gold = end_transitions[last_tag]
    gold_const = (start_gold + trans_gold + end_gold)[None, :].astype(jnp.float32)

    # Layout plumbing: batch-in-lanes, time-major flattening for one fused emission matmul.
    x_t = x.transpose(2, 0, 1).reshape(D, S * B).astype(jnp.bfloat16)           # (D, S*B)

    inputs = (
        x_t,                                                     # (D, S*B) bf16
        linear_w.astype(jnp.bfloat16),                           # (T, D)   bf16
        linear_b.reshape(T, 1).astype(jnp.float32),              # (T, 1)
        transitions.T.astype(jnp.float32),                       # (T, T)  [cur, prev]
        start_transitions.reshape(T, 1).astype(jnp.float32),     # (T, 1)
        end_transitions.reshape(T, 1).astype(jnp.float32),       # (T, 1)
        tags_i.reshape(S, 1, B),                                 # (S, 1, B) int32
        mask_f.reshape(S, 1, B),                                 # (S, 1, B) f32
        lengths.reshape(1, B).astype(jnp.int32),                 # (1, B)
        gold_const,                                              # (1, B)
    )

    def full_spec(a):
        nd = a.ndim
        return pl.BlockSpec(a.shape, lambda i, _nd=nd: (0,) * _nd)

    out_shape = (
        jax.ShapeDtypeStruct((1, B), jnp.float32),    # per-sequence log-likelihood
        jax.ShapeDtypeStruct((S, 1, B), jnp.int32),   # Viterbi path (time-major, pad-filled)
    )
    out_specs = (
        pl.BlockSpec((1, B), lambda i: (0, 0)),
        pl.BlockSpec((S, 1, B), lambda i: (0, 0, 0)),
    )

    # TODO(synk): a batch-tile grid axis ("parallel", for v7x's 2 TCs) is omitted here
    # because the toy batch is far below one 128-lane tile; at production B, block the
    # lane (batch) dim of every batch-carrying operand with a 128-multiple tile.
    llh, best = pl.pallas_call(
        functools.partial(_crf_kernel, tag_pad_idx=tag_pad_idx),
        grid=(1,),
        in_specs=[full_spec(a) for a in inputs],
        out_shape=out_shape,
        out_specs=out_specs,
        scratch_shapes=[
            pltpu.VMEM((S, T, B), jnp.float32),   # emissions (time-major, batch-in-lanes)
            pltpu.VMEM((S, T, B), jnp.int32),     # Viterbi backpointers
            pltpu.VMEM((S, 1, B), jnp.int32),     # decoded-path accumulator
        ],
        compiler_params=pltpu.CompilerParams(
            dimension_semantics=("arbitrary",),
            vmem_limit_bytes=32 * 1024 * 1024,
        ),
    )(*inputs)

    crf_out = best.reshape(S, B).T               # (B, S) decoded tag ids (pad-filled)
    crf_loss = -jnp.sum(llh)                     # -CRF(emissions, tags, mask), 'sum'
    return crf_out, crf_loss


if __name__ == "__main__":
    S, B, D, T = 8, 4, 32, 8        # seq_len, batch, input_dim, output_dim(num_tags)
    tag_pad_idx = 0

    key = jax.random.PRNGKey(0)
    ks = jax.random.split(key, 7)
    x = jax.random.normal(ks[0], (S, B, D), jnp.float32)
    linear_w = 0.1 * jax.random.normal(ks[1], (T, D), jnp.float32)      # nn.Linear.weight
    linear_b = 0.1 * jax.random.normal(ks[2], (T,), jnp.float32)        # nn.Linear.bias
    transitions = jax.random.uniform(ks[3], (T, T), jnp.float32, -0.1, 0.1)
    start_transitions = jax.random.uniform(ks[4], (T,), jnp.float32, -0.1, 0.1)
    end_transitions = jax.random.uniform(ks[5], (T,), jnp.float32, -0.1, 0.1)

    # tags: valid positions get non-pad ids, padded tail gets tag_pad_idx (row 0 all valid,
    # as torchcrf requires).
    seq_lens = jnp.array([8, 5, 8, 3], jnp.int32)
    rand_tags = jax.random.randint(ks[6], (S, B), 1, T)
    t_idx = jnp.arange(S)[:, None]
    tags = jnp.where(t_idx < seq_lens[None, :], rand_tags, tag_pad_idx).astype(jnp.int32)

    crf_out, crf_loss = crf_layer_forward(
        x, linear_w, linear_b, transitions, start_transitions, end_transitions,
        tags, tag_pad_idx)
    jax.block_until_ready((crf_out, crf_loss))
    print("KERNEL_OK")
</pallas_src>

<mosaic_0001>
module attributes {stable_mosaic.version = 11 : i64} {
  func.func @_crf_kernel(%arg0: i32, %arg1: memref<32x32xbf16, #tpu.memory_space<vmem>>, %arg2: memref<8x32xbf16, #tpu.memory_space<vmem>>, %arg3: memref<8x1xf32, #tpu.memory_space<vmem>>, %arg4: memref<8x8xf32, #tpu.memory_space<vmem>>, %arg5: memref<8x1xf32, #tpu.memory_space<vmem>>, %arg6: memref<8x1xf32, #tpu.memory_space<vmem>>, %arg7: memref<8x1x4xi32, #tpu.memory_space<vmem>>, %arg8: memref<8x1x4xf32, #tpu.memory_space<vmem>>, %arg9: memref<1x4xi32, #tpu.memory_space<vmem>>, %arg10: memref<1x4xf32, #tpu.memory_space<vmem>>, %arg11: memref<1x4xf32, #tpu.memory_space<vmem>>, %arg12: memref<8x1x4xi32, #tpu.memory_space<vmem>>, %arg13: memref<8x8x4xf32, #tpu.memory_space<vmem>>, %arg14: memref<8x8x4xi32, #tpu.memory_space<vmem>>, %arg15: memref<8x1x4xi32, #tpu.memory_space<vmem>>) attributes {dimension_semantics = [#tpu.dimension_semantics<arbitrary>], iteration_bounds = array<i64: 1>, scalar_prefetch = 0 : i64, scratch_operands = 3 : i64, tpu.core_type = #tpu.core_type<tc>, window_params = [{pipeline_mode = #tpu.pipeline_mode<synchronous>, transform_indices = @transform_0, window_bounds = array<i64: 32, 32>}, {pipeline_mode = #tpu.pipeline_mode<synchronous>, transform_indices = @transform_1, window_bounds = array<i64: 8, 32>}, {pipeline_mode = #tpu.pipeline_mode<synchronous>, transform_indices = @transform_2, window_bounds = array<i64: 8, 1>}, {pipeline_mode = #tpu.pipeline_mode<synchronous>, transform_indices = @transform_3, window_bounds = array<i64: 8, 8>}, {pipeline_mode = #tpu.pipeline_mode<synchronous>, transform_indices = @transform_4, window_bounds = array<i64: 8, 1>}, {pipeline_mode = #tpu.pipeline_mode<synchronous>, transform_indices = @transform_5, window_bounds = array<i64: 8, 1>}, {pipeline_mode = #tpu.pipeline_mode<synchronous>, transform_indices = @transform_6, window_bounds = array<i64: 8, 1, 4>}, {pipeline_mode = #tpu.pipeline_mode<synchronous>, transform_indices = @transform_7, window_bounds = array<i64: 8, 1, 4>}, {pipeline_mode = #tpu.pipeline_mode<synchronous>, transform_indices = @transform_8, window_bounds = array<i64: 1, 4>}, {pipeline_mode = #tpu.pipeline_mode<synchronous>, transform_indices = @transform_9, window_bounds = array<i64: 1, 4>}, {pipeline_mode = #tpu.pipeline_mode<synchronous>, transform_indices = @transform_10, window_bounds = array<i64: 1, 4>}, {pipeline_mode = #tpu.pipeline_mode<synchronous>, transform_indices = @transform_11, window_bounds = array<i64: 8, 1, 4>}]} {
    %c0 = arith.constant 0 : index
    %c0_0 = arith.constant 0 : index
    %0 = vector.load %arg4[%c0, %c0_0] : memref<8x8xf32, #tpu.memory_space<vmem>>, vector<8x8xf32>
    %c0_1 = arith.constant 0 : index
    %c0_2 = arith.constant 0 : index
    %1 = vector.load %arg5[%c0_1, %c0_2] : memref<8x1xf32, #tpu.memory_space<vmem>>, vector<8x1xf32>
    %c0_3 = arith.constant 0 : index
    %c0_4 = arith.constant 0 : index
    %2 = vector.load %arg6[%c0_3, %c0_4] : memref<8x1xf32, #tpu.memory_space<vmem>>, vector<8x1xf32>
    %c0_5 = arith.constant 0 : index
    %c0_6 = arith.constant 0 : index
    %3 = vector.load %arg9[%c0_5, %c0_6] : memref<1x4xi32, #tpu.memory_space<vmem>>, vector<1x4xi32>
    %4 = tpu.iota {dimensions = array<i32: 0>} : vector<8x4xi32>
    %5 = tpu.iota {dimensions = array<i32: 1>} : vector<8x8x4xi32>
    %c0_7 = arith.constant 0 : index
    %c0_8 = arith.constant 0 : index
    %6 = vector.load %arg2[%c0_7, %c0_8] : memref<8x32xbf16, #tpu.memory_space<vmem>>, vector<8x32xbf16>
    %c0_9 = arith.constant 0 : index
    %c0_10 = arith.constant 0 : index
    %7 = vector.load %arg1[%c0_9, %c0_10] : memref<32x32xbf16, #tpu.memory_space<vmem>>, vector<32x32xbf16>
    %cst = arith.constant dense<0.000000e+00> : vector<8x32xf32>
    %8 = tpu.matmul %6, %7, %cst {dimension_numbers = #tpu.dot_dimension_numbers<[1], [0], [0], [1], [0, 0, 1, 1], [], []>} : vector<8x32xbf16>, vector<32x32xbf16>, vector<8x32xf32> -> vector<8x32xf32>
    %c0_11 = arith.constant 0 : index
    %c0_12 = arith.constant 0 : index
    %9 = vector.load %arg3[%c0_11, %c0_12] : memref<8x1xf32, #tpu.memory_space<vmem>>, vector<8x1xf32>
    %10 = vector.broadcast %9 : vector<8x1xf32> to vector<8x32xf32>
    %11 = arith.addf %8, %10 : vector<8x32xf32>
    %12 = vector.extract_strided_slice %11 {offsets = [0, 0], sizes = [8, 4], strides = [1, 1]} : vector<8x32xf32> to vector<8x4xf32>
    %c0_13 = arith.constant 0 : index
    %c0_14 = arith.constant 0 : index
    %c0_15 = arith.constant 0 : index
    %13 = vector.load %arg13[%c0_13, %c0_14, %c0_15] : memref<8x8x4xf32, #tpu.memory_space<vmem>>, vector<1x8x4xf32>
    %14 = vector.shape_cast %13 : vector<1x8x4xf32> to vector<8x4xf32>
    %15 = vector.shape_cast %12 : vector<8x4xf32> to vector<1x8x4xf32>
    tpu.vector_store %arg13[%c0_13, %c0_14, %c0_15], %15 {strides = array<i32>} : memref<8x8x4xf32, #tpu.memory_space<vmem>>, vector<1x8x4xf32>,
    %16 = vector.extract_strided_slice %11 {offsets = [0, 4], sizes = [8, 4], strides = [1, 1]} : vector<8x32xf32> to vector<8x4xf32>
    %c1 = arith.constant 1 : index
    %c0_16 = arith.constant 0 : index
    %c0_17 = arith.constant 0 : index
    %17 = vector.load %arg13[%c1, %c0_16, %c0_17] : memref<8x8x4xf32, #tpu.memory_space<vmem>>, vector<1x8x4xf32>
    %18 = vector.shape_cast %17 : vector<1x8x4xf32> to vector<8x4xf32>
    %19 = vector.shape_cast %16 : vector<8x4xf32> to vector<1x8x4xf32>
    tpu.vector_store %arg13[%c1, %c0_16, %c0_17], %19 {strides = array<i32>} : memref<8x8x4xf32, #tpu.memory_space<vmem>>, vector<1x8x4xf32>,
    %20 = vector.extract_strided_slice %11 {offsets = [0, 8], sizes = [8, 4], strides = [1, 1]} : vector<8x32xf32> to vector<8x4xf32>
    %c2 = arith.constant 2 : index
    %c0_18 = arith.constant 0 : index
    %c0_19 = arith.constant 0 : index
    %21 = vector.load %arg13[%c2, %c0_18, %c0_19] : memref<8x8x4xf32, #tpu.memory_space<vmem>>, vector<1x8x4xf32>
    %22 = vector.shape_cast %21 : vector<1x8x4xf32> to vector<8x4xf32>
    %23 = vector.shape_cast %20 : vector<8x4xf32> to vector<1x8x4xf32>
    tpu.vector_store %arg13[%c2, %c0_18, %c0_19], %23 {strides = array<i32>} : memref<8x8x4xf32, #tpu.memory_space<vmem>>, vector<1x8x4xf32>,
    %24 = vector.extract_strided_slice %11 {offsets = [0, 12], sizes = [8, 4], strides = [1, 1]} : vector<8x32xf32> to vector<8x4xf32>
    %c3 = arith.constant 3 : index
    %c0_20 = arith.constant 0 : index
    %c0_21 = arith.constant 0 : index
    %25 = vector.load %arg13[%c3, %c0_20, %c0_21] : memref<8x8x4xf32, #tpu.memory_space<vmem>>, vector<1x8x4xf32>
    %26 = vector.shape_cast %25 : vector<1x8x4xf32> to vector<8x4xf32>
    %27 = vector.shape_cast %24 : vector<8x4xf32> to vector<1x8x4xf32>
    tpu.vector_store %arg13[%c3, %c0_20, %c0_21], %27 {strides = array<i32>} : memref<8x8x4xf32, #tpu.memory_space<vmem>>, vector<1x8x4xf32>,
    %28 = vector.extract_strided_slice %11 {offsets = [0, 16], sizes = [8, 4], strides = [1, 1]} : vector<8x32xf32> to vector<8x4xf32>
    %c4 = arith.constant 4 : index
    %c0_22 = arith.constant 0 : index
    %c0_23 = arith.constant 0 : index
    %29 = vector.load %arg13[%c4, %c0_22, %c0_23] : memref<8x8x4xf32, #tpu.memory_space<vmem>>, vector<1x8x4xf32>
    %30 = vector.shape_cast %29 : vector<1x8x4xf32> to vector<8x4xf32>
    %31 = vector.shape_cast %28 : vector<8x4xf32> to vector<1x8x4xf32>
    tpu.vector_store %arg13[%c4, %c0_22, %c0_23], %31 {strides = array<i32>} : memref<8x8x4xf32, #tpu.memory_space<vmem>>, vector<1x8x4xf32>,
    %32 = vector.extract_strided_slice %11 {offsets = [0, 20], sizes = [8, 4], strides = [1, 1]} : vector<8x32xf32> to vector<8x4xf32>
    %c5 = arith.constant 5 : index
    %c0_24 = arith.constant 0 : index
    %c0_25 = arith.constant 0 : index
    %33 = vector.load %arg13[%c5, %c0_24, %c0_25] : memref<8x8x4xf32, #tpu.memory_space<vmem>>, vector<1x8x4xf32>
    %34 = vector.shape_cast %33 : vector<1x8x4xf32> to vector<8x4xf32>
    %35 = vector.shape_cast %32 : vector<8x4xf32> to vector<1x8x4xf32>
    tpu.vector_store %arg13[%c5, %c0_24, %c0_25], %35 {strides = array<i32>} : memref<8x8x4xf32, #tpu.memory_space<vmem>>, vector<1x8x4xf32>,
    %36 = vector.extract_strided_slice %11 {offsets = [0, 24], sizes = [8, 4], strides = [1, 1]} : vector<8x32xf32> to vector<8x4xf32>
    %c6 = arith.constant 6 : index
    %c0_26 = arith.constant 0 : index
    %c0_27 = arith.constant 0 : index
    %37 = vector.load %arg13[%c6, %c0_26, %c0_27] : memref<8x8x4xf32, #tpu.memory_space<vmem>>, vector<1x8x4xf32>
    %38 = vector.shape_cast %37 : vector<1x8x4xf32> to vector<8x4xf32>
    %39 = vector.shape_cast %36 : vector<8x4xf32> to vector<1x8x4xf32>
    tpu.vector_store %arg13[%c6, %c0_26, %c0_27], %39 {strides = array<i32>} : memref<8x8x4xf32, #tpu.memory_space<vmem>>, vector<1x8x4xf32>,
    %40 = vector.extract_strided_slice %11 {offsets = [0, 28], sizes = [8, 4], strides = [1, 1]} : vector<8x32xf32> to vector<8x4xf32>
    %c7 = arith.constant 7 : index
    %c0_28 = arith.constant 0 : index
    %c0_29 = arith.constant 0 : index
    %41 = vector.load %arg13[%c7, %c0_28, %c0_29] : memref<8x8x4xf32, #tpu.memory_space<vmem>>, vector<1x8x4xf32>
    %42 = vector.shape_cast %41 : vector<1x8x4xf32> to vector<8x4xf32>
    %43 = vector.shape_cast %40 : vector<8x4xf32> to vector<1x8x4xf32>
    tpu.vector_store %arg13[%c7, %c0_28, %c0_29], %43 {strides = array<i32>} : memref<8x8x4xf32, #tpu.memory_space<vmem>>, vector<1x8x4xf32>,
    %c0_30 = arith.constant 0 : index
    %c0_31 = arith.constant 0 : index
    %c0_32 = arith.constant 0 : index
    %44 = vector.load %arg13[%c0_30, %c0_31, %c0_32] : memref<8x8x4xf32, #tpu.memory_space<vmem>>, vector<1x8x4xf32>
    %45 = vector.shape_cast %44 : vector<1x8x4xf32> to vector<8x4xf32>
    %46 = vector.broadcast %1 : vector<8x1xf32> to vector<8x4xf32>
    %47 = arith.addf %46, %45 : vector<8x4xf32>
    %c0_33 = arith.constant 0 : index
    %c0_34 = arith.constant 0 : index
    %c0_35 = arith.constant 0 : index
    %48 = vector.load %arg7[%c0_33, %c0_34, %c0_35] : memref<8x1x4xi32, #tpu.memory_space<vmem>>, vector<1x1x4xi32>
    %49 = vector.shape_cast %48 : vector<1x1x4xi32> to vector<1x4xi32>
    %50 = vector.broadcast %49 : vector<1x4xi32> to vector<8x4xi32>
    %51 = arith.cmpi eq, %4, %50 : vector<8x4xi32>
    %cst_36 = arith.constant 0.000000e+00 : f32
    %52 = vector.broadcast %cst_36 : f32 to vector<8x4xf32>
    %53 = arith.select %51, %45, %52 : vector<8x4xi1>, vector<8x4xf32>
    %cst_37 = arith.constant dense<0.000000e+00> : vector<4xf32>
    %54 = vector.multi_reduction <add>, %53, %cst_37 [0] : vector<8x4xf32> to vector<4xf32>
    %55 = vector.shape_cast %54 : vector<4xf32> to vector<1x4xf32>
    %c1_i32 = arith.constant 1 : i32
    %56 = arith.index_cast %c1_i32 : i32 to index
    %c0_38 = arith.constant 0 : index
    %c0_39 = arith.constant 0 : index
    %57 = vector.load %arg13[%56, %c0_38, %c0_39] : memref<8x8x4xf32, #tpu.memory_space<vmem>>, vector<1x8x4xf32>
    %58 = vector.shape_cast %57 : vector<1x8x4xf32> to vector<8x4xf32>
    %59 = arith.index_cast %c1_i32 : i32 to index
    %c0_40 = arith.constant 0 : index
    %c0_41 = arith.constant 0 : index
    %60 = vector.load %arg8[%59, %c0_40, %c0_41] : memref<8x1x4xf32, #tpu.memory_space<vmem>>, vector<1x1x4xf32>
    %61 = vector.shape_cast %60 : vector<1x1x4xf32> to vector<1x4xf32>
    %cst_42 = arith.constant 5.000000e-01 : f32
    %62 = vector.broadcast %cst_42 : f32 to vector<1x4xf32>
    %63 = arith.cmpf ogt, %61, %62 : vector<1x4xf32>
    %64 = vector.shape_cast %58 : vector<8x4xf32> to vector<8x1x4xf32>
    %65 = vector.shape_cast %0 : vector<8x8xf32> to vector<8x8x1xf32>
    %66 = vector.broadcast %64 : vector<8x1x4xf32> to vector<8x8x4xf32>
    %67 = vector.broadcast %65 : vector<8x8x1xf32> to vector<8x8x4xf32>
    %68 = arith.addf %66, %67 : vector<8x8x4xf32>
    %69 = vector.shape_cast %47 : vector<8x4xf32> to vector<1x8x4xf32>
    %70 = vector.broadcast %69 : vector<1x8x4xf32> to vector<8x8x4xf32>
    %71 = arith.addf %68, %70 : vector<8x8x4xf32>
    %cst_43 = arith.constant dense<0xFF800000> : vector<8x4xf32>
    %72 = vector.multi_reduction <maximumf>, %71, %cst_43 [1] : vector<8x8x4xf32> to vector<8x4xf32>
    %73 = vector.shape_cast %72 : vector<8x4xf32> to vector<8x1x4xf32>
    %74 = vector.broadcast %73 : vector<8x1x4xf32> to vector<8x8x4xf32>
    %75 = arith.subf %71, %74 : vector<8x8x4xf32>
    %76 = math.exp %75 : vector<8x8x4xf32>
    %cst_44 = arith.constant dense<0.000000e+00> : vector<8x4xf32>
    %77 = vector.multi_reduction <add>, %76, %cst_44 [1] : vector<8x8x4xf32> to vector<8x4xf32>
    %78 = math.log %77 : vector<8x4xf32>
    %79 = arith.addf %72, %78 : vector<8x4xf32>
    %80 = vector.shape_cast %63 : vector<1x4xi1> to vector<1x4xi1>
    %81 = vector.broadcast %80 : vector<1x4xi1> to vector<8x4xi1>
    %82 = arith.select %81, %79, %47 : vector<8x4xi1>, vector<8x4xf32>
    %83 = vector.shape_cast %47 : vector<8x4xf32> to vector<1x8x4xf32>
    %84 = vector.broadcast %83 : vector<1x8x4xf32> to vector<8x8x4xf32>
    %85 = arith.addf %68, %84 : vector<8x8x4xf32>
    %cst_45 = arith.constant dense<0xFF800000> : vector<8x4xf32>
    %86 = vector.multi_reduction <maximumf>, %85, %cst_45 [1] : vector<8x8x4xf32> to vector<8x4xf32>
    %87 = vector.shape_cast %86 : vector<8x4xf32> to vector<8x1x4xf32>
    %88 = vector.broadcast %87 : vector<8x1x4xf32> to vector<8x8x4xf32>
    %89 = arith.cmpf oeq, %85, %88 : vector<8x8x4xf32>
    %c8_i32 = arith.constant 8 : i32
    %90 = vector.broadcast %c8_i32 : i32 to vector<8x8x4xi32>
    %91 = arith.select %89, %5, %90 : vector<8x8x4xi1>, vector<8x8x4xi32>
    %cst_46 = arith.constant dense<2147483647> : vector<8x4xi32>
    %92 = vector.multi_reduction <minsi>, %91, %cst_46 [1] : vector<8x8x4xi32> to vector<8x4xi32>
    %93 = arith.index_cast %c1_i32 : i32 to index
    %c0_47 = arith.constant 0 : index
    %c0_48 = arith.constant 0 : index
    %94 = vector.load %arg14[%93, %c0_47, %c0_48] : memref<8x8x4xi32, #tpu.memory_space<vmem>>, vector<1x8x4xi32>
    %95 = vector.shape_cast %94 : vector<1x8x4xi32> to vector<8x4xi32>
    %96 = vector.shape_cast %92 : vector<8x4xi32> to vector<1x8x4xi32>
    tpu.vector_store %arg14[%93, %c0_47, %c0_48], %96 {strides = array<i32>} : memref<8x8x4xi32, #tpu.memory_space<vmem>>, vector<1x8x4xi32>,
    %97 = vector.shape_cast %63 : vector<1x4xi1> to vector<1x4xi1>
    %98 = vector.broadcast %97 : vector<1x4xi1> to vector<8x4xi1>
    %99 = arith.select %98, %86, %47 : vector<8x4xi1>, vector<8x4xf32>
    %100 = arith.index_cast %c1_i32 : i32 to index
    %c0_49 = arith.constant 0 : index
    %c0_50 = arith.constant 0 : index
    %101 = vector.load %arg7[%100, %c0_49, %c0_50] : memref<8x1x4xi32, #tpu.memory_space<vmem>>, vector<1x1x4xi32>
    %102 = vector.shape_cast %101 : vector<1x1x4xi32> to vector<1x4xi32>
    %103 = vector.broadcast %102 : vector<1x4xi32> to vector<8x4xi32>
    %104 = arith.cmpi eq, %4, %103 : vector<8x4xi32>
    %cst_51 = arith.constant 0.000000e+00 : f32
    %105 = vector.broadcast %cst_51 : f32 to vector<8x4xf32>
    %106 = arith.select %104, %58, %105 : vector<8x4xi1>, vector<8x4xf32>
    %cst_52 = arith.constant dense<0.000000e+00> : vector<4xf32>
    %107 = vector.multi_reduction <add>, %106, %cst_52 [0] : vector<8x4xf32> to vector<4xf32>
    %108 = vector.shape_cast %107 : vector<4xf32> to vector<1x4xf32>
    %109 = arith.mulf %61, %108 : vector<1x4xf32>
    %110 = arith.addf %55, %109 : vector<1x4xf32>
    %c2_i32 = arith.constant 2 : i32
    %111 = arith.index_cast %c2_i32 : i32 to index
    %c0_53 = arith.constant 0 : index
    %c0_54 = arith.constant 0 : index
    %112 = vector.load %arg13[%111, %c0_53, %c0_54] : memref<8x8x4xf32, #tpu.memory_space<vmem>>, vector<1x8x4xf32>
    %113 = vector.shape_cast %112 : vector<1x8x4xf32> to vector<8x4xf32>
    %114 = arith.index_cast %c2_i32 : i32 to index
    %c0_55 = arith.constant 0 : index
    %c0_56 = arith.constant 0 : index
    %115 = vector.load %arg8[%114, %c0_55, %c0_56] : memref<8x1x4xf32, #tpu.memory_space<vmem>>, vector<1x1x4xf32>
    %116 = vector.shape_cast %115 : vector<1x1x4xf32> to vector<1x4xf32>
    %cst_57 = arith.constant 5.000000e-01 : f32
    %117 = vector.broadcast %cst_57 : f32 to vector<1x4xf32>
    %118 = arith.cmpf ogt, %116, %117 : vector<1x4xf32>
    %119 = vector.shape_cast %113 : vector<8x4xf32> to vector<8x1x4xf32>
    %120 = vector.shape_cast %0 : vector<8x8xf32> to vector<8x8x1xf32>
    %121 = vector.broadcast %119 : vector<8x1x4xf32> to vector<8x8x4xf32>
    %122 = vector.broadcast %120 : vector<8x8x1xf32> to vector<8x8x4xf32>
    %123 = arith.addf %121, %122 : vector<8x8x4xf32>
    %124 = vector.shape_cast %82 : vector<8x4xf32> to vector<1x8x4xf32>
    %125 = vector.broadcast %124 : vector<1x8x4xf32> to vector<8x8x4xf32>
    %126 = arith.addf %123, %125 : vector<8x8x4xf32>
    %cst_58 = arith.constant dense<0xFF800000> : vector<8x4xf32>
    %127 = vector.multi_reduction <maximumf>, %126, %cst_58 [1] : vector<8x8x4xf32> to vector<8x4xf32>
    %128 = vector.shape_cast %127 : vector<8x4xf32> to vector<8x1x4xf32>
    %129 = vector.broadcast %128 : vector<8x1x4xf32> to vector<8x8x4xf32>
    %130 = arith.subf %126, %129 : vector<8x8x4xf32>
    %131 = math.exp %130 : vector<8x8x4xf32>
    %cst_59 = arith.constant dense<0.000000e+00> : vector<8x4xf32>
    %132 = vector.multi_reduction <add>, %131, %cst_59 [1] : vector<8x8x4xf32> to vector<8x4xf32>
    %133 = math.log %132 : vector<8x4xf32>
    %134 = arith.addf %127, %133 : vector<8x4xf32>
    %135 = vector.shape_cast %118 : vector<1x4xi1> to vector<1x4xi1>
    %136 = vector.broadcast %135 : vector<1x4xi1> to vector<8x4xi1>
    %137 = arith.select %136, %134, %82 : vector<8x4xi1>, vector<8x4xf32>
    %138 = vector.shape_cast %99 : vector<8x4xf32> to vector<1x8x4xf32>
    %139 = vector.broadcast %138 : vector<1x8x4xf32> to vector<8x8x4xf32>
    %140 = arith.addf %123, %139 : vector<8x8x4xf32>
    %cst_60 = arith.constant dense<0xFF800000> : vector<8x4xf32>
    %141 = vector.multi_reduction <maximumf>, %140, %cst_60 [1] : vector<8x8x4xf32> to vector<8x4xf32>
    %142 = vector.shape_cast %141 : vector<8x4xf32> to vector<8x1x4xf32>
    %143 = vector.broadcast %142 : vector<8x1x4xf32> to vector<8x8x4xf32>
    %144 = arith.cmpf oeq, %140, %143 : vector<8x8x4xf32>
    %c8_i32_61 = arith.constant 8 : i32
    %145 = vector.broadcast %c8_i32_61 : i32 to vector<8x8x4xi32>
    %146 = arith.select %144, %5, %145 : vector<8x8x4xi1>, vector<8x8x4xi32>
    %cst_62 = arith.constant dense<2147483647> : vector<8x4xi32>
    %147 = vector.multi_reduction <minsi>, %146, %cst_62 [1] : vector<8x8x4xi32> to vector<8x4xi32>
    %148 = arith.index_cast %c2_i32 : i32 to index
    %c0_63 = arith.constant 0 : index
    %c0_64 = arith.constant 0 : index
    %149 = vector.load %arg14[%148, %c0_63, %c0_64] : memref<8x8x4xi32, #tpu.memory_space<vmem>>, vector<1x8x4xi32>
    %150 = vector.shape_cast %149 : vector<1x8x4xi32> to vector<8x4xi32>
    %151 = vector.shape_cast %147 : vector<8x4xi32> to vector<1x8x4xi32>
    tpu.vector_store %arg14[%148, %c0_63, %c0_64], %151 {strides = array<i32>} : memref<8x8x4xi32, #tpu.memory_space<vmem>>, vector<1x8x4xi32>,
    %152 = vector.shape_cast %118 : vector<1x4xi1> to vector<1x4xi1>
    %153 = vector.broadcast %152 : vector<1x4xi1> to vector<8x4xi1>
    %154 = arith.select %153, %141, %99 : vector<8x4xi1>, vector<8x4xf32>
    %155 = arith.index_cast %c2_i32 : i32 to index
    %c0_65 = arith.constant 0 : index
    %c0_66 = arith.constant 0 : index
    %156 = vector.load %arg7[%155, %c0_65, %c0_66] : memref<8x1x4xi32, #tpu.memory_space<vmem>>, vector<1x1x4xi32>
    %157 = vector.shape_cast %156 : vector<1x1x4xi32> to vector<1x4xi32>
    %158 = vector.broadcast %157 : vector<1x4xi32> to vector<8x4xi32>
    %159 = arith.cmpi eq, %4, %158 : vector<8x4xi32>
    %cst_67 = arith.constant 0.000000e+00 : f32
    %160 = vector.broadcast %cst_67 : f32 to vector<8x4xf32>
    %161 = arith.select %159, %113, %160 : vector<8x4xi1>, vector<8x4xf32>
    %cst_68 = arith.constant dense<0.000000e+00> : vector<4xf32>
    %162 = vector.multi_reduction <add>, %161, %cst_68 [0] : vector<8x4xf32> to vector<4xf32>
    %163 = vector.shape_cast %162 : vector<4xf32> to vector<1x4xf32>
    %164 = arith.mulf %116, %163 : vector<1x4xf32>
    %165 = arith.addf %110, %164 : vector<1x4xf32>
    %c3_i32 = arith.constant 3 : i32
    %166 = arith.index_cast %c3_i32 : i32 to index
    %c0_69 = arith.constant 0 : index
    %c0_70 = arith.constant 0 : index
    %167 = vector.load %arg13[%166, %c0_69, %c0_70] : memref<8x8x4xf32, #tpu.memory_space<vmem>>, vector<1x8x4xf32>
    %168 = vector.shape_cast %167 : vector<1x8x4xf32> to vector<8x4xf32>
    %169 = arith.index_cast %c3_i32 : i32 to index
    %c0_71 = arith.constant 0 : index
    %c0_72 = arith.constant 0 : index
    %170 = vector.load %arg8[%169, %c0_71, %c0_72] : memref<8x1x4xf32, #tpu.memory_space<vmem>>, vector<1x1x4xf32>
    %171 = vector.shape_cast %170 : vector<1x1x4xf32> to vector<1x4xf32>
    %cst_73 = arith.constant 5.000000e-01 : f32
    %172 = vector.broadcast %cst_73 : f32 to vector<1x4xf32>
    %173 = arith.cmpf ogt, %171, %172 : vector<1x4xf32>
    %174 = vector.shape_cast %168 : vector<8x4xf32> to vector<8x1x4xf32>
    %175 = vector.shape_cast %0 : vector<8x8xf32> to vector<8x8x1xf32>
    %176 = vector.broadcast %174 : vector<8x1x4xf32> to vector<8x8x4xf32>
    %177 = vector.broadcast %175 : vector<8x8x1xf32> to vector<8x8x4xf32>
    %178 = arith.addf %176, %177 : vector<8x8x4xf32>
    %179 = vector.shape_cast %137 : vector<8x4xf32> to vector<1x8x4xf32>
    %180 = vector.broadcast %179 : vector<1x8x4xf32> to vector<8x8x4xf32>
    %181 = arith.addf %178, %180 : vector<8x8x4xf32>
    %cst_74 = arith.constant dense<0xFF800000> : vector<8x4xf32>
    %182 = vector.multi_reduction <maximumf>, %181, %cst_74 [1] : vector<8x8x4xf32> to vector<8x4xf32>
    %183 = vector.shape_cast %182 : vector<8x4xf32> to vector<8x1x4xf32>
    %184 = vector.broadcast %183 : vector<8x1x4xf32> to vector<8x8x4xf32>
    %185 = arith.subf %181, %184 : vector<8x8x4xf32>
    %186 = math.exp %185 : vector<8x8x4xf32>
    %cst_75 = arith.constant dense<0.000000e+00> : vector<8x4xf32>
    %187 = vector.multi_reduction <add>, %186, %cst_75 [1] : vector<8x8x4xf32> to vector<8x4xf32>
    %188 = math.log %187 : vector<8x4xf32>
    %189 = arith.addf %182, %188 : vector<8x4xf32>
    %190 = vector.shape_cast %173 : vector<1x4xi1> to vector<1x4xi1>
    %191 = vector.broadcast %190 : vector<1x4xi1> to vector<8x4xi1>
    %192 = arith.select %191, %189, %137 : vector<8x4xi1>, vector<8x4xf32>
    %193 = vector.shape_cast %154 : vector<8x4xf32> to vector<1x8x4xf32>
    %194 = vector.broadcast %193 : vector<1x8x4xf32> to vector<8x8x4xf32>
    %195 = arith.addf %178, %194 : vector<8x8x4xf32>
    %cst_76 = arith.constant dense<0xFF800000> : vector<8x4xf32>
    %196 = vector.multi_reduction <maximumf>, %195, %cst_76 [1] : vector<8x8x4xf32> to vector<8x4xf32>
    %197 = vector.shape_cast %196 : vector<8x4xf32> to vector<8x1x4xf32>
    %198 = vector.broadcast %197 : vector<8x1x4xf32> to vector<8x8x4xf32>
    %199 = arith.cmpf oeq, %195, %198 : vector<8x8x4xf32>
    %c8_i32_77 = arith.constant 8 : i32
    %200 = vector.broadcast %c8_i32_77 : i32 to vector<8x8x4xi32>
    %201 = arith.select %199, %5, %200 : vector<8x8x4xi1>, vector<8x8x4xi32>
    %cst_78 = arith.constant dense<2147483647> : vector<8x4xi32>
    %202 = vector.multi_reduction <minsi>, %201, %cst_78 [1] : vector<8x8x4xi32> to vector<8x4xi32>
    %203 = arith.index_cast %c3_i32 : i32 to index
    %c0_79 = arith.constant 0 : index
    %c0_80 = arith.constant 0 : index
    %204 = vector.load %arg14[%203, %c0_79, %c0_80] : memref<8x8x4xi32, #tpu.memory_space<vmem>>, vector<1x8x4xi32>
    %205 = vector.shape_cast %204 : vector<1x8x4xi32> to vector<8x4xi32>
    %206 = vector.shape_cast %202 : vector<8x4xi32> to vector<1x8x4xi32>
    tpu.vector_store %arg14[%203, %c0_79, %c0_80], %206 {strides = array<i32>} : memref<8x8x4xi32, #tpu.memory_space<vmem>>, vector<1x8x4xi32>,
    %207 = vector.shape_cast %173 : vector<1x4xi1> to vector<1x4xi1>
    %208 = vector.broadcast %207 : vector<1x4xi1> to vector<8x4xi1>
    %209 = arith.select %208, %196, %154 : vector<8x4xi1>, vector<8x4xf32>
    %210 = arith.index_cast %c3_i32 : i32 to index
    %c0_81 = arith.constant 0 : index
    %c0_82 = arith.constant 0 : index
    %211 = vector.load %arg7[%210, %c0_81, %c0_82] : memref<8x1x4xi32, #tpu.memory_space<vmem>>, vector<1x1x4xi32>
    %212 = vector.shape_cast %211 : vector<1x1x4xi32> to vector<1x4xi32>
    %213 = vector.broadcast %212 : vector<1x4xi32> to vector<8x4xi32>
    %214 = arith.cmpi eq, %4, %213 : vector<8x4xi32>
    %cst_83 = arith.constant 0.000000e+00 : f32
    %215 = vector.broadcast %cst_83 : f32 to vector<8x4xf32>
    %216 = arith.select %214, %168, %215 : vector<8x4xi1>, vector<8x4xf32>
    %cst_84 = arith.constant dense<0.000000e+00> : vector<4xf32>
    %217 = vector.multi_reduction <add>, %216, %cst_84 [0] : vector<8x4xf32> to vector<4xf32>
    %218 = vector.shape_cast %217 : vector<4xf32> to vector<1x4xf32>
    %219 = arith.mulf %171, %218 : vector<1x4xf32>
    %220 = arith.addf %165, %219 : vector<1x4xf32>
    %c4_i32 = arith.constant 4 : i32
    %221 = arith.index_cast %c4_i32 : i32 to index
    %c0_85 = arith.constant 0 : index
    %c0_86 = arith.constant 0 : index
    %222 = vector.load %arg13[%221, %c0_85, %c0_86] : memref<8x8x4xf32, #tpu.memory_space<vmem>>, vector<1x8x4xf32>
    %223 = vector.shape_cast %222 : vector<1x8x4xf32> to vector<8x4xf32>
    %224 = arith.index_cast %c4_i32 : i32 to index
    %c0_87 = arith.constant 0 : index
    %c0_88 = arith.constant 0 : index
    %225 = vector.load %arg8[%224, %c0_87, %c0_88] : memref<8x1x4xf32, #tpu.memory_space<vmem>>, vector<1x1x4xf32>
    %226 = vector.shape_cast %225 : vector<1x1x4xf32> to vector<1x4xf32>
    %cst_89 = arith.constant 5.000000e-01 : f32
    %227 = vector.broadcast %cst_89 : f32 to vector<1x4xf32>
    %228 = arith.cmpf ogt, %226, %227 : vector<1x4xf32>
    %229 = vector.shape_cast %223 : vector<8x4xf32> to vector<8x1x4xf32>
    %230 = vector.shape_cast %0 : vector<8x8xf32> to vector<8x8x1xf32>
    %231 = vector.broadcast %229 : vector<8x1x4xf32> to vector<8x8x4xf32>
    %232 = vector.broadcast %230 : vector<8x8x1xf32> to vector<8x8x4xf32>
    %233 = arith.addf %231, %232 : vector<8x8x4xf32>
    %234 = vector.shape_cast %192 : vector<8x4xf32> to vector<1x8x4xf32>
    %235 = vector.broadcast %234 : vector<1x8x4xf32> to vector<8x8x4xf32>
    %236 = arith.addf %233, %235 : vector<8x8x4xf32>
    %cst_90 = arith.constant dense<0xFF800000> : vector<8x4xf32>
    %237 = vector.multi_reduction <maximumf>, %236, %cst_90 [1] : vector<8x8x4xf32> to vector<8x4xf32>
    %238 = vector.shape_cast %237 : vector<8x4xf32> to vector<8x1x4xf32>
    %239 = vector.broadcast %238 : vector<8x1x4xf32> to vector<8x8x4xf32>
    %240 = arith.subf %236, %239 : vector<8x8x4xf32>
    %241 = math.exp %240 : vector<8x8x4xf32>
    %cst_91 = arith.constant dense<0.000000e+00> : vector<8x4xf32>
    %242 = vector.multi_reduction <add>, %241, %cst_91 [1] : vector<8x8x4xf32> to vector<8x4xf32>
    %243 = math.log %242 : vector<8x4xf32>
    %244 = arith.addf %237, %243 : vector<8x4xf32>
    %245 = vector.shape_cast %228 : vector<1x4xi1> to vector<1x4xi1>
    %246 = vector.broadcast %245 : vector<1x4xi1> to vector<8x4xi1>
    %247 = arith.select %246, %244, %192 : vector<8x4xi1>, vector<8x4xf32>
    %248 = vector.shape_cast %209 : vector<8x4xf32> to vector<1x8x4xf32>
    %249 = vector.broadcast %248 : vector<1x8x4xf32> to vector<8x8x4xf32>
    %250 = arith.addf %233, %249 : vector<8x8x4xf32>
    %cst_92 = arith.constant dense<0xFF800000> : vector<8x4xf32>
    %251 = vector.multi_reduction <maximumf>, %250, %cst_92 [1] : vector<8x8x4xf32> to vector<8x4xf32>
    %252 = vector.shape_cast %251 : vector<8x4xf32> to vector<8x1x4xf32>
    %253 = vector.broadcast %252 : vector<8x1x4xf32> to vector<8x8x4xf32>
    %254 = arith.cmpf oeq, %250, %253 : vector<8x8x4xf32>
    %c8_i32_93 = arith.constant 8 : i32
    %255 = vector.broadcast %c8_i32_93 : i32 to vector<8x8x4xi32>
    %256 = arith.select %254, %5, %255 : vector<8x8x4xi1>, vector<8x8x4xi32>
    %cst_94 = arith.constant dense<2147483647> : vector<8x4xi32>
    %257 = vector.multi_reduction <minsi>, %256, %cst_94 [1] : vector<8x8x4xi32> to vector<8x4xi32>
    %258 = arith.index_cast %c4_i32 : i32 to index
    %c0_95 = arith.constant 0 : index
    %c0_96 = arith.constant 0 : index
    %259 = vector.load %arg14[%258, %c0_95, %c0_96] : memref<8x8x4xi32, #tpu.memory_space<vmem>>, vector<1x8x4xi32>
    %260 = vector.shape_cast %259 : vector<1x8x4xi32> to vector<8x4xi32>
    %261 = vector.shape_cast %257 : vector<8x4xi32> to vector<1x8x4xi32>
    tpu.vector_store %arg14[%258, %c0_95, %c0_96], %261 {strides = array<i32>} : memref<8x8x4xi32, #tpu.memory_space<vmem>>, vector<1x8x4xi32>,
    %262 = vector.shape_cast %228 : vector<1x4xi1> to vector<1x4xi1>
    %263 = vector.broadcast %262 : vector<1x4xi1> to vector<8x4xi1>
    %264 = arith.select %263, %251, %209 : vector<8x4xi1>, vector<8x4xf32>
    %265 = arith.index_cast %c4_i32 : i32 to index
    %c0_97 = arith.constant 0 : index
    %c0_98 = arith.constant 0 : index
    %266 = vector.load %arg7[%265, %c0_97, %c0_98] : memref<8x1x4xi32, #tpu.memory_space<vmem>>, vector<1x1x4xi32>
    %267 = vector.shape_cast %266 : vector<1x1x4xi32> to vector<1x4xi32>
    %268 = vector.broadcast %267 : vector<1x4xi32> to vector<8x4xi32>
    %269 = arith.cmpi eq, %4, %268 : vector<8x4xi32>
    %cst_99 = arith.constant 0.000000e+00 : f32
    %270 = vector.broadcast %cst_99 : f32 to vector<8x4xf32>
    %271 = arith.select %269, %223, %270 : vector<8x4xi1>, vector<8x4xf32>
    %cst_100 = arith.constant dense<0.000000e+00> : vector<4xf32>
    %272 = vector.multi_reduction <add>, %271, %cst_100 [0] : vector<8x4xf32> to vector<4xf32>
    %273 = vector.shape_cast %272 : vector<4xf32> to vector<1x4xf32>
    %274 = arith.mulf %226, %273 : vector<1x4xf32>
    %275 = arith.addf %220, %274 : vector<1x4xf32>
    %c5_i32 = arith.constant 5 : i32
    %276 = arith.index_cast %c5_i32 : i32 to index
    %c0_101 = arith.constant 0 : index
    %c0_102 = arith.constant 0 : index
    %277 = vector.load %arg13[%276, %c0_101, %c0_102] : memref<8x8x4xf32, #tpu.memory_space<vmem>>, vector<1x8x4xf32>
    %278 = vector.shape_cast %277 : vector<1x8x4xf32> to vector<8x4xf32>
    %279 = arith.index_cast %c5_i32 : i32 to index
    %c0_103 = arith.constant 0 : index
    %c0_104 = arith.constant 0 : index
    %280 = vector.load %arg8[%279, %c0_103, %c0_104] : memref<8x1x4xf32, #tpu.memory_space<vmem>>, vector<1x1x4xf32>
    %281 = vector.shape_cast %280 : vector<1x1x4xf32> to vector<1x4xf32>
    %cst_105 = arith.constant 5.000000e-01 : f32
    %282 = vector.broadcast %cst_105 : f32 to vector<1x4xf32>
    %283 = arith.cmpf ogt, %281, %282 : vector<1x4xf32>
    %284 = vector.shape_cast %278 : vector<8x4xf32> to vector<8x1x4xf32>
    %285 = vector.shape_cast %0 : vector<8x8xf32> to vector<8x8x1xf32>
    %286 = vector.broadcast %284 : vector<8x1x4xf32> to vector<8x8x4xf32>
    %287 = vector.broadcast %285 : vector<8x8x1xf32> to vector<8x8x4xf32>
    %288 = arith.addf %286, %287 : vector<8x8x4xf32>
    %289 = vector.shape_cast %247 : vector<8x4xf32> to vector<1x8x4xf32>
    %290 = vector.broadcast %289 : vector<1x8x4xf32> to vector<8x8x4xf32>
    %291 = arith.addf %288, %290 : vector<8x8x4xf32>
    %cst_106 = arith.constant dense<0xFF800000> : vector<8x4xf32>
    %292 = vector.multi_reduction <maximumf>, %291, %cst_106 [1] : vector<8x8x4xf32> to vector<8x4xf32>
    %293 = vector.shape_cast %292 : vector<8x4xf32> to vector<8x1x4xf32>
    %294 = vector.broadcast %293 : vector<8x1x4xf32> to vector<8x8x4xf32>
    %295 = arith.subf %291, %294 : vector<8x8x4xf32>
    %296 = math.exp %295 : vector<8x8x4xf32>
    %cst_107 = arith.constant dense<0.000000e+00> : vector<8x4xf32>
    %297 = vector.multi_reduction <add>, %296, %cst_107 [1] : vector<8x8x4xf32> to vector<8x4xf32>
    %298 = math.log %297 : vector<8x4xf32>
    %299 = arith.addf %292, %298 : vector<8x4xf32>
    %300 = vector.shape_cast %283 : vector<1x4xi1> to vector<1x4xi1>
    %301 = vector.broadcast %300 : vector<1x4xi1> to vector<8x4xi1>
    %302 = arith.select %301, %299, %247 : vector<8x4xi1>, vector<8x4xf32>
    %303 = vector.shape_cast %264 : vector<8x4xf32> to vector<1x8x4xf32>
    %304 = vector.broadcast %303 : vector<1x8x4xf32> to vector<8x8x4xf32>
    %305 = arith.addf %288, %304 : vector<8x8x4xf32>
    %cst_108 = arith.constant dense<0xFF800000> : vector<8x4xf32>
    %306 = vector.multi_reduction <maximumf>, %305, %cst_108 [1] : vector<8x8x4xf32> to vector<8x4xf32>
    %307 = vector.shape_cast %306 : vector<8x4xf32> to vector<8x1x4xf32>
    %308 = vector.broadcast %307 : vector<8x1x4xf32> to vector<8x8x4xf32>
    %309 = arith.cmpf oeq, %305, %308 : vector<8x8x4xf32>
    %c8_i32_109 = arith.constant 8 : i32
    %310 = vector.broadcast %c8_i32_109 : i32 to vector<8x8x4xi32>
    %311 = arith.select %309, %5, %310 : vector<8x8x4xi1>, vector<8x8x4xi32>
    %cst_110 = arith.constant dense<2147483647> : vector<8x4xi32>
    %312 = vector.multi_reduction <minsi>, %311, %cst_110 [1] : vector<8x8x4xi32> to vector<8x4xi32>
    %313 = arith.index_cast %c5_i32 : i32 to index
    %c0_111 = arith.constant 0 : index
    %c0_112 = arith.constant 0 : index
    %314 = vector.load %arg14[%313, %c0_111, %c0_112] : memref<8x8x4xi32, #tpu.memory_space<vmem>>, vector<1x8x4xi32>
    %315 = vector.shape_cast %314 : vector<1x8x4xi32> to vector<8x4xi32>
    %316 = vector.shape_cast %312 : vector<8x4xi32> to vector<1x8x4xi32>
    tpu.vector_store %arg14[%313, %c0_111, %c0_112], %316 {strides = array<i32>} : memref<8x8x4xi32, #tpu.memory_space<vmem>>, vector<1x8x4xi32>,
    %317 = vector.shape_cast %283 : vector<1x4xi1> to vector<1x4xi1>
    %318 = vector.broadcast %317 : vector<1x4xi1> to vector<8x4xi1>
    %319 = arith.select %318, %306, %264 : vector<8x4xi1>, vector<8x4xf32>
    %320 = arith.index_cast %c5_i32 : i32 to index
    %c0_113 = arith.constant 0 : index
    %c0_114 = arith.constant 0 : index
    %321 = vector.load %arg7[%320, %c0_113, %c0_114] : memref<8x1x4xi32, #tpu.memory_space<vmem>>, vector<1x1x4xi32>
    %322 = vector.shape_cast %321 : vector<1x1x4xi32> to vector<1x4xi32>
    %323 = vector.broadcast %322 : vector<1x4xi32> to vector<8x4xi32>
    %324 = arith.cmpi eq, %4, %323 : vector<8x4xi32>
    %cst_115 = arith.constant 0.000000e+00 : f32
    %325 = vector.broadcast %cst_115 : f32 to vector<8x4xf32>
    %326 = arith.select %324, %278, %325 : vector<8x4xi1>, vector<8x4xf32>
    %cst_116 = arith.constant dense<0.000000e+00> : vector<4xf32>
    %327 = vector.multi_reduction <add>, %326, %cst_116 [0] : vector<8x4xf32> to vector<4xf32>
    %328 = vector.shape_cast %327 : vector<4xf32> to vector<1x4xf32>
    %329 = arith.mulf %281, %328 : vector<1x4xf32>
    %330 = arith.addf %275, %329 : vector<1x4xf32>
    %c6_i32 = arith.constant 6 : i32
    %331 = arith.index_cast %c6_i32 : i32 to index
    %c0_117 = arith.constant 0 : index
    %c0_118 = arith.constant 0 : index
    %332 = vector.load %arg13[%331, %c0_117, %c0_118] : memref<8x8x4xf32, #tpu.memory_space<vmem>>, vector<1x8x4xf32>
    %333 = vector.shape_cast %332 : vector<1x8x4xf32> to vector<8x4xf32>
    %334 = arith.index_cast %c6_i32 : i32 to index
    %c0_119 = arith.constant 0 : index
    %c0_120 = arith.constant 0 : index
    %335 = vector.load %arg8[%334, %c0_119, %c0_120] : memref<8x1x4xf32, #tpu.memory_space<vmem>>, vector<1x1x4xf32>
    %336 = vector.shape_cast %335 : vector<1x1x4xf32> to vector<1x4xf32>
    %cst_121 = arith.constant 5.000000e-01 : f32
    %337 = vector.broadcast %cst_121 : f32 to vector<1x4xf32>
    %338 = arith.cmpf ogt, %336, %337 : vector<1x4xf32>
    %339 = vector.shape_cast %333 : vector<8x4xf32> to vector<8x1x4xf32>
    %340 = vector.shape_cast %0 : vector<8x8xf32> to vector<8x8x1xf32>
    %341 = vector.broadcast %339 : vector<8x1x4xf32> to vector<8x8x4xf32>
    %342 = vector.broadcast %340 : vector<8x8x1xf32> to vector<8x8x4xf32>
    %343 = arith.addf %341, %342 : vector<8x8x4xf32>
    %344 = vector.shape_cast %302 : vector<8x4xf32> to vector<1x8x4xf32>
    %345 = vector.broadcast %344 : vector<1x8x4xf32> to vector<8x8x4xf32>
    %346 = arith.addf %343, %345 : vector<8x8x4xf32>
    %cst_122 = arith.constant dense<0xFF800000> : vector<8x4xf32>
    %347 = vector.multi_reduction <maximumf>, %346, %cst_122 [1] : vector<8x8x4xf32> to vector<8x4xf32>
    %348 = vector.shape_cast %347 : vector<8x4xf32> to vector<8x1x4xf32>
    %349 = vector.broadcast %348 : vector<8x1x4xf32> to vector<8x8x4xf32>
    %350 = arith.subf %346, %349 : vector<8x8x4xf32>
    %351 = math.exp %350 : vector<8x8x4xf32>
    %cst_123 = arith.constant dense<0.000000e+00> : vector<8x4xf32>
    %352 = vector.multi_reduction <add>, %351, %cst_123 [1] : vector<8x8x4xf32> to vector<8x4xf32>
    %353 = math.log %352 : vector<8x4xf32>
    %354 = arith.addf %347, %353 : vector<8x4xf32>
    %355 = vector.shape_cast %338 : vector<1x4xi1> to vector<1x4xi1>
    %356 = vector.broadcast %355 : vector<1x4xi1> to vector<8x4xi1>
    %357 = arith.select %356, %354, %302 : vector<8x4xi1>, vector<8x4xf32>
    %358 = vector.shape_cast %319 : vector<8x4xf32> to vector<1x8x4xf32>
    %359 = vector.broadcast %358 : vector<1x8x4xf32> to vector<8x8x4xf32>
    %360 = arith.addf %343, %359 : vector<8x8x4xf32>
    %cst_124 = arith.constant dense<0xFF800000> : vector<8x4xf32>
    %361 = vector.multi_reduction <maximumf>, %360, %cst_124 [1] : vector<8x8x4xf32> to vector<8x4xf32>
    %362 = vector.shape_cast %361 : vector<8x4xf32> to vector<8x1x4xf32>
    %363 = vector.broadcast %362 : vector<8x1x4xf32> to vector<8x8x4xf32>
    %364 = arith.cmpf oeq, %360, %363 : vector<8x8x4xf32>
    %c8_i32_125 = arith.constant 8 : i32
    %365 = vector.broadcast %c8_i32_125 : i32 to vector<8x8x4xi32>
    %366 = arith.select %364, %5, %365 : vector<8x8x4xi1>, vector<8x8x4xi32>
    %cst_126 = arith.constant dense<2147483647> : vector<8x4xi32>
    %367 = vector.multi_reduction <minsi>, %366, %cst_126 [1] : vector<8x8x4xi32> to vector<8x4xi32>
    %368 = arith.index_cast %c6_i32 : i32 to index
    %c0_127 = arith.constant 0 : index
    %c0_128 = arith.constant 0 : index
    %369 = vector.load %arg14[%368, %c0_127, %c0_128] : memref<8x8x4xi32, #tpu.memory_space<vmem>>, vector<1x8x4xi32>
    %370 = vector.shape_cast %369 : vector<1x8x4xi32> to vector<8x4xi32>
    %371 = vector.shape_cast %367 : vector<8x4xi32> to vector<1x8x4xi32>
    tpu.vector_store %arg14[%368, %c0_127, %c0_128], %371 {strides = array<i32>} : memref<8x8x4xi32, #tpu.memory_space<vmem>>, vector<1x8x4xi32>,
    %372 = vector.shape_cast %338 : vector<1x4xi1> to vector<1x4xi1>
    %373 = vector.broadcast %372 : vector<1x4xi1> to vector<8x4xi1>
    %374 = arith.select %373, %361, %319 : vector<8x4xi1>, vector<8x4xf32>
    %375 = arith.index_cast %c6_i32 : i32 to index
    %c0_129 = arith.constant 0 : index
    %c0_130 = arith.constant 0 : index
    %376 = vector.load %arg7[%375, %c0_129, %c0_130] : memref<8x1x4xi32, #tpu.memory_space<vmem>>, vector<1x1x4xi32>
    %377 = vector.shape_cast %376 : vector<1x1x4xi32> to vector<1x4xi32>
    %378 = vector.broadcast %377 : vector<1x4xi32> to vector<8x4xi32>
    %379 = arith.cmpi eq, %4, %378 : vector<8x4xi32>
    %cst_131 = arith.constant 0.000000e+00 : f32
    %380 = vector.broadcast %cst_131 : f32 to vector<8x4xf32>
    %381 = arith.select %379, %333, %380 : vector<8x4xi1>, vector<8x4xf32>
    %cst_132 = arith.constant dense<0.000000e+00> : vector<4xf32>
    %382 = vector.multi_reduction <add>, %381, %cst_132 [0] : vector<8x4xf32> to vector<4xf32>
    %383 = vector.shape_cast %382 : vector<4xf32> to vector<1x4xf32>
    %384 = arith.mulf %336, %383 : vector<1x4xf32>
    %385 = arith.addf %330, %384 : vector<1x4xf32>
    %c7_i32 = arith.constant 7 : i32
    %386 = arith.index_cast %c7_i32 : i32 to index
    %c0_133 = arith.constant 0 : index
    %c0_134 = arith.constant 0 : index
    %387 = vector.load %arg13[%386, %c0_133, %c0_134] : memref<8x8x4xf32, #tpu.memory_space<vmem>>, vector<1x8x4xf32>
    %388 = vector.shape_cast %387 : vector<1x8x4xf32> to vector<8x4xf32>
    %389 = arith.index_cast %c7_i32 : i32 to index
    %c0_135 = arith.constant 0 : index
    %c0_136 = arith.constant 0 : index
    %390 = vector.load %arg8[%389, %c0_135, %c0_136] : memref<8x1x4xf32, #tpu.memory_space<vmem>>, vector<1x1x4xf32>
    %391 = vector.shape_cast %390 : vector<1x1x4xf32> to vector<1x4xf32>
    %cst_137 = arith.constant 5.000000e-01 : f32
    %392 = vector.broadcast %cst_137 : f32 to vector<1x4xf32>
    %393 = arith.cmpf ogt, %391, %392 : vector<1x4xf32>
    %394 = vector.shape_cast %388 : vector<8x4xf32> to vector<8x1x4xf32>
    %395 = vector.shape_cast %0 : vector<8x8xf32> to vector<8x8x1xf32>
    %396 = vector.broadcast %394 : vector<8x1x4xf32> to vector<8x8x4xf32>
    %397 = vector.broadcast %395 : vector<8x8x1xf32> to vector<8x8x4xf32>
    %398 = arith.addf %396, %397 : vector<8x8x4xf32>
    %399 = vector.shape_cast %357 : vector<8x4xf32> to vector<1x8x4xf32>
    %400 = vector.broadcast %399 : vector<1x8x4xf32> to vector<8x8x4xf32>
    %401 = arith.addf %398, %400 : vector<8x8x4xf32>
    %cst_138 = arith.constant dense<0xFF800000> : vector<8x4xf32>
    %402 = vector.multi_reduction <maximumf>, %401, %cst_138 [1] : vector<8x8x4xf32> to vector<8x4xf32>
    %403 = vector.shape_cast %402 : vector<8x4xf32> to vector<8x1x4xf32>
    %404 = vector.broadcast %403 : vector<8x1x4xf32> to vector<8x8x4xf32>
    %405 = arith.subf %401, %404 : vector<8x8x4xf32>
    %406 = math.exp %405 : vector<8x8x4xf32>
    %cst_139 = arith.constant dense<0.000000e+00> : vector<8x4xf32>
    %407 = vector.multi_reduction <add>, %406, %cst_139 [1] : vector<8x8x4xf32> to vector<8x4xf32>
    %408 = math.log %407 : vector<8x4xf32>
    %409 = arith.addf %402, %408 : vector<8x4xf32>
    %410 = vector.shape_cast %393 : vector<1x4xi1> to vector<1x4xi1>
    %411 = vector.broadcast %410 : vector<1x4xi1> to vector<8x4xi1>
    %412 = arith.select %411, %409, %357 : vector<8x4xi1>, vector<8x4xf32>
    %413 = vector.shape_cast %374 : vector<8x4xf32> to vector<1x8x4xf32>
    %414 = vector.broadcast %413 : vector<1x8x4xf32> to vector<8x8x4xf32>
    %415 = arith.addf %398, %414 : vector<8x8x4xf32>
    %cst_140 = arith.constant dense<0xFF800000> : vector<8x4xf32>
    %416 = vector.multi_reduction <maximumf>, %415, %cst_140 [1] : vector<8x8x4xf32> to vector<8x4xf32>
    %417 = vector.shape_cast %416 : vector<8x4xf32> to vector<8x1x4xf32>
    %418 = vector.broadcast %417 : vector<8x1x4xf32> to vector<8x8x4xf32>
    %419 = arith.cmpf oeq, %415, %418 : vector<8x8x4xf32>
    %c8_i32_141 = arith.constant 8 : i32
    %420 = vector.broadcast %c8_i32_141 : i32 to vector<8x8x4xi32>
    %421 = arith.select %419, %5, %420 : vector<8x8x4xi1>, vector<8x8x4xi32>
    %cst_142 = arith.constant dense<2147483647> : vector<8x4xi32>
    %422 = vector.multi_reduction <minsi>, %421, %cst_142 [1] : vector<8x8x4xi32> to vector<8x4xi32>
    %423 = arith.index_cast %c7_i32 : i32 to index
    %c0_143 = arith.constant 0 : index
    %c0_144 = arith.constant 0 : index
    %424 = vector.load %arg14[%423, %c0_143, %c0_144] : memref<8x8x4xi32, #tpu.memory_space<vmem>>, vector<1x8x4xi32>
    %425 = vector.shape_cast %424 : vector<1x8x4xi32> to vector<8x4xi32>
    %426 = vector.shape_cast %422 : vector<8x4xi32> to vector<1x8x4xi32>
    tpu.vector_store %arg14[%423, %c0_143, %c0_144], %426 {strides = array<i32>} : memref<8x8x4xi32, #tpu.memory_space<vmem>>, vector<1x8x4xi32>,
    %427 = vector.shape_cast %393 : vector<1x4xi1> to vector<1x4xi1>
    %428 = vector.broadcast %427 : vector<1x4xi1> to vector<8x4xi1>
    %429 = arith.select %428, %416, %374 : vector<8x4xi1>, vector<8x4xf32>
    %430 = arith.index_cast %c7_i32 : i32 to index
    %c0_145 = arith.constant 0 : index
    %c0_146 = arith.constant 0 : index
    %431 = vector.load %arg7[%430, %c0_145, %c0_146] : memref<8x1x4xi32, #tpu.memory_space<vmem>>, vector<1x1x4xi32>
    %432 = vector.shape_cast %431 : vector<1x1x4xi32> to vector<1x4xi32>
    %433 = vector.broadcast %432 : vector<1x4xi32> to vector<8x4xi32>
    %434 = arith.cmpi eq, %4, %433 : vector<8x4xi32>
    %cst_147 = arith.constant 0.000000e+00 : f32
    %435 = vector.broadcast %cst_147 : f32 to vector<8x4xf32>
    %436 = arith.select %434, %388, %435 : vector<8x4xi1>, vector<8x4xf32>
    %cst_148 = arith.constant dense<0.000000e+00> : vector<4xf32>
    %437 = vector.multi_reduction <add>, %436, %cst_148 [0] : vector<8x4xf32> to vector<4xf32>
    %438 = vector.shape_cast %437 : vector<4xf32> to vector<1x4xf32>
    %439 = arith.mulf %391, %438 : vector<1x4xf32>
    %440 = arith.addf %385, %439 : vector<1x4xf32>
    %c7_i32_149 = arith.constant 7 : i32
    %441 = vector.broadcast %2 : vector<8x1xf32> to vector<8x4xf32>
    %442 = arith.addf %412, %441 : vector<8x4xf32>
    %cst_150 = arith.constant dense<0xFF800000> : vector<4xf32>
    %443 = vector.multi_reduction <maximumf>, %442, %cst_150 [0] : vector<8x4xf32> to vector<4xf32>
    %444 = vector.shape_cast %443 : vector<4xf32> to vector<1x4xf32>
    %445 = vector.broadcast %444 : vector<1x4xf32> to vector<8x4xf32>
    %446 = arith.subf %442, %445 : vector<8x4xf32>
    %447 = math.exp %446 : vector<8x4xf32>
    %cst_151 = arith.constant dense<0.000000e+00> : vector<4xf32>
    %448 = vector.multi_reduction <add>, %447, %cst_151 [0] : vector<8x4xf32> to vector<4xf32>
    %449 = vector.shape_cast %448 : vector<4xf32> to vector<1x4xf32>
    %450 = math.log %449 : vector<1x4xf32>
    %451 = arith.addf %444, %450 : vector<1x4xf32>
    %c0_152 = arith.constant 0 : index
    %c0_153 = arith.constant 0 : index
    %452 = vector.load %arg10[%c0_152, %c0_153] : memref<1x4xf32, #tpu.memory_space<vmem>>, vector<1x4xf32>
    %453 = arith.addf %452, %440 : vector<1x4xf32>
    %454 = arith.subf %453, %451 : vector<1x4xf32>
    %c0_154 = arith.constant 0 : index
    %c0_155 = arith.constant 0 : index
    %455 = vector.load %arg11[%c0_154, %c0_155] : memref<1x4xf32, #tpu.memory_space<vmem>>, vector<1x4xf32>
    tpu.vector_store %arg11[%c0_154, %c0_155], %454 {strides = array<i32>} : memref<1x4xf32, #tpu.memory_space<vmem>>, vector<1x4xf32>,
    %456 = vector.broadcast %2 : vector<8x1xf32> to vector<8x4xf32>
    %457 = arith.addf %429, %456 : vector<8x4xf32>
    %cst_156 = arith.constant dense<0xFF800000> : vector<4xf32>
    %458 = vector.multi_reduction <maximumf>, %457, %cst_156 [0] : vector<8x4xf32> to vector<4xf32>
    %459 = vector.shape_cast %458 : vector<4xf32> to vector<1x4xf32>
    %460 = vector.broadcast %459 : vector<1x4xf32> to vector<8x4xf32>
    %461 = arith.cmpf oeq, %457, %460 : vector<8x4xf32>
    %c8_i32_157 = arith.constant 8 : i32
    %462 = vector.broadcast %c8_i32_157 : i32 to vector<8x4xi32>
    %463 = arith.select %461, %4, %462 : vector<8x4xi1>, vector<8x4xi32>
    %cst_158 = arith.constant dense<2147483647> : vector<4xi32>
    %464 = vector.multi_reduction <minsi>, %463, %cst_158 [0] : vector<8x4xi32> to vector<4xi32>
    %465 = vector.shape_cast %464 : vector<4xi32> to vector<1x4xi32>
    %c0_i32 = arith.constant 0 : i32
    %466 = vector.broadcast %c0_i32 : i32 to vector<1x4xi32>
    %c8_i32_159 = arith.constant 8 : i32
    %467 = vector.broadcast %c8_i32_159 : i32 to vector<1x4xi32>
    %468 = arith.cmpi sge, %3, %467 : vector<1x4xi32>
    %469 = arith.select %468, %465, %466 : vector<1x4xi1>, vector<1x4xi32>
    %c7_160 = arith.constant 7 : index
    %c0_161 = arith.constant 0 : index
    %c0_162 = arith.constant 0 : index
    %470 = vector.load %arg15[%c7_160, %c0_161, %c0_162] : memref<8x1x4xi32, #tpu.memory_space<vmem>>, vector<1x1x4xi32>
    %471 = vector.shape_cast %470 : vector<1x1x4xi32> to vector<1x4xi32>
    %472 = vector.shape_cast %469 : vector<1x4xi32> to vector<1x1x4xi32>
    tpu.vector_store %arg15[%c7_160, %c0_161, %c0_162], %472 {strides = array<i32>} : memref<8x1x4xi32, #tpu.memory_space<vmem>>, vector<1x1x4xi32>,
    %c1_i32_163 = arith.constant 1 : i32
    %c7_i32_164 = arith.constant 7 : i32
    %473 = arith.subi %c7_i32_164, %c1_i32_163 : i32
    %c1_i32_165 = arith.constant 1 : i32
    %474 = arith.addi %473, %c1_i32_165 : i32
    %475 = arith.index_cast %474 : i32 to index
    %c0_166 = arith.constant 0 : index
    %c0_167 = arith.constant 0 : index
    %476 = vector.load %arg14[%475, %c0_166, %c0_167] : memref<8x8x4xi32, #tpu.memory_space<vmem>>, vector<1x8x4xi32>
    %477 = vector.shape_cast %476 : vector<1x8x4xi32> to vector<8x4xi32>
    %478 = vector.broadcast %465 : vector<1x4xi32> to vector<8x4xi32>
    %479 = arith.cmpi eq, %4, %478 : vector<8x4xi32>
    %c0_i32_168 = arith.constant 0 : i32
    %480 = vector.broadcast %c0_i32_168 : i32 to vector<8x4xi32>
    %481 = arith.select %479, %477, %480 : vector<8x4xi1>, vector<8x4xi32>
    %cst_169 = arith.constant dense<0> : vector<4xi32>
    %482 = vector.multi_reduction <add>, %481, %cst_169 [0] : vector<8x4xi32> to vector<4xi32>
    %483 = vector.shape_cast %482 : vector<4xi32> to vector<1x4xi32>
    %c2_i32_170 = arith.constant 2 : i32
    %484 = arith.addi %473, %c2_i32_170 : i32
    %485 = vector.broadcast %484 : i32 to vector<1x4xi32>
    %486 = arith.cmpi sge, %3, %485 : vector<1x4xi32>
    %487 = arith.select %486, %483, %465 : vector<1x4xi1>, vector<1x4xi32>
    %c1_i32_171 = arith.constant 1 : i32
    %488 = arith.addi %473, %c1_i32_171 : i32
    %489 = vector.broadcast %488 : i32 to vector<1x4xi32>
    %490 = arith.cmpi sge, %3, %489 : vector<1x4xi32>
    %491 = arith.select %490, %487, %466 : vector<1x4xi1>, vector<1x4xi32>
    %492 = arith.index_cast %473 : i32 to index
    %c0_172 = arith.constant 0 : index
    %c0_173 = arith.constant 0 : index
    %493 = vector.load %arg15[%492, %c0_172, %c0_173] : memref<8x1x4xi32, #tpu.memory_space<vmem>>, vector<1x1x4xi32>
    %494 = vector.shape_cast %493 : vector<1x1x4xi32> to vector<1x4xi32>
    %495 = vector.shape_cast %491 : vector<1x4xi32> to vector<1x1x4xi32>
    tpu.vector_store %arg15[%492, %c0_172, %c0_173], %495 {strides = array<i32>} : memref<8x1x4xi32, #tpu.memory_space<vmem>>, vector<1x1x4xi32>,
    %c2_i32_174 = arith.constant 2 : i32
    %c7_i32_175 = arith.constant 7 : i32
    %496 = arith.subi %c7_i32_175, %c2_i32_174 : i32
    %c1_i32_176 = arith.constant 1 : i32
    %497 = arith.addi %496, %c1_i32_176 : i32
    %498 = arith.index_cast %497 : i32 to index
    %c0_177 = arith.constant 0 : index
    %c0_178 = arith.constant 0 : index
    %499 = vector.load %arg14[%498, %c0_177, %c0_178] : memref<8x8x4xi32, #tpu.memory_space<vmem>>, vector<1x8x4xi32>
    %500 = vector.shape_cast %499 : vector<1x8x4xi32> to vector<8x4xi32>
    %501 = vector.broadcast %487 : vector<1x4xi32> to vector<8x4xi32>
    %502 = arith.cmpi eq, %4, %501 : vector<8x4xi32>
    %c0_i32_179 = arith.constant 0 : i32
    %503 = vector.broadcast %c0_i32_179 : i32 to vector<8x4xi32>
    %504 = arith.select %502, %500, %503 : vector<8x4xi1>, vector<8x4xi32>
    %cst_180 = arith.constant dense<0> : vector<4xi32>
    %505 = vector.multi_reduction <add>, %504, %cst_180 [0] : vector<8x4xi32> to vector<4xi32>
    %506 = vector.shape_cast %505 : vector<4xi32> to vector<1x4xi32>
    %c2_i32_181 = arith.constant 2 : i32
    %507 = arith.addi %496, %c2_i32_181 : i32
    %508 = vector.broadcast %507 : i32 to vector<1x4xi32>
    %509 = arith.cmpi sge, %3, %508 : vector<1x4xi32>
    %510 = arith.select %509, %506, %487 : vector<1x4xi1>, vector<1x4xi32>
    %c1_i32_182 = arith.constant 1 : i32
    %511 = arith.addi %496, %c1_i32_182 : i32
    %512 = vector.broadcast %511 : i32 to vector<1x4xi32>
    %513 = arith.cmpi sge, %3, %512 : vector<1x4xi32>
    %514 = arith.select %513, %510, %466 : vector<1x4xi1>, vector<1x4xi32>
    %515 = arith.index_cast %496 : i32 to index
    %c0_183 = arith.constant 0 : index
    %c0_184 = arith.constant 0 : index
    %516 = vector.load %arg15[%515, %c0_183, %c0_184] : memref<8x1x4xi32, #tpu.memory_space<vmem>>, vector<1x1x4xi32>
    %517 = vector.shape_cast %516 : vector<1x1x4xi32> to vector<1x4xi32>
    %518 = vector.shape_cast %514 : vector<1x4xi32> to vector<1x1x4xi32>
    tpu.vector_store %arg15[%515, %c0_183, %c0_184], %518 {strides = array<i32>} : memref<8x1x4xi32, #tpu.memory_space<vmem>>, vector<1x1x4xi32>,
    %c3_i32_185 = arith.constant 3 : i32
    %c7_i32_186 = arith.constant 7 : i32
    %519 = arith.subi %c7_i32_186, %c3_i32_185 : i32
    %c1_i32_187 = arith.constant 1 : i32
    %520 = arith.addi %519, %c1_i32_187 : i32
    %521 = arith.index_cast %520 : i32 to index
    %c0_188 = arith.constant 0 : index
    %c0_189 = arith.constant 0 : index
    %522 = vector.load %arg14[%521, %c0_188, %c0_189] : memref<8x8x4xi32, #tpu.memory_space<vmem>>, vector<1x8x4xi32>
    %523 = vector.shape_cast %522 : vector<1x8x4xi32> to vector<8x4xi32>
    %524 = vector.broadcast %510 : vector<1x4xi32> to vector<8x4xi32>
    %525 = arith.cmpi eq, %4, %524 : vector<8x4xi32>
    %c0_i32_190 = arith.constant 0 : i32
    %526 = vector.broadcast %c0_i32_190 : i32 to vector<8x4xi32>
    %527 = arith.select %525, %523, %526 : vector<8x4xi1>, vector<8x4xi32>
    %cst_191 = arith.constant dense<0> : vector<4xi32>
    %528 = vector.multi_reduction <add>, %527, %cst_191 [0] : vector<8x4xi32> to vector<4xi32>
    %529 = vector.shape_cast %528 : vector<4xi32> to vector<1x4xi32>
    %c2_i32_192 = arith.constant 2 : i32
    %530 = arith.addi %519, %c2_i32_192 : i32
    %531 = vector.broadcast %530 : i32 to vector<1x4xi32>
    %532 = arith.cmpi sge, %3, %531 : vector<1x4xi32>
    %533 = arith.select %532, %529, %510 : vector<1x4xi1>, vector<1x4xi32>
    %c1_i32_193 = arith.constant 1 : i32
    %534 = arith.addi %519, %c1_i32_193 : i32
    %535 = vector.broadcast %534 : i32 to vector<1x4xi32>
    %536 = arith.cmpi sge, %3, %535 : vector<1x4xi32>
    %537 = arith.select %536, %533, %466 : vector<1x4xi1>, vector<1x4xi32>
    %538 = arith.index_cast %519 : i32 to index
    %c0_194 = arith.constant 0 : index
    %c0_195 = arith.constant 0 : index
    %539 = vector.load %arg15[%538, %c0_194, %c0_195] : memref<8x1x4xi32, #tpu.memory_space<vmem>>, vector<1x1x4xi32>
    %540 = vector.shape_cast %539 : vector<1x1x4xi32> to vector<1x4xi32>
    %541 = vector.shape_cast %537 : vector<1x4xi32> to vector<1x1x4xi32>
    tpu.vector_store %arg15[%538, %c0_194, %c0_195], %541 {strides = array<i32>} : memref<8x1x4xi32, #tpu.memory_space<vmem>>, vector<1x1x4xi32>,
    %c4_i32_196 = arith.constant 4 : i32
    %c7_i32_197 = arith.constant 7 : i32
    %542 = arith.subi %c7_i32_197, %c4_i32_196 : i32
    %c1_i32_198 = arith.constant 1 : i32
    %543 = arith.addi %542, %c1_i32_198 : i32
    %544 = arith.index_cast %543 : i32 to index
    %c0_199 = arith.constant 0 : index
    %c0_200 = arith.constant 0 : index
    %545 = vector.load %arg14[%544, %c0_199, %c0_200] : memref<8x8x4xi32, #tpu.memory_space<vmem>>, vector<1x8x4xi32>
    %546 = vector.shape_cast %545 : vector<1x8x4xi32> to vector<8x4xi32>
    %547 = vector.broadcast %533 : vector<1x4xi32> to vector<8x4xi32>
    %548 = arith.cmpi eq, %4, %547 : vector<8x4xi32>
    %c0_i32_201 = arith.constant 0 : i32
    %549 = vector.broadcast %c0_i32_201 : i32 to vector<8x4xi32>
    %550 = arith.select %548, %546, %549 : vector<8x4xi1>, vector<8x4xi32>
    %cst_202 = arith.constant dense<0> : vector<4xi32>
    %551 = vector.multi_reduction <add>, %550, %cst_202 [0] : vector<8x4xi32> to vector<4xi32>
    %552 = vector.shape_cast %551 : vector<4xi32> to vector<1x4xi32>
    %c2_i32_203 = arith.constant 2 : i32
    %553 = arith.addi %542, %c2_i32_203 : i32
    %554 = vector.broadcast %553 : i32 to vector<1x4xi32>
    %555 = arith.cmpi sge, %3, %554 : vector<1x4xi32>
    %556 = arith.select %555, %552, %533 : vector<1x4xi1>, vector<1x4xi32>
    %c1_i32_204 = arith.constant 1 : i32
    %557 = arith.addi %542, %c1_i32_204 : i32
    %558 = vector.broadcast %557 : i32 to vector<1x4xi32>
    %559 = arith.cmpi sge, %3, %558 : vector<1x4xi32>
    %560 = arith.select %559, %556, %466 : vector<1x4xi1>, vector<1x4xi32>
    %561 = arith.index_cast %542 : i32 to index
    %c0_205 = arith.constant 0 : index
    %c0_206 = arith.constant 0 : index
    %562 = vector.load %arg15[%561, %c0_205, %c0_206] : memref<8x1x4xi32, #tpu.memory_space<vmem>>, vector<1x1x4xi32>
    %563 = vector.shape_cast %562 : vector<1x1x4xi32> to vector<1x4xi32>
    %564 = vector.shape_cast %560 : vector<1x4xi32> to vector<1x1x4xi32>
    tpu.vector_store %arg15[%561, %c0_205, %c0_206], %564 {strides = array<i32>} : memref<8x1x4xi32, #tpu.memory_space<vmem>>, vector<1x1x4xi32>,
    %c5_i32_207 = arith.constant 5 : i32
    %c7_i32_208 = arith.constant 7 : i32
    %565 = arith.subi %c7_i32_208, %c5_i32_207 : i32
    %c1_i32_209 = arith.constant 1 : i32
    %566 = arith.addi %565, %c1_i32_209 : i32
    %567 = arith.index_cast %566 : i32 to index
    %c0_210 = arith.constant 0 : index
    %c0_211 = arith.constant 0 : index
    %568 = vector.load %arg14[%567, %c0_210, %c0_211] : memref<8x8x4xi32, #tpu.memory_space<vmem>>, vector<1x8x4xi32>
    %569 = vector.shape_cast %568 : vector<1x8x4xi32> to vector<8x4xi32>
    %570 = vector.broadcast %556 : vector<1x4xi32> to vector<8x4xi32>
    %571 = arith.cmpi eq, %4, %570 : vector<8x4xi32>
    %c0_i32_212 = arith.constant 0 : i32
    %572 = vector.broadcast %c0_i32_212 : i32 to vector<8x4xi32>
    %573 = arith.select %571, %569, %572 : vector<8x4xi1>, vector<8x4xi32>
    %cst_213 = arith.constant dense<0> : vector<4xi32>
    %574 = vector.multi_reduction <add>, %573, %cst_213 [0] : vector<8x4xi32> to vector<4xi32>
    %575 = vector.shape_cast %574 : vector<4xi32> to vector<1x4xi32>
    %c2_i32_214 = arith.constant 2 : i32
    %576 = arith.addi %565, %c2_i32_214 : i32
    %577 = vector.broadcast %576 : i32 to vector<1x4xi32>
    %578 = arith.cmpi sge, %3, %577 : vector<1x4xi32>
    %579 = arith.select %578, %575, %556 : vector<1x4xi1>, vector<1x4xi32>
    %c1_i32_215 = arith.constant 1 : i32
    %580 = arith.addi %565, %c1_i32_215 : i32
    %581 = vector.broadcast %580 : i32 to vector<1x4xi32>
    %582 = arith.cmpi sge, %3, %581 : vector<1x4xi32>
    %583 = arith.select %582, %579, %466 : vector<1x4xi1>, vector<1x4xi32>
    %584 = arith.index_cast %565 : i32 to index
    %c0_216 = arith.constant 0 : index
    %c0_217 = arith.constant 0 : index
    %585 = vector.load %arg15[%584, %c0_216, %c0_217] : memref<8x1x4xi32, #tpu.memory_space<vmem>>, vector<1x1x4xi32>
    %586 = vector.shape_cast %585 : vector<1x1x4xi32> to vector<1x4xi32>
    %587 = vector.shape_cast %583 : vector<1x4xi32> to vector<1x1x4xi32>
    tpu.vector_store %arg15[%584, %c0_216, %c0_217], %587 {strides = array<i32>} : memref<8x1x4xi32, #tpu.memory_space<vmem>>, vector<1x1x4xi32>,
    %c6_i32_218 = arith.constant 6 : i32
    %c7_i32_219 = arith.constant 7 : i32
    %588 = arith.subi %c7_i32_219, %c6_i32_218 : i32
    %c1_i32_220 = arith.constant 1 : i32
    %589 = arith.addi %588, %c1_i32_220 : i32
    %590 = arith.index_cast %589 : i32 to index
    %c0_221 = arith.constant 0 : index
    %c0_222 = arith.constant 0 : index
    %591 = vector.load %arg14[%590, %c0_221, %c0_222] : memref<8x8x4xi32, #tpu.memory_space<vmem>>, vector<1x8x4xi32>
    %592 = vector.shape_cast %591 : vector<1x8x4xi32> to vector<8x4xi32>
    %593 = vector.broadcast %579 : vector<1x4xi32> to vector<8x4xi32>
    %594 = arith.cmpi eq, %4, %593 : vector<8x4xi32>
    %c0_i32_223 = arith.constant 0 : i32
    %595 = vector.broadcast %c0_i32_223 : i32 to vector<8x4xi32>
    %596 = arith.select %594, %592, %595 : vector<8x4xi1>, vector<8x4xi32>
    %cst_224 = arith.constant dense<0> : vector<4xi32>
    %597 = vector.multi_reduction <add>, %596, %cst_224 [0] : vector<8x4xi32> to vector<4xi32>
    %598 = vector.shape_cast %597 : vector<4xi32> to vector<1x4xi32>
    %c2_i32_225 = arith.constant 2 : i32
    %599 = arith.addi %588, %c2_i32_225 : i32
    %600 = vector.broadcast %599 : i32 to vector<1x4xi32>
    %601 = arith.cmpi sge, %3, %600 : vector<1x4xi32>
    %602 = arith.select %601, %598, %579 : vector<1x4xi1>, vector<1x4xi32>
    %c1_i32_226 = arith.constant 1 : i32
    %603 = arith.addi %588, %c1_i32_226 : i32
    %604 = vector.broadcast %603 : i32 to vector<1x4xi32>
    %605 = arith.cmpi sge, %3, %604 : vector<1x4xi32>
    %606 = arith.select %605, %602, %466 : vector<1x4xi1>, vector<1x4xi32>
    %607 = arith.index_cast %588 : i32 to index
    %c0_227 = arith.constant 0 : index
    %c0_228 = arith.constant 0 : index
    %608 = vector.load %arg15[%607, %c0_227, %c0_228] : memref<8x1x4xi32, #tpu.memory_space<vmem>>, vector<1x1x4xi32>
    %609 = vector.shape_cast %608 : vector<1x1x4xi32> to vector<1x4xi32>
    %610 = vector.shape_cast %606 : vector<1x4xi32> to vector<1x1x4xi32>
    tpu.vector_store %arg15[%607, %c0_227, %c0_228], %610 {strides = array<i32>} : memref<8x1x4xi32, #tpu.memory_space<vmem>>, vector<1x1x4xi32>,
    %c7_i32_229 = arith.constant 7 : i32
    %c7_i32_230 = arith.constant 7 : i32
    %611 = arith.subi %c7_i32_230, %c7_i32_229 : i32
    %c1_i32_231 = arith.constant 1 : i32
    %612 = arith.addi %611, %c1_i32_231 : i32
    %613 = arith.index_cast %612 : i32 to index
    %c0_232 = arith.constant 0 : index
    %c0_233 = arith.constant 0 : index
    %614 = vector.load %arg14[%613, %c0_232, %c0_233] : memref<8x8x4xi32, #tpu.memory_space<vmem>>, vector<1x8x4xi32>
    %615 = vector.shape_cast %614 : vector<1x8x4xi32> to vector<8x4xi32>
    %616 = vector.broadcast %602 : vector<1x4xi32> to vector<8x4xi32>
    %617 = arith.cmpi eq, %4, %616 : vector<8x4xi32>
    %c0_i32_234 = arith.constant 0 : i32
    %618 = vector.broadcast %c0_i32_234 : i32 to vector<8x4xi32>
    %619 = arith.select %617, %615, %618 : vector<8x4xi1>, vector<8x4xi32>
    %cst_235 = arith.constant dense<0> : vector<4xi32>
    %620 = vector.multi_reduction <add>, %619, %cst_235 [0] : vector<8x4xi32> to vector<4xi32>
    %621 = vector.shape_cast %620 : vector<4xi32> to vector<1x4xi32>
    %c2_i32_236 = arith.constant 2 : i32
    %622 = arith.addi %611, %c2_i32_236 : i32
    %623 = vector.broadcast %622 : i32 to vector<1x4xi32>
    %624 = arith.cmpi sge, %3, %623 : vector<1x4xi32>
    %625 = arith.select %624, %621, %602 : vector<1x4xi1>, vector<1x4xi32>
    %c1_i32_237 = arith.constant 1 : i32
    %626 = arith.addi %611, %c1_i32_237 : i32
    %627 = vector.broadcast %626 : i32 to vector<1x4xi32>
    %628 = arith.cmpi sge, %3, %627 : vector<1x4xi32>
    %629 = arith.select %628, %625, %466 : vector<1x4xi1>, vector<1x4xi32>
    %630 = arith.index_cast %611 : i32 to index
    %c0_238 = arith.constant 0 : index
    %c0_239 = arith.constant 0 : index
    %631 = vector.load %arg15[%630, %c0_238, %c0_239] : memref<8x1x4xi32, #tpu.memory_space<vmem>>, vector<1x1x4xi32>
    %632 = vector.shape_cast %631 : vector<1x1x4xi32> to vector<1x4xi32>
    %633 = vector.shape_cast %629 : vector<1x4xi32> to vector<1x1x4xi32>
    tpu.vector_store %arg15[%630, %c0_238, %c0_239], %633 {strides = array<i32>} : memref<8x1x4xi32, #tpu.memory_space<vmem>>, vector<1x1x4xi32>,
    %c7_i32_240 = arith.constant 7 : i32
    %c0_241 = arith.constant 0 : index
    %c0_242 = arith.constant 0 : index
    %c0_243 = arith.constant 0 : index
    %634 = vector.load %arg15[%c0_241, %c0_242, %c0_243] : memref<8x1x4xi32, #tpu.memory_space<vmem>>, vector<8x1x4xi32>
    %c0_244 = arith.constant 0 : index
    %c0_245 = arith.constant 0 : index
    %c0_246 = arith.constant 0 : index
    %635 = vector.load %arg12[%c0_244, %c0_245, %c0_246] : memref<8x1x4xi32, #tpu.memory_space<vmem>>, vector<8x1x4xi32>
    tpu.vector_store %arg12[%c0_244, %c0_245, %c0_246], %634 {strides = array<i32>} : memref<8x1x4xi32, #tpu.memory_space<vmem>>, vector<8x1x4xi32>,
    return
  }
  func.func @transform_0(%arg0: i32) -> (i32, i32) {
    %c0_i32 = arith.constant 0 : i32
    %c0_i32_0 = arith.constant 0 : i32
    %c0_i32_1 = arith.constant 0 : i32
    return %c0_i32, %c0_i32_0 : i32, i32
  }
  func.func @transform_1(%arg0: i32) -> (i32, i32) {
    %c0_i32 = arith.constant 0 : i32
    %c0_i32_0 = arith.constant 0 : i32
    %c0_i32_1 = arith.constant 0 : i32
    return %c0_i32, %c0_i32_0 : i32, i32
  }
  func.func @transform_2(%arg0: i32) -> (i32, i32) {
    %c0_i32 = arith.constant 0 : i32
    %c0_i32_0 = arith.constant 0 : i32
    %c0_i32_1 = arith.constant 0 : i32
    return %c0_i32, %c0_i32_0 : i32, i32
  }
  func.func @transform_3(%arg0: i32) -> (i32, i32) {
    %c0_i32 = arith.constant 0 : i32
    %c0_i32_0 = arith.constant 0 : i32
    %c0_i32_1 = arith.constant 0 : i32
    return %c0_i32, %c0_i32_0 : i32, i32
  }
  func.func @transform_4(%arg0: i32) -> (i32, i32) {
    %c0_i32 = arith.constant 0 : i32
    %c0_i32_0 = arith.constant 0 : i32
    %c0_i32_1 = arith.constant 0 : i32
    return %c0_i32, %c0_i32_0 : i32, i32
  }
  func.func @transform_5(%arg0: i32) -> (i32, i32) {
    %c0_i32 = arith.constant 0 : i32
    %c0_i32_0 = arith.constant 0 : i32
    %c0_i32_1 = arith.constant 0 : i32
    return %c0_i32, %c0_i32_0 : i32, i32
  }
  func.func @transform_6(%arg0: i32) -> (i32, i32, i32) {
    %c0_i32 = arith.constant 0 : i32
    %c0_i32_0 = arith.constant 0 : i32
    %c0_i32_1 = arith.constant 0 : i32
    %c0_i32_2 = arith.constant 0 : i32
    return %c0_i32, %c0_i32_0, %c0_i32_1 : i32, i32, i32
  }
  func.func @transform_7(%arg0: i32) -> (i32, i32, i32) {
    %c0_i32 = arith.constant 0 : i32
    %c0_i32_0 = arith.constant 0 : i32
    %c0_i32_1 = arith.constant 0 : i32
    %c0_i32_2 = arith.constant 0 : i32
    return %c0_i32, %c0_i32_0, %c0_i32_1 : i32, i32, i32
  }
  func.func @transform_8(%arg0: i32) -> (i32, i32) {
    %c0_i32 = arith.constant 0 : i32
    %c0_i32_0 = arith.constant 0 : i32
    %c0_i32_1 = arith.constant 0 : i32
    return %c0_i32, %c0_i32_0 : i32, i32
  }
  func.func @transform_9(%arg0: i32) -> (i32, i32) {
    %c0_i32 = arith.constant 0 : i32
    %c0_i32_0 = arith.constant 0 : i32
    %c0_i32_1 = arith.constant 0 : i32
    return %c0_i32, %c0_i32_0 : i32, i32
  }
  func.func @transform_10(%arg0: i32) -> (i32, i32) {
    %c0_i32 = arith.constant 0 : i32
    %c0_i32_0 = arith.constant 0 : i32
    %c0_i32_1 = arith.constant 0 : i32
    return %c0_i32, %c0_i32_0 : i32, i32
  }
  func.func @transform_11(%arg0: i32) -> (i32, i32, i32) {
    %c0_i32 = arith.constant 0 : i32
    %c0_i32_0 = arith.constant 0 : i32
    %c0_i32_1 = arith.constant 0 : i32
    %c0_i32_2 = arith.constant 0 : i32
    return %c0_i32, %c0_i32_0, %c0_i32_1 : i32, i32, i32
  }
}

</mosaic_0001>

<llo_original>
// kernel: tpu_custom_call.1
$region0: #{tpu_custom_call.1}
  #allocation0 [shape = 'u32[]', space=smem, size = 0x4, offset = 0x4, fixed_abs, tag = 'smem constant byte address 0x4 - core index']
  #allocation1 [shape = 'u32[144,128]{1,0:T(1,128)}', space=vmem, size = 0x12000, scoped, tag = 'internal scratch']
  #allocation2 [shape = 'f32[8,8,4]{2,1,0:T(8,128)}', space=vmem, size = 0x8000, scoped, tag = 'scratch operand']
  #allocation3 [shape = 's32[8,8,4]{2,1,0:T(8,128)}', space=vmem, size = 0x8000, scoped, tag = 'scratch operand']
  #allocation4 [shape = 's32[8,1,4]{2,1,0:T(1,128)}', space=vmem, size = 0x1000, scoped, tag = 'scratch operand']
  %s0 = inlined_call_operand.vmem [shape: bf16[32,32], index: 0, kind: input, shape index: {}]
  %s1 = inlined_call_operand.vmem [shape: bf16[8,32], index: 1, kind: input, shape index: {}]
  %s2 = inlined_call_operand.vmem [shape: f32[8,1], index: 2, kind: input, shape index: {}]
  %s3 = inlined_call_operand.vmem [shape: f32[8,8], index: 3, kind: input, shape index: {}]
  %s4 = inlined_call_operand.vmem [shape: f32[8,1], index: 4, kind: input, shape index: {}]
  %s5 = inlined_call_operand.vmem [shape: f32[8,1], index: 5, kind: input, shape index: {}]
  %s6 = inlined_call_operand.vmem [shape: s32[8,1,4], index: 6, kind: input, shape index: {}]
  %s7 = inlined_call_operand.vmem [shape: f32[8,1,4], index: 7, kind: input, shape index: {}]
  %s8 = inlined_call_operand.vmem [shape: s32[1,4], index: 8, kind: input, shape index: {}]
  %s9 = inlined_call_operand.vmem [shape: f32[1,4], index: 9, kind: input, shape index: {}]
  %s10 = inlined_call_operand.hbm [shape: f32[1,4], index: 10, kind: output, shape index: {0}]
  %s11 = inlined_call_operand.vmem [shape: s32[8,1,4], index: 11, kind: output, shape index: {1}]
  %12 = xla_tuple %s10, %s11
  %s13 = sld [smem:[#allocation0]]
  $region58: #{tpu_custom_call.1} parent=0
    _
  %s15 = ssub.s32 1, %s13
  %s16 = scalar_select 0, %s15, %s13
  $region1: #{tpu_custom_call.1} parent=0
    #allocation5 [shape = 'u8[512]{0}', space=vmem, size = 0x400, scoped, tag = 'output window, operand 0, single buffered']
    #allocation6 [shape = 's32[1]{0}', space=sflag, size = 0x4, scoped, tag = 'scoped memory for tpu_custom_call.1']
    %17 = vsyncpa [#allocation6], 0
    // Predicated region
    $region2: #{tpu_custom_call.1} parent=1 // pred_check
      _
    $region3: #{tpu_custom_call.1} parent=1 // pred_check_branch
      %19 = sbr.rel (0) target = $region5
    $region4: #{tpu_custom_call.1} parent=1 // pred_region
      _
    $region5: #{tpu_custom_call.1} parent=1 // pred_fallthru
      _
    // Predicated region
    $region6: #{tpu_custom_call.1} parent=1 // pred_check
      _
    $region7: #{tpu_custom_call.1} parent=1 // pred_check_branch
      %21 = sbr.rel (0) target = $region9
    $region8: #{tpu_custom_call.1} parent=1 // pred_region
      _
    $region9: #{tpu_custom_call.1} parent=1 // pred_fallthru
      _
    // Predicated region
    $region10: #{tpu_custom_call.1} parent=1 // pred_check
      _
    $region11: #{tpu_custom_call.1} parent=1 // pred_check_branch
      %23 = sbr.rel (0) target = $region13
    $region12: #{tpu_custom_call.1} parent=1 // pred_region
      _
    $region13: #{tpu_custom_call.1} parent=1 // pred_fallthru
      _
    // Predicated region
    $region14: #{tpu_custom_call.1} parent=1 // pred_check
      _
    $region15: #{tpu_custom_call.1} parent=1 // pred_check_branch
      %25 = sbr.rel (0) target = $region17
    $region16: #{tpu_custom_call.1} parent=1 // pred_region
      _
    $region17: #{tpu_custom_call.1} parent=1 // pred_fallthru
      _
    // Predicated region
    $region18: #{tpu_custom_call.1} parent=1 // pred_check
      _
    $region19: #{tpu_custom_call.1} parent=1 // pred_check_branch
      %27 = sbr.rel (0) target = $region21
    $region20: #{tpu_custom_call.1} parent=1 // pred_region
      _
    $region21: #{tpu_custom_call.1} parent=1 // pred_fallthru
      _
    // Predicated region
    $region22: #{tpu_custom_call.1} parent=1 // pred_check
      _
    $region23: #{tpu_custom_call.1} parent=1 // pred_check_branch
      %29 = sbr.rel (0) target = $region25
    $region24: #{tpu_custom_call.1} parent=1 // pred_region
      _
    $region25: #{tpu_custom_call.1} parent=1 // pred_fallthru
      _
    // Predicated region
    $region26: #{tpu_custom_call.1} parent=1 // pred_check
      _
    $region27: #{tpu_custom_call.1} parent=1 // pred_check_branch
      %31 = sbr.rel (0) target = $region29
    $region28: #{tpu_custom_call.1} parent=1 // pred_region
      _
    $region29: #{tpu_custom_call.1} parent=1 // pred_fallthru
      _
    // Predicated region
    $region30: #{tpu_custom_call.1} parent=1 // pred_check
      _
    $region31: #{tpu_custom_call.1} parent=1 // pred_check_branch
      %33 = sbr.rel (0) target = $region33
    $region32: #{tpu_custom_call.1} parent=1 // pred_region
      _
    $region33: #{tpu_custom_call.1} parent=1 // pred_fallthru
      _
    // Predicated region
    $region34: #{tpu_custom_call.1} parent=1 // pred_check
      _
    $region35: #{tpu_custom_call.1} parent=1 // pred_check_branch
      %35 = sbr.rel (0) target = $region37
    $region36: #{tpu_custom_call.1} parent=1 // pred_region
      _
    $region37: #{tpu_custom_call.1} parent=1 // pred_fallthru
      _
    // Predicated region
    $region38: #{tpu_custom_call.1} parent=1 // pred_check
      _
    $region39: #{tpu_custom_call.1} parent=1 // pred_check_branch
      %37 = sbr.rel (0) target = $region41
    $region40: #{tpu_custom_call.1} parent=1 // pred_region
      _
    $region41: #{tpu_custom_call.1} parent=1 // pred_fallthru
      _
    %v39 = vld [vmem:[%s3] sm:$0xff]
    %v40 = vld [vmem:[%s4] sm:$0xff]
    %v41 = vld [vmem:[%s5] sm:$0xff]
    %v42 = vld [vmem:[%s8] sm:$0x1]
    %v43 = vlaneseq
    %v44 = vshrl.u32 %v43, 7
    %v45 = vld [vmem:[%s1] sm:$0xf]
    %v46 = vld [vmem:[%s0] sm:$0xf]
    %v47 = vld [vmem:[%s0 + $0x4] sm:$0xf]
    %v48 = vld [vmem:[%s0 + $0x8] sm:$0xf]
    %v49 = vld [vmem:[%s0 + $0xc] sm:$0xf]
    %v50 = vld [vmem:[%s2] sm:$0xff]
    %52 = vset.pattern.permute.xlu0 0
    %53 = vperm.xlu0 %52, %v50
    %v54 = vpop.permute.xlu0 %53
    %v60 = vunpack.c.l.b16 %v46
    %v61 = vunpack.c.l.b16 %v47
    %v62 = vunpack.c.l.b16 %v48
    %v63 = vunpack.c.l.b16 %v49
    %v64 = vpack.c.b16 %v61, %v60
    %v65 = vpack.c.b16 %v63, %v62
    %vm68 = vcmask 261120
    %v70 = vsel %vm68, %v45, 0
    %72 = vmatprep.subr.bf16.mxu0 0
    %73 = vmatpush1.bf16.msra.mxu0 %v64
    %74 = vmatprep.subr.bf16.mxu0 0
    %75 = vmatpush1.bf16.msra.mxu0 %v65
    %76 = vmatprep.subr.bf16.mxu0 0
    %77 = vmatpush1.bf16.msra.mxu0 0
    %78 = vmatprep.subr.bf16.mxu0 0
    %79 = vmatpush1.bf16.msra.mxu0 0
    %80 = vmatprep.subr.bf16.mxu0 0
    %81 = vmatpush1.bf16.msra.mxu0 0
    %82 = vmatprep.subr.bf16.mxu0 0
    %83 = vmatpush1.bf16.msra.mxu0 0
    %84 = vmatprep.subr.bf16.mxu0 0
    %85 = vmatpush1.bf16.msra.mxu0 0
    %86 = vmatprep.subr.bf16.mxu0 0
    %87 = vmatpush1.bf16.msra.mxu0 0
    %88 = vmatprep.subr.bf16.mxu0 0
    %89 = vmatpush1.bf16.msra.mxu0 0
    %90 = vmatprep.subr.bf16.mxu0 0
    %91 = vmatpush1.bf16.msra.mxu0 0
    %92 = vmatprep.subr.bf16.mxu0 0
    %93 = vmatpush1.bf16.msra.mxu0 0
    %94 = vmatprep.subr.bf16.mxu0 0
    %95 = vmatpush1.bf16.msra.mxu0 0
    %96 = vmatprep.subr.bf16.mxu0 0
    %97 = vmatpush1.bf16.msra.mxu0 0
    %98 = vmatprep.subr.bf16.mxu0 0
    %99 = vmatpush1.bf16.msra.mxu0 0
    %100 = vmatprep.subr.bf16.mxu0 0
    %101 = vmatpush1.bf16.msra.mxu0 0
    %102 = vmatprep.subr.bf16.mxu0 0
    %103 = vmatpush1.bf16.msra.mxu0 0
    %104 = vmatprep.mubr.bf16.mxu0 0
    %105 = vmatmul.mubr.bf16.gmra.mrb[0].mxu0 %v70
    %v106 = vpop.f32.mrb[0].mxu0
    %v107 = vadd.f32 %v54, %v106
    %v108 = vpop.f32.mrb[0].mxu0
    %v109 = vpop.f32.mrb[0].mxu0
    %v110 = vpop.f32.mrb[0].mxu0
    %111 = vdwg.mxu0
    %vm112 = vcmask 31744
    %113 = vst.msk [vmem:[#allocation2] sm:$0xff] %vm112, %v107
    %115 = vrot.lane.b32.xlu0 %v107, 124
    %v116 = vpop.permute.xlu0 %115
    %s118 = scalar_lea.vmem [#allocation2], 8
    %119 = vst.msk [vmem:[%s118] sm:$0xff] %vm112, %v116
    %120 = vrot.lane.b32.xlu0 %v107, 120
    %v121 = vpop.permute.xlu0 %120
    %s123 = scalar_lea.vmem [#allocation2], 16
    %124 = vst.msk [vmem:[%s123] sm:$0xff] %vm112, %v121
    %125 = vrot.lane.b32.xlu0 %v107, 116
    %v126 = vpop.permute.xlu0 %125
    %s128 = scalar_lea.vmem [#allocation2], 24
    %129 = vst.msk [vmem:[%s128] sm:$0xff] %vm112, %v126
    %130 = vrot.lane.b32.xlu0 %v107, 112
    %v131 = vpop.permute.xlu0 %130
    %s133 = scalar_lea.vmem [#allocation2], 32
    %134 = vst.msk [vmem:[%s133] sm:$0xff] %vm112, %v131
    %135 = vrot.lane.b32.xlu0 %v107, 108
    %v136 = vpop.permute.xlu0 %135
    %s138 = scalar_lea.vmem [#allocation2], 40
    %139 = vst.msk [vmem:[%s138] sm:$0xff] %vm112, %v136
    %140 = vrot.lane.b32.xlu0 %v107, 104
    %v141 = vpop.permute.xlu0 %140
    %s143 = scalar_lea.vmem [#allocation2], 48
    %144 = vst.msk [vmem:[%s143] sm:$0xff] %vm112, %v141
    %145 = vrot.lane.b32.xlu0 %v107, 100
    %v146 = vpop.permute.xlu0 %145
    %s148 = scalar_lea.vmem [#allocation2], 56
    %149 = vst.msk [vmem:[%s148] sm:$0xff] %vm112, %v146
    %v150 = vld [vmem:[#allocation2] sm:$0xff]
    %152 = vset.pattern.permute.xlu0 0
    %153 = vperm.xlu0 %152, %v40
    %v154 = vpop.permute.xlu0 %153
    %v156 = vadd.f32 %v154, %v150
    %v157 = vld [vmem:[%s6] sm:$0x1]
    %v158 = vlaneseq
    %v159 = vshrl.u32 %v158, 7
    %v160 = vsub.s32 0, %v159
    %v161 = vrot.slane %v157, %v160
    %vm162 = vcmp.eq.s32.totalorder %v44, %v161
    %v163 = vsel %vm162, %v150, 0.0
    %v164 = vsel %vm112, %v163, 0.0
    %v165 = vrot.slane %v164, 4
    %v166 = vadd.f32 %v164, %v165
    %v167 = vrot.slane %v166, 2
    %v168 = vadd.f32 %v166, %v167
    %v169 = vrot.slane %v168, 1
    %v170 = vadd.f32 %v168, %v169
    %v171 = vld [vmem:[%s118] sm:$0xff]
    %s172 = scalar_lea.vmem %s7, 1
    %v173 = vld [vmem:[%s172] sm:$0x1]
    %vm174 = vcmp.gt.f32.partialorder %v173, 0.5
    %v176 = vcombine.high %v171, %v171
    %v178 = vunpack.c.l.s4 1966171168
    %v179 = vunpack.c.0.s8 %v178
    %v180 = vlaneseq
    %v181 = vshrl.u32 %v180, 7
    %v182 = vsub.s32 %v179, %v181
    %v183 = vrot.slane %v171, %v182
    %v185 = vunpack.c.l.s4 1966171168
    %v186 = vunpack.c.0.s8 %v185
    %v187 = vlaneseq
    %v188 = vshrl.u32 %v187, 7
    %v189 = vsub.s32 %v186, %v188
    %v190 = vrot.slane %v176, %v189
    %v191 = vcombine.high %v183, %v183
    %v192 = vcombine.high %v190, %v190
    %v194 = vunpack.c.l.s4 1966171168
    %v195 = vunpack.c.0.s8 %v194
    %v196 = vlaneseq
    %v197 = vshrl.u32 %v196, 7
    %v198 = vsub.s32 %v195, %v197
    %v199 = vrot.slane %v183, %v198
    %v201 = vunpack.c.l.s4 1966171168
    %v202 = vunpack.c.0.s8 %v201
    %v203 = vlaneseq
    %v204 = vshrl.u32 %v203, 7
    %v205 = vsub.s32 %v202, %v204
    %v206 = vrot.slane %v190, %v205
    %v208 = vunpack.c.l.s4 1966171168
    %v209 = vunpack.c.0.s8 %v208
    %v210 = vlaneseq
    %v211 = vshrl.u32 %v210, 7
    %v212 = vsub.s32 %v209, %v211
    %v213 = vrot.slane %v191, %v212
    %v215 = vunpack.c.l.s4 1966171168
    %v216 = vunpack.c.0.s8 %v215
    %v217 = vlaneseq
    %v218 = vshrl.u32 %v217, 7
    %v219 = vsub.s32 %v216, %v218
    %v220 = vrot.slane %v192, %v219
    %v221 = vcombine.high %v199, %v199
    %v222 = vcombine.high %v206, %v206
    %v223 = vcombine.high %v213, %v213
    %v224 = vcombine.high %v220, %v220
    %v225 = vlaneseq
    %v226 = vshrl.u32 %v225, 7
    %v227 = vsub.s32 0, %v226
    %v228 = vrot.slane %v39, %v227
    %230 = vbcast.lane.b32.xlu0 %v228, 256
    %v231 = vpop.permute.xlu0 %230
    %v232 = vlaneseq
    %v233 = vshrl.u32 %v232, 7
    %v234 = vsub.s32 1, %v233
    %v235 = vrot.slane %v39, %v234
    %237 = vbcast.lane.b32.xlu0 %v235, 256
    %v238 = vpop.permute.xlu0 %237
    %v239 = vlaneseq
    %v240 = vshrl.u32 %v239, 7
    %v241 = vsub.s32 2, %v240
    %v242 = vrot.slane %v39, %v241
    %244 = vbcast.lane.b32.xlu0 %v242, 256
    %v245 = vpop.permute.xlu0 %244
    %v246 = vlaneseq
    %v247 = vshrl.u32 %v246, 7
    %v248 = vsub.s32 3, %v247
    %v249 = vrot.slane %v39, %v248
    %251 = vbcast.lane.b32.xlu0 %v249, 256
    %v252 = vpop.permute.xlu0 %251
    %v253 = vlaneseq
    %v254 = vshrl.u32 %v253, 7
    %v255 = vsub.s32 4, %v254
    %v256 = vrot.slane %v39, %v255
    %258 = vbcast.lane.b32.xlu0 %v256, 256
    %v259 = vpop.permute.xlu0 %258
    %v260 = vlaneseq
    %v261 = vshrl.u32 %v260, 7
    %v262 = vsub.s32 5, %v261
    %v263 = vrot.slane %v39, %v262
    %265 = vbcast.lane.b32.xlu0 %v263, 256
    %v266 = vpop.permute.xlu0 %265
    %v267 = vlaneseq
    %v268 = vshrl.u32 %v267, 7
    %v269 = vsub.s32 6, %v268
    %v270 = vrot.slane %v39, %v269
    %272 = vbcast.lane.b32.xlu0 %v270, 256
    %v273 = vpop.permute.xlu0 %272
    %v274 = vlaneseq
    %v275 = vshrl.u32 %v274, 7
    %v276 = vsub.s32 7, %v275
    %v277 = vrot.slane %v39, %v276
    %279 = vbcast.lane.b32.xlu0 %v277, 256
    %v280 = vpop.permute.xlu0 %279
    %v281 = vlaneseq
    %v282 = vshrl.u32 %v281, 7
    %v283 = vsub.s32 0, %v282
    %v284 = vrot.slane %v199, %v283
    %v285 = vlaneseq
    %v286 = vshrl.u32 %v285, 7
    %v287 = vsub.s32 0, %v286
    %v288 = vrot.slane %v213, %v287
    %v289 = vlaneseq
    %v290 = vshrl.u32 %v289, 7
    %v291 = vsub.s32 0, %v290
    %v292 = vrot.slane %v221, %v291
    %v293 = vlaneseq
    %v294 = vshrl.u32 %v293, 7
    %v295 = vsub.s32 0, %v294
    %v296 = vrot.slane %v223, %v295
    %v297 = vlaneseq
    %v298 = vshrl.u32 %v297, 7
    %v299 = vsub.s32 0, %v298
    %v300 = vrot.slane %v206, %v299
    %v301 = vlaneseq
    %v302 = vshrl.u32 %v301, 7
    %v303 = vsub.s32 0, %v302
    %v304 = vrot.slane %v220, %v303
    %v305 = vlaneseq
    %v306 = vshrl.u32 %v305, 7
    %v307 = vsub.s32 0, %v306
    %v308 = vrot.slane %v222, %v307
    %v309 = vlaneseq
    %v310 = vshrl.u32 %v309, 7
    %v311 = vsub.s32 0, %v310
    %v312 = vrot.slane %v224, %v311
    %v321 = vadd.f32 %v284, %v231
    %v322 = vadd.f32 %v288, %v238
    %v323 = vadd.f32 %v292, %v245
    %v324 = vadd.f32 %v296, %v252
    %v325 = vadd.f32 %v300, %v259
    %v326 = vadd.f32 %v304, %v266
    %v327 = vadd.f32 %v308, %v273
    %v328 = vadd.f32 %v312, %v280
    %v329 = vadd.f32 %v321, %v156
    %v330 = vadd.f32 %v322, %v156
    %v331 = vadd.f32 %v323, %v156
    %v332 = vadd.f32 %v324, %v156
    %v333 = vadd.f32 %v325, %v156
    %v334 = vadd.f32 %v326, %v156
    %v335 = vadd.f32 %v327, %v156
    %v336 = vadd.f32 %v328, %v156
    %v337 = vsel %vm112, %v329, -inf
    %v338 = vrot.slane %v337, 4
    %v339 = vmax.f32 %v337, %v338
    %v340 = vrot.slane %v339, 2
    %v341 = vmax.f32 %v339, %v340
    %v342 = vrot.slane %v341, 1
    %v343 = vmax.f32 %v341, %v342
    %v344 = vsel %vm112, %v330, -inf
    %v345 = vrot.slane %v344, 4
    %v346 = vmax.f32 %v344, %v345
    %v347 = vrot.slane %v346, 2
    %v348 = vmax.f32 %v346, %v347
    %v349 = vrot.slane %v348, 1
    %v350 = vmax.f32 %v348, %v349
    %v351 = vsel %vm112, %v331, -inf
    %v352 = vrot.slane %v351, 4
    %v353 = vmax.f32 %v351, %v352
    %v354 = vrot.slane %v353, 2
    %v355 = vmax.f32 %v353, %v354
    %v356 = vrot.slane %v355, 1
    %v357 = vmax.f32 %v355, %v356
    %v358 = vsel %vm112, %v332, -inf
    %v359 = vrot.slane %v358, 4
    %v360 = vmax.f32 %v358, %v359
    %v361 = vrot.slane %v360, 2
    %v362 = vmax.f32 %v360, %v361
    %v363 = vrot.slane %v362, 1
    %v364 = vmax.f32 %v362, %v363
    %v365 = vsel %vm112, %v333, -inf
    %v366 = vrot.slane %v365, 4
    %v367 = vmax.f32 %v365, %v366
    %v368 = vrot.slane %v367, 2
    %v369 = vmax.f32 %v367, %v368
    %v370 = vrot.slane %v369, 1
    %v371 = vmax.f32 %v369, %v370
    %v372 = vsel %vm112, %v334, -inf
    %v373 = vrot.slane %v372, 4
    %v374 = vmax.f32 %v372, %v373
    %v375 = vrot.slane %v374, 2
    %v376 = vmax.f32 %v374, %v375
    %v377 = vrot.slane %v376, 1
    %v378 = vmax.f32 %v376, %v377
    %v379 = vsel %vm112, %v335, -inf
    %v380 = vrot.slane %v379, 4
    %v381 = vmax.f32 %v379, %v380
    %v382 = vrot.slane %v381, 2
    %v383 = vmax.f32 %v381, %v382
    %v384 = vrot.slane %v383, 1
    %v385 = vmax.f32 %v383, %v384
    %v386 = vsel %vm112, %v336, -inf
    %v387 = vrot.slane %v386, 4
    %v388 = vmax.f32 %v386, %v387
    %v389 = vrot.slane %v388, 2
    %v390 = vmax.f32 %v388, %v389
    %v391 = vrot.slane %v390, 1
    %v392 = vmax.f32 %v390, %v391
    %v393 = vsub.f32 %v329, %v343
    %v394 = vsub.f32 %v330, %v350
    %v395 = vsub.f32 %v331, %v357
    %v396 = vsub.f32 %v332, %v364
    %v397 = vsub.f32 %v333, %v371
    %v398 = vsub.f32 %v334, %v378
    %v399 = vsub.f32 %v335, %v385
    %v400 = vsub.f32 %v336, %v392
    %v401 = vmul.f32 %v393, 1.442695
    %v402 = vpow.pop %v401
    %v403 = vmul.f32 %v394, 1.442695
    %v404 = vpow.pop %v403
    %v405 = vmul.f32 %v395, 1.442695
    %v406 = vpow.pop %v405
    %v407 = vmul.f32 %v396, 1.442695
    %v408 = vpow.pop %v407
    %v409 = vmul.f32 %v397, 1.442695
    %v410 = vpow.pop %v409
    %v411 = vmul.f32 %v398, 1.442695
    %v412 = vpow.pop %v411
    %v413 = vmul.f32 %v399, 1.442695
    %v414 = vpow.pop %v413
    %v415 = vmul.f32 %v400, 1.442695
    %v416 = vpow.pop %v415
    %v417 = vsel %vm112, %v402, 0.0
    %v418 = vrot.slane %v417, 4
    %v419 = vadd.f32 %v417, %v418
    %v420 = vrot.slane %v419, 2
    %v421 = vadd.f32 %v419, %v420
    %v422 = vrot.slane %v421, 1
    %v423 = vadd.f32 %v421, %v422
    %v424 = vsel %vm112, %v404, 0.0
    %v425 = vrot.slane %v424, 4
    %v426 = vadd.f32 %v424, %v425
    %v427 = vrot.slane %v426, 2
    %v428 = vadd.f32 %v426, %v427
    %v429 = vrot.slane %v428, 1
    %v430 = vadd.f32 %v428, %v429
    %v431 = vsel %vm112, %v406, 0.0
    %v432 = vrot.slane %v431, 4
    %v433 = vadd.f32 %v431, %v432
    %v434 = vrot.slane %v433, 2
    %v435 = vadd.f32 %v433, %v434
    %v436 = vrot.slane %v435, 1
    %v437 = vadd.f32 %v435, %v436
    %v438 = vsel %vm112, %v408, 0.0
    %v439 = vrot.slane %v438, 4
    %v440 = vadd.f32 %v438, %v439
    %v441 = vrot.slane %v440, 2
    %v442 = vadd.f32 %v440, %v441
    %v443 = vrot.slane %v442, 1
    %v444 = vadd.f32 %v442, %v443
    %v445 = vsel %vm112, %v410, 0.0
    %v446 = vrot.slane %v445, 4
    %v447 = vadd.f32 %v445, %v446
    %v448 = vrot.slane %v447, 2
    %v449 = vadd.f32 %v447, %v448
    %v450 = vrot.slane %v449, 1
    %v451 = vadd.f32 %v449, %v450
    %v452 = vsel %vm112, %v412, 0.0
    %v453 = vrot.slane %v452, 4
    %v454 = vadd.f32 %v452, %v453
    %v455 = vrot.slane %v454, 2
    %v456 = vadd.f32 %v454, %v455
    %v457 = vrot.slane %v456, 1
    %v458 = vadd.f32 %v456, %v457
    %v459 = vsel %vm112, %v414, 0.0
    %v460 = vrot.slane %v459, 4
    %v461 = vadd.f32 %v459, %v460
    %v462 = vrot.slane %v461, 2
    %v463 = vadd.f32 %v461, %v462
    %v464 = vrot.slane %v463, 1
    %v465 = vadd.f32 %v463, %v464
    %v466 = vsel %vm112, %v416, 0.0
    %v467 = vrot.slane %v466, 4
    %v468 = vadd.f32 %v466, %v467
    %v469 = vrot.slane %v468, 2
    %v470 = vadd.f32 %v468, %v469
    %v471 = vrot.slane %v470, 1
    %v472 = vadd.f32 %v470, %v471
    %v473 = vlog2.pop %v423
    %v474 = vmul.f32 %v473, 0.6931472
    %v475 = vlog2.pop %v430
    %v476 = vmul.f32 %v475, 0.6931472
    %v477 = vlog2.pop %v437
    %v478 = vmul.f32 %v477, 0.6931472
    %v479 = vlog2.pop %v444
    %v480 = vmul.f32 %v479, 0.6931472
    %v481 = vlog2.pop %v451
    %v482 = vmul.f32 %v481, 0.6931472
    %v483 = vlog2.pop %v458
    %v484 = vmul.f32 %v483, 0.6931472
    %v485 = vlog2.pop %v465
    %v486 = vmul.f32 %v485, 0.6931472
    %v487 = vlog2.pop %v472
    %v488 = vmul.f32 %v487, 0.6931472
    %v489 = vadd.f32 %v343, %v474
    %v490 = vadd.f32 %v350, %v476
    %v491 = vadd.f32 %v357, %v478
    %v492 = vadd.f32 %v364, %v480
    %v493 = vadd.f32 %v371, %v482
    %v494 = vadd.f32 %v378, %v484
    %v495 = vadd.f32 %v385, %v486
    %v496 = vadd.f32 %v392, %v488
    %v497 = vsel %vm174, 1, 0
    %v498 = vlaneseq
    %v499 = vshrl.u32 %v498, 7
    %v500 = vsub.s32 0, %v499
    %v501 = vrot.slane %v497, %v500
    %vm502 = vcmp.eq.s32.totalorder %v501, 1
    %vm511 = vcmask 1041409
    %v512 = vsel %vm511, %v490, %v489
    %vm513 = vcmask 1042434
    %v514 = vsel %vm513, %v491, %v512
    %vm515 = vcmask 1043459
    %v516 = vsel %vm515, %v492, %v514
    %vm517 = vcmask 1044484
    %v518 = vsel %vm517, %v493, %v516
    %vm519 = vcmask 1045509
    %v520 = vsel %vm519, %v494, %v518
    %vm521 = vcmask 1046534
    %v522 = vsel %vm521, %v495, %v520
    %vm523 = vcmask 1047559
    %v524 = vsel %vm523, %v496, %v522
    %v526 = vsel %vm502, %v524, %v156
    %vm527 = vcmp.eq.f32.partialorder %v329, %v343
    %vm528 = vcmp.eq.f32.partialorder %v330, %v350
    %vm529 = vcmp.eq.f32.partialorder %v331, %v357
    %vm530 = vcmp.eq.f32.partialorder %v332, %v364
    %vm531 = vcmp.eq.f32.partialorder %v333, %v371
    %vm532 = vcmp.eq.f32.partialorder %v334, %v378
    %vm533 = vcmp.eq.f32.partialorder %v335, %v385
    %vm534 = vcmp.eq.f32.partialorder %v336, %v392
    %v535 = vsel %vm527, %v44, 8
    %v536 = vsel %vm528, %v44, 8
    %v537 = vsel %vm529, %v44, 8
    %v538 = vsel %vm530, %v44, 8
    %v539 = vsel %vm531, %v44, 8
    %v540 = vsel %vm532, %v44, 8
    %v541 = vsel %vm533, %v44, 8
    %v542 = vsel %vm534, %v44, 8
    %v543 = vsel %vm112, %v535, 2147483647
    %v544 = vrot.slane %v543, 4
    %vm545 = vcmp.lt.s32.totalorder %v543, %v544
    %v546 = vsel %vm545, %v543, %v544
    %v547 = vrot.slane %v546, 2
    %vm548 = vcmp.lt.s32.totalorder %v546, %v547
    %v549 = vsel %vm548, %v546, %v547
    %v550 = vrot.slane %v549, 1
    %vm551 = vcmp.lt.s32.totalorder %v549, %v550
    %v552 = vsel %vm551, %v549, %v550
    %v553 = vsel %vm112, %v536, 2147483647
    %v554 = vrot.slane %v553, 4
    %vm555 = vcmp.lt.s32.totalorder %v553, %v554
    %v556 = vsel %vm555, %v553, %v554
    %v557 = vrot.slane %v556, 2
    %vm558 = vcmp.lt.s32.totalorder %v556, %v557
    %v559 = vsel %vm558, %v556, %v557
    %v560 = vrot.slane %v559, 1
    %vm561 = vcmp.lt.s32.totalorder %v559, %v560
    %v562 = vsel %vm561, %v559, %v560
    %v563 = vsel %vm112, %v537, 2147483647
    %v564 = vrot.slane %v563, 4
    %vm565 = vcmp.lt.s32.totalorder %v563, %v564
    %v566 = vsel %vm565, %v563, %v564
    %v567 = vrot.slane %v566, 2
    %vm568 = vcmp.lt.s32.totalorder %v566, %v567
    %v569 = vsel %vm568, %v566, %v567
    %v570 = vrot.slane %v569, 1
    %vm571 = vcmp.lt.s32.totalorder %v569, %v570
    %v572 = vsel %vm571, %v569, %v570
    %v573 = vsel %vm112, %v538, 2147483647
    %v574 = vrot.slane %v573, 4
    %vm575 = vcmp.lt.s32.totalorder %v573, %v574
    %v576 = vsel %vm575, %v573, %v574
    %v577 = vrot.slane %v576, 2
    %vm578 = vcmp.lt.s32.totalorder %v576, %v577
    %v579 = vsel %vm578, %v576, %v577
    %v580 = vrot.slane %v579, 1
    %vm581 = vcmp.lt.s32.totalorder %v579, %v580
    %v582 = vsel %vm581, %v579, %v580
    %v583 = vsel %vm112, %v539, 2147483647
    %v584 = vrot.slane %v583, 4
    %vm585 = vcmp.lt.s32.totalorder %v583, %v584
    %v586 = vsel %vm585, %v583, %v584
    %v587 = vrot.slane %v586, 2
    %vm588 = vcmp.lt.s32.totalorder %v586, %v587
    %v589 = vsel %vm588, %v586, %v587
    %v590 = vrot.slane %v589, 1
    %vm591 = vcmp.lt.s32.totalorder %v589, %v590
    %v592 = vsel %vm591, %v589, %v590
    %v593 = vsel %vm112, %v540, 2147483647
    %v594 = vrot.slane %v593, 4
    %vm595 = vcmp.lt.s32.totalorder %v593, %v594
    %v596 = vsel %vm595, %v593, %v594
    %v597 = vrot.slane %v596, 2
    %vm598 = vcmp.lt.s32.totalorder %v596, %v597
    %v599 = vsel %vm598, %v596, %v597
    %v600 = vrot.slane %v599, 1
    %vm601 = vcmp.lt.s32.totalorder %v599, %v600
    %v602 = vsel %vm601, %v599, %v600
    %v603 = vsel %vm112, %v541, 2147483647
    %v604 = vrot.slane %v603, 4
    %vm605 = vcmp.lt.s32.totalorder %v603, %v604
    %v606 = vsel %vm605, %v603, %v604
    %v607 = vrot.slane %v606, 2
    %vm608 = vcmp.lt.s32.totalorder %v606, %v607
    %v609 = vsel %vm608, %v606, %v607
    %v610 = vrot.slane %v609, 1
    %vm611 = vcmp.lt.s32.totalorder %v609, %v610
    %v612 = vsel %vm611, %v609, %v610
    %v613 = vsel %vm112, %v542, 2147483647
    %v614 = vrot.slane %v613, 4
    %vm615 = vcmp.lt.s32.totalorder %v613, %v614
    %v616 = vsel %vm615, %v613, %v614
    %v617 = vrot.slane %v616, 2
    %vm618 = vcmp.lt.s32.totalorder %v616, %v617
    %v619 = vsel %vm618, %v616, %v617
    %v620 = vrot.slane %v619, 1
    %vm621 = vcmp.lt.s32.totalorder %v619, %v620
    %v622 = vsel %vm621, %v619, %v620
    %v623 = vsel %vm511, %v562, %v552
    %v624 = vsel %vm513, %v572, %v623
    %v625 = vsel %vm515, %v582, %v624
    %v626 = vsel %vm517, %v592, %v625
    %v627 = vsel %vm519, %v602, %v626
    %v628 = vsel %vm521, %v612, %v627
    %v629 = vsel %vm523, %v622, %v628
    %s630 = scalar_lea.vmem [#allocation3], 8
    %631 = vst.msk [vmem:[%s630] sm:$0xff] %vm112, %v629
    %v640 = vsel %vm511, %v350, %v343
    %v641 = vsel %vm513, %v357, %v640
    %v642 = vsel %vm515, %v364, %v641
    %v643 = vsel %vm517, %v371, %v642
    %v644 = vsel %vm519, %v378, %v643
    %v645 = vsel %vm521, %v385, %v644
    %v646 = vsel %vm523, %v392, %v645
    %v648 = vsel %vm502, %v646, %v156
    %s649 = scalar_lea.vmem %s6, 1
    %v650 = vld [vmem:[%s649] sm:$0x1]
    %v651 = vlaneseq
    %v652 = vshrl.u32 %v651, 7
    %v653 = vsub.s32 0, %v652
    %v654 = vrot.slane %v650, %v653
    %vm655 = vcmp.eq.s32.totalorder %v44, %v654
    %v656 = vsel %vm655, %v171, 0.0
    %v657 = vsel %vm112, %v656, 0.0
    %v658 = vrot.slane %v657, 4
    %v659 = vadd.f32 %v657, %v658
    %v660 = vrot.slane %v659, 2
    %v661 = vadd.f32 %v659, %v660
    %v662 = vrot.slane %v661, 1
    %v663 = vadd.f32 %v661, %v662
    %v664 = vmul.f32 %v173, %v663
    %v665 = vadd.f32 %v170, %v664
    %v666 = vld [vmem:[%s123] sm:$0xff]
    %s667 = scalar_lea.vmem %s7, 2
    %v668 = vld [vmem:[%s667] sm:$0x1]
    %vm669 = vcmp.gt.f32.partialorder %v668, 0.5
    %v671 = vcombine.high %v666, %v666
    %v673 = vunpack.c.l.s4 1966171168
    %v674 = vunpack.c.0.s8 %v673
    %v675 = vlaneseq
    %v676 = vshrl.u32 %v675, 7
    %v677 = vsub.s32 %v674, %v676
    %v678 = vrot.slane %v666, %v677
    %v680 = vunpack.c.l.s4 1966171168
    %v681 = vunpack.c.0.s8 %v680
    %v682 = vlaneseq
    %v683 = vshrl.u32 %v682, 7
    %v684 = vsub.s32 %v681, %v683
    %v685 = vrot.slane %v671, %v684
    %v686 = vcombine.high %v678, %v678
    %v687 = vcombine.high %v685, %v685
    %v689 = vunpack.c.l.s4 1966171168
    %v690 = vunpack.c.0.s8 %v689
    %v691 = vlaneseq
    %v692 = vshrl.u32 %v691, 7
    %v693 = vsub.s32 %v690, %v692
    %v694 = vrot.slane %v678, %v693
    %v696 = vunpack.c.l.s4 1966171168
    %v697 = vunpack.c.0.s8 %v696
    %v698 = vlaneseq
    %v699 = vshrl.u32 %v698, 7
    %v700 = vsub.s32 %v697, %v699
    %v701 = vrot.slane %v685, %v700
    %v703 = vunpack.c.l.s4 1966171168
    %v704 = vunpack.c.0.s8 %v703
    %v705 = vlaneseq
    %v706 = vshrl.u32 %v705, 7
    %v707 = vsub.s32 %v704, %v706
    %v708 = vrot.slane %v686, %v707
    %v710 = vunpack.c.l.s4 1966171168
    %v711 = vunpack.c.0.s8 %v710
    %v712 = vlaneseq
    %v713 = vshrl.u32 %v712, 7
    %v714 = vsub.s32 %v711, %v713
    %v715 = vrot.slane %v687, %v714
    %v716 = vcombine.high %v694, %v694
    %v717 = vcombine.high %v701, %v701
    %v718 = vcombine.high %v708, %v708
    %v719 = vcombine.high %v715, %v715
    %v720 = vlaneseq
    %v721 = vshrl.u32 %v720, 7
    %v722 = vsub.s32 0, %v721
    %v723 = vrot.slane %v694, %v722
    %v724 = vlaneseq
    %v725 = vshrl.u32 %v724, 7
    %v726 = vsub.s32 0, %v725
    %v727 = vrot.slane %v708, %v726
    %v728 = vlaneseq
    %v729 = vshrl.u32 %v728, 7
    %v730 = vsub.s32 0, %v729
    %v731 = vrot.slane %v716, %v730
    %v732 = vlaneseq
    %v733 = vshrl.u32 %v732, 7
    %v734 = vsub.s32 0, %v733
    %v735 = vrot.slane %v718, %v734
    %v736 = vlaneseq
    %v737 = vshrl.u32 %v736, 7
    %v738 = vsub.s32 0, %v737
    %v739 = vrot.slane %v701, %v738
    %v740 = vlaneseq
    %v741 = vshrl.u32 %v740, 7
    %v742 = vsub.s32 0, %v741
    %v743 = vrot.slane %v715, %v742
    %v744 = vlaneseq
    %v745 = vshrl.u32 %v744, 7
    %v746 = vsub.s32 0, %v745
    %v747 = vrot.slane %v717, %v746
    %v748 = vlaneseq
    %v749 = vshrl.u32 %v748, 7
    %v750 = vsub.s32 0, %v749
    %v751 = vrot.slane %v719, %v750
    %v760 = vadd.f32 %v723, %v231
    %v761 = vadd.f32 %v727, %v238
    %v762 = vadd.f32 %v731, %v245
    %v763 = vadd.f32 %v735, %v252
    %v764 = vadd.f32 %v739, %v259
    %v765 = vadd.f32 %v743, %v266
    %v766 = vadd.f32 %v747, %v273
    %v767 = vadd.f32 %v751, %v280
    %v768 = vadd.f32 %v760, %v526
    %v769 = vadd.f32 %v761, %v526
    %v770 = vadd.f32 %v762, %v526
    %v771 = vadd.f32 %v763, %v526
    %v772 = vadd.f32 %v764, %v526
    %v773 = vadd.f32 %v765, %v526
    %v774 = vadd.f32 %v766, %v526
    %v775 = vadd.f32 %v767, %v526
    %v776 = vsel %vm112, %v768, -inf
    %v777 = vrot.slane %v776, 4
    %v778 = vmax.f32 %v776, %v777
    %v779 = vrot.slane %v778, 2
    %v780 = vmax.f32 %v778, %v779
    %v781 = vrot.slane %v780, 1
    %v782 = vmax.f32 %v780, %v781
    %v783 = vsel %vm112, %v769, -inf
    %v784 = vrot.slane %v783, 4
    %v785 = vmax.f32 %v783, %v784
    %v786 = vrot.slane %v785, 2
    %v787 = vmax.f32 %v785, %v786
    %v788 = vrot.slane %v787, 1
    %v789 = vmax.f32 %v787, %v788
    %v790 = vsel %vm112, %v770, -inf
    %v791 = vrot.slane %v790, 4
    %v792 = vmax.f32 %v790, %v791
    %v793 = vrot.slane %v792, 2
    %v794 = vmax.f32 %v792, %v793
    %v795 = vrot.slane %v794, 1
    %v796 = vmax.f32 %v794, %v795
    %v797 = vsel %vm112, %v771, -inf
    %v798 = vrot.slane %v797, 4
    %v799 = vmax.f32 %v797, %v798
    %v800 = vrot.slane %v799, 2
    %v801 = vmax.f32 %v799, %v800
    %v802 = vrot.slane %v801, 1
    %v803 = vmax.f32 %v801, %v802
    %v804 = vsel %vm112, %v772, -inf
    %v805 = vrot.slane %v804, 4
    %v806 = vmax.f32 %v804, %v805
    %v807 = vrot.slane %v806, 2
    %v808 = vmax.f32 %v806, %v807
    %v809 = vrot.slane %v808, 1
    %v810 = vmax.f32 %v808, %v809
    %v811 = vsel %vm112, %v773, -inf
    %v812 = vrot.slane %v811, 4
    %v813 = vmax.f32 %v811, %v812
    %v814 = vrot.slane %v813, 2
    %v815 = vmax.f32 %v813, %v814
    %v816 = vrot.slane %v815, 1
    %v817 = vmax.f32 %v815, %v816
    %v818 = vsel %vm112, %v774, -inf
    %v819 = vrot.slane %v818, 4
    %v820 = vmax.f32 %v818, %v819
    %v821 = vrot.slane %v820, 2
    %v822 = vmax.f32 %v820, %v821
    %v823 = vrot.slane %v822, 1
    %v824 = vmax.f32 %v822, %v823
    %v825 = vsel %vm112, %v775, -inf
    %v826 = vrot.slane %v825, 4
    %v827 = vmax.f32 %v825, %v826
    %v828 = vrot.slane %v827, 2
    %v829 = vmax.f32 %v827, %v828
    %v830 = vrot.slane %v829, 1
    %v831 = vmax.f32 %v829, %v830
    %v832 = vsub.f32 %v768, %v782
    %v833 = vsub.f32 %v769, %v789
    %v834 = vsub.f32 %v770, %v796
    %v835 = vsub.f32 %v771, %v803
    %v836 = vsub.f32 %v772, %v810
    %v837 = vsub.f32 %v773, %v817
    %v838 = vsub.f32 %v774, %v824
    %v839 = vsub.f32 %v775, %v831
    %v840 = vmul.f32 %v832, 1.442695
    %v841 = vpow.pop %v840
    %v842 = vmul.f32 %v833, 1.442695
    %v843 = vpow.pop %v842
    %v844 = vmul.f32 %v834, 1.442695
    %v845 = vpow.pop %v844
    %v846 = vmul.f32 %v835, 1.442695
    %v847 = vpow.pop %v846
    %v848 = vmul.f32 %v836, 1.442695
    %v849 = vpow.pop %v848
    %v850 = vmul.f32 %v837, 1.442695
    %v851 = vpow.pop %v850
    %v852 = vmul.f32 %v838, 1.442695
    %v853 = vpow.pop %v852
    %v854 = vmul.f32 %v839, 1.442695
    %v855 = vpow.pop %v854
    %v856 = vsel %vm112, %v841, 0.0
    %v857 = vrot.slane %v856, 4
    %v858 = vadd.f32 %v856, %v857
    %v859 = vrot.slane %v858, 2
    %v860 = vadd.f32 %v858, %v859
    %v861 = vrot.slane %v860, 1
    %v862 = vadd.f32 %v860, %v861
    %v863 = vsel %vm112, %v843, 0.0
    %v864 = vrot.slane %v863, 4
    %v865 = vadd.f32 %v863, %v864
    %v866 = vrot.slane %v865, 2
    %v867 = vadd.f32 %v865, %v866
    %v868 = vrot.slane %v867, 1
    %v869 = vadd.f32 %v867, %v868
    %v870 = vsel %vm112, %v845, 0.0
    %v871 = vrot.slane %v870, 4
    %v872 = vadd.f32 %v870, %v871
    %v873 = vrot.slane %v872, 2
    %v874 = vadd.f32 %v872, %v873
    %v875 = vrot.slane %v874, 1
    %v876 = vadd.f32 %v874, %v875
    %v877 = vsel %vm112, %v847, 0.0
    %v878 = vrot.slane %v877, 4
    %v879 = vadd.f32 %v877, %v878
    %v880 = vrot.slane %v879, 2
    %v881 = vadd.f32 %v879, %v880
    %v882 = vrot.slane %v881, 1
    %v883 = vadd.f32 %v881, %v882
    %v884 = vsel %vm112, %v849, 0.0
    %v885 = vrot.slane %v884, 4
    %v886 = vadd.f32 %v884, %v885
    %v887 = vrot.slane %v886, 2
    %v888 = vadd.f32 %v886, %v887
    %v889 = vrot.slane %v888, 1
    %v890 = vadd.f32 %v888, %v889
    %v891 = vsel %vm112, %v851, 0.0
    %v892 = vrot.slane %v891, 4
    %v893 = vadd.f32 %v891, %v892
    %v894 = vrot.slane %v893, 2
    %v895 = vadd.f32 %v893, %v894
    %v896 = vrot.slane %v895, 1
    %v897 = vadd.f32 %v895, %v896
    %v898 = vsel %vm112, %v853, 0.0
    %v899 = vrot.slane %v898, 4
    %v900 = vadd.f32 %v898, %v899
    %v901 = vrot.slane %v900, 2
    %v902 = vadd.f32 %v900, %v901
    %v903 = vrot.slane %v902, 1
    %v904 = vadd.f32 %v902, %v903
    %v905 = vsel %vm112, %v855, 0.0
    %v906 = vrot.slane %v905, 4
    %v907 = vadd.f32 %v905, %v906
    %v908 = vrot.slane %v907, 2
    %v909 = vadd.f32 %v907, %v908
    %v910 = vrot.slane %v909, 1
    %v911 = vadd.f32 %v909, %v910
    %v912 = vlog2.pop %v862
    %v913 = vmul.f32 %v912, 0.6931472
    %v914 = vlog2.pop %v869
    %v915 = vmul.f32 %v914, 0.6931472
    %v916 = vlog2.pop %v876
    %v917 = vmul.f32 %v916, 0.6931472
    %v918 = vlog2.pop %v883
    %v919 = vmul.f32 %v918, 0.6931472
    %v920 = vlog2.pop %v890
    %v921 = vmul.f32 %v920, 0.6931472
    %v922 = vlog2.pop %v897
    %v923 = vmul.f32 %v922, 0.6931472
    %v924 = vlog2.pop %v904
    %v925 = vmul.f32 %v924, 0.6931472
    %v926 = vlog2.pop %v911
    %v927 = vmul.f32 %v926, 0.6931472
    %v928 = vadd.f32 %v782, %v913
    %v929 = vadd.f32 %v789, %v915
    %v930 = vadd.f32 %v796, %v917
    %v931 = vadd.f32 %v803, %v919
    %v932 = vadd.f32 %v810, %v921
    %v933 = vadd.f32 %v817, %v923
    %v934 = vadd.f32 %v824, %v925
    %v935 = vadd.f32 %v831, %v927
    %v936 = vsel %vm669, 1, 0
    %v937 = vlaneseq
    %v938 = vshrl.u32 %v937, 7
    %v939 = vsub.s32 0, %v938
    %v940 = vrot.slane %v936, %v939
    %vm941 = vcmp.eq.s32.totalorder %v940, 1
    %v950 = vsel %vm511, %v929, %v928
    %v951 = vsel %vm513, %v930, %v950
    %v952 = vsel %vm515, %v931, %v951
    %v953 = vsel %vm517, %v932, %v952
    %v954 = vsel %vm519, %v933, %v953
    %v955 = vsel %vm521, %v934, %v954
    %v956 = vsel %vm523, %v935, %v955
    %v958 = vsel %vm941, %v956, %v526
    %v959 = vadd.f32 %v760, %v648
    %v960 = vadd.f32 %v761, %v648
    %v961 = vadd.f32 %v762, %v648
    %v962 = vadd.f32 %v763, %v648
    %v963 = vadd.f32 %v764, %v648
    %v964 = vadd.f32 %v765, %v648
    %v965 = vadd.f32 %v766, %v648
    %v966 = vadd.f32 %v767, %v648
    %v967 = vsel %vm112, %v959, -inf
    %v968 = vrot.slane %v967, 4
    %v969 = vmax.f32 %v967, %v968
    %v970 = vrot.slane %v969, 2
    %v971 = vmax.f32 %v969, %v970
    %v972 = vrot.slane %v971, 1
    %v973 = vmax.f32 %v971, %v972
    %v974 = vsel %vm112, %v960, -inf
    %v975 = vrot.slane %v974, 4
    %v976 = vmax.f32 %v974, %v975
    %v977 = vrot.slane %v976, 2
    %v978 = vmax.f32 %v976, %v977
    %v979 = vrot.slane %v978, 1
    %v980 = vmax.f32 %v978, %v979
    %v981 = vsel %vm112, %v961, -inf
    %v982 = vrot.slane %v981, 4
    %v983 = vmax.f32 %v981, %v982
    %v984 = vrot.slane %v983, 2
    %v985 = vmax.f32 %v983, %v984
    %v986 = vrot.slane %v985, 1
    %v987 = vmax.f32 %v985, %v986
    %v988 = vsel %vm112, %v962, -inf
    %v989 = vrot.slane %v988, 4
    %v990 = vmax.f32 %v988, %v989
    %v991 = vrot.slane %v990, 2
    %v992 = vmax.f32 %v990, %v991
    %v993 = vrot.slane %v992, 1
    %v994 = vmax.f32 %v992, %v993
    %v995 = vsel %vm112, %v963, -inf
    %v996 = vrot.slane %v995, 4
    %v997 = vmax.f32 %v995, %v996
    %v998 = vrot.slane %v997, 2
    %v999 = vmax.f32 %v997, %v998
    %v1000 = vrot.slane %v999, 1
    %v1001 = vmax.f32 %v999, %v1000
    %v1002 = vsel %vm112, %v964, -inf
    %v1003 = vrot.slane %v1002, 4
    %v1004 = vmax.f32 %v1002, %v1003
    %v1005 = vrot.slane %v1004, 2
    %v1006 = vmax.f32 %v1004, %v1005
    %v1007 = vrot.slane %v1006, 1
    %v1008 = vmax.f32 %v1006, %v1007
    %v1009 = vsel %vm112, %v965, -inf
    %v1010 = vrot.slane %v1009, 4
    %v1011 = vmax.f32 %v1009, %v1010
    %v1012 = vrot.slane %v1011, 2
    %v1013 = vmax.f32 %v1011, %v1012
    %v1014 = vrot.slane %v1013, 1
    %v1015 = vmax.f32 %v1013, %v1014
    %v1016 = vsel %vm112, %v966, -inf
    %v1017 = vrot.slane %v1016, 4
    %v1018 = vmax.f32 %v1016, %v1017
    %v1019 = vrot.slane %v1018, 2
    %v1020 = vmax.f32 %v1018, %v1019
    %v1021 = vrot.slane %v1020, 1
    %v1022 = vmax.f32 %v1020, %v1021
    %vm1023 = vcmp.eq.f32.partialorder %v959, %v973
    %vm1024 = vcmp.eq.f32.partialorder %v960, %v980
    %vm1025 = vcmp.eq.f32.partialorder %v961, %v987
    %vm1026 = vcmp.eq.f32.partialorder %v962, %v994
    %vm1027 = vcmp.eq.f32.partialorder %v963, %v1001
    %vm1028 = vcmp.eq.f32.partialorder %v964, %v1008
    %vm1029 = vcmp.eq.f32.partialorder %v965, %v1015
    %vm1030 = vcmp.eq.f32.partialorder %v966, %v1022
    %v1031 = vsel %vm1023, %v44, 8
    %v1032 = vsel %vm1024, %v44, 8
    %v1033 = vsel %vm1025, %v44, 8
    %v1034 = vsel %vm1026, %v44, 8
    %v1035 = vsel %vm1027, %v44, 8
    %v1036 = vsel %vm1028, %v44, 8
    %v1037 = vsel %vm1029, %v44, 8
    %v1038 = vsel %vm1030, %v44, 8
    %v1039 = vsel %vm112, %v1031, 2147483647
    %v1040 = vrot.slane %v1039, 4
    %vm1041 = vcmp.lt.s32.totalorder %v1039, %v1040
    %v1042 = vsel %vm1041, %v1039, %v1040
    %v1043 = vrot.slane %v1042, 2
    %vm1044 = vcmp.lt.s32.totalorder %v1042, %v1043
    %v1045 = vsel %vm1044, %v1042, %v1043
    %v1046 = vrot.slane %v1045, 1
    %vm1047 = vcmp.lt.s32.totalorder %v1045, %v1046
    %v1048 = vsel %vm1047, %v1045, %v1046
    %v1049 = vsel %vm112, %v1032, 2147483647
    %v1050 = vrot.slane %v1049, 4
    %vm1051 = vcmp.lt.s32.totalorder %v1049, %v1050
    %v1052 = vsel %vm1051, %v1049, %v1050
    %v1053 = vrot.slane %v1052, 2
    %vm1054 = vcmp.lt.s32.totalorder %v1052, %v1053
    %v1055 = vsel %vm1054, %v1052, %v1053
    %v1056 = vrot.slane %v1055, 1
    %vm1057 = vcmp.lt.s32.totalorder %v1055, %v1056
    %v1058 = vsel %vm1057, %v1055, %v1056
    %v1059 = vsel %vm112, %v1033, 2147483647
    %v1060 = vrot.slane %v1059, 4
    %vm1061 = vcmp.lt.s32.totalorder %v1059, %v1060
    %v1062 = vsel %vm1061, %v1059, %v1060
    %v1063 = vrot.slane %v1062, 2
    %vm1064 = vcmp.lt.s32.totalorder %v1062, %v1063
    %v1065 = vsel %vm1064, %v1062, %v1063
    %v1066 = vrot.slane %v1065, 1
    %vm1067 = vcmp.lt.s32.totalorder %v1065, %v1066
    %v1068 = vsel %vm1067, %v1065, %v1066
    %v1069 = vsel %vm112, %v1034, 2147483647
    %v1070 = vrot.slane %v1069, 4
    %vm1071 = vcmp.lt.s32.totalorder %v1069, %v1070
    %v1072 = vsel %vm1071, %v1069, %v1070
    %v1073 = vrot.slane %v1072, 2
    %vm1074 = vcmp.lt.s32.totalorder %v1072, %v1073
    %v1075 = vsel %vm1074, %v1072, %v1073
    %v1076 = vrot.slane %v1075, 1
    %vm1077 = vcmp.lt.s32.totalorder %v1075, %v1076
    %v1078 = vsel %vm1077, %v1075, %v1076
    %v1079 = vsel %vm112, %v1035, 2147483647
    %v1080 = vrot.slane %v1079, 4
    %vm1081 = vcmp.lt.s32.totalorder %v1079, %v1080
    %v1082 = vsel %vm1081, %v1079, %v1080
    %v1083 = vrot.slane %v1082, 2
    %vm1084 = vcmp.lt.s32.totalorder %v1082, %v1083
    %v1085 = vsel %vm1084, %v1082, %v1083
    %v1086 = vrot.slane %v1085, 1
    %vm1087 = vcmp.lt.s32.totalorder %v1085, %v1086
    %v1088 = vsel %vm1087, %v1085, %v1086
    %v1089 = vsel %vm112, %v1036, 2147483647
    %v1090 = vrot.slane %v1089, 4
    %vm1091 = vcmp.lt.s32.totalorder %v1089, %v1090
    %v1092 = vsel %vm1091, %v1089, %v1090
    %v1093 = vrot.slane %v1092, 2
    %vm1094 = vcmp.lt.s32.totalorder %v1092, %v1093
    %v1095 = vsel %vm1094, %v1092, %v1093
    %v1096 = vrot.slane %v1095, 1
    %vm1097 = vcmp.lt.s32.totalorder %v1095, %v1096
    %v1098 = vsel %vm1097, %v1095, %v1096
    %v1099 = vsel %vm112, %v1037, 2147483647
    %v1100 = vrot.slane %v1099, 4
    %vm1101 = vcmp.lt.s32.totalorder %v1099, %v1100
    %v1102 = vsel %vm1101, %v1099, %v1100
    %v1103 = vrot.slane %v1102, 2
    %vm1104 = vcmp.lt.s32.totalorder %v1102, %v1103
    %v1105 = vsel %vm1104, %v1102, %v1103
    %v1106 = vrot.slane %v1105, 1
    %vm1107 = vcmp.lt.s32.totalorder %v1105, %v1106
    %v1108 = vsel %vm1107, %v1105, %v1106
    %v1109 = vsel %vm112, %v1038, 2147483647
    %v1110 = vrot.slane %v1109, 4
    %vm1111 = vcmp.lt.s32.totalorder %v1109, %v1110
    %v1112 = vsel %vm1111, %v1109, %v1110
    %v1113 = vrot.slane %v1112, 2
    %vm1114 = vcmp.lt.s32.totalorder %v1112, %v1113
    %v1115 = vsel %vm1114, %v1112, %v1113
    %v1116 = vrot.slane %v1115, 1
    %vm1117 = vcmp.lt.s32.totalorder %v1115, %v1116
    %v1118 = vsel %vm1117, %v1115, %v1116
    %v1119 = vsel %vm511, %v1058, %v1048
    %v1120 = vsel %vm513, %v1068, %v1119
    %v1121 = vsel %vm515, %v1078, %v1120
    %v1122 = vsel %vm517, %v1088, %v1121
    %v1123 = vsel %vm519, %v1098, %v1122
    %v1124 = vsel %vm521, %v1108, %v1123
    %v1125 = vsel %vm523, %v1118, %v1124
    %s1126 = scalar_lea.vmem [#allocation3], 16
    %1127 = vst.msk [vmem:[%s1126] sm:$0xff] %vm112, %v1125
    %v1136 = vsel %vm511, %v980, %v973
    %v1137 = vsel %vm513, %v987, %v1136
    %v1138 = vsel %vm515, %v994, %v1137
    %v1139 = vsel %vm517, %v1001, %v1138
    %v1140 = vsel %vm519, %v1008, %v1139
    %v1141 = vsel %vm521, %v1015, %v1140
    %v1142 = vsel %vm523, %v1022, %v1141
    %v1144 = vsel %vm941, %v1142, %v648
    %s1145 = scalar_lea.vmem %s6, 2
    %v1146 = vld [vmem:[%s1145] sm:$0x1]
    %v1147 = vlaneseq
    %v1148 = vshrl.u32 %v1147, 7
    %v1149 = vsub.s32 0, %v1148
    %v1150 = vrot.slane %v1146, %v1149
    %vm1151 = vcmp.eq.s32.totalorder %v44, %v1150
    %v1152 = vsel %vm1151, %v666, 0.0
    %v1153 = vsel %vm112, %v1152, 0.0
    %v1154 = vrot.slane %v1153, 4
    %v1155 = vadd.f32 %v1153, %v1154
    %v1156 = vrot.slane %v1155, 2
    %v1157 = vadd.f32 %v1155, %v1156
    %v1158 = vrot.slane %v1157, 1
    %v1159 = vadd.f32 %v1157, %v1158
    %v1160 = vmul.f32 %v668, %v1159
    %v1161 = vadd.f32 %v665, %v1160
    %v1162 = vld [vmem:[%s128] sm:$0xff]
    %s1163 = scalar_lea.vmem %s7, 3
    %v1164 = vld [vmem:[%s1163] sm:$0x1]
    %vm1165 = vcmp.gt.f32.partialorder %v1164, 0.5
    %v1167 = vcombine.high %v1162, %v1162
    %v1169 = vunpack.c.l.s4 1966171168
    %v1170 = vunpack.c.0.s8 %v1169
    %v1171 = vlaneseq
    %v1172 = vshrl.u32 %v1171, 7
    %v1173 = vsub.s32 %v1170, %v1172
    %v1174 = vrot.slane %v1162, %v1173
    %v1176 = vunpack.c.l.s4 1966171168
    %v1177 = vunpack.c.0.s8 %v1176
    %v1178 = vlaneseq
    %v1179 = vshrl.u32 %v1178, 7
    %v1180 = vsub.s32 %v1177, %v1179
    %v1181 = vrot.slane %v1167, %v1180
    %v1182 = vcombine.high %v1174, %v1174
    %v1183 = vcombine.high %v1181, %v1181
    %v1185 = vunpack.c.l.s4 1966171168
    %v1186 = vunpack.c.0.s8 %v1185
    %v1187 = vlaneseq
    %v1188 = vshrl.u32 %v1187, 7
    %v1189 = vsub.s32 %v1186, %v1188
    %v1190 = vrot.slane %v1174, %v1189
    %v1192 = vunpack.c.l.s4 1966171168
    %v1193 = vunpack.c.0.s8 %v1192
    %v1194 = vlaneseq
    %v1195 = vshrl.u32 %v1194, 7
    %v1196 = vsub.s32 %v1193, %v1195
    %v1197 = vrot.slane %v1181, %v1196
    %v1199 = vunpack.c.l.s4 1966171168
    %v1200 = vunpack.c.0.s8 %v1199
    %v1201 = vlaneseq
    %v1202 = vshrl.u32 %v1201, 7
    %v1203 = vsub.s32 %v1200, %v1202
    %v1204 = vrot.slane %v1182, %v1203
    %v1206 = vunpack.c.l.s4 1966171168
    %v1207 = vunpack.c.0.s8 %v1206
    %v1208 = vlaneseq
    %v1209 = vshrl.u32 %v1208, 7
    %v1210 = vsub.s32 %v1207, %v1209
    %v1211 = vrot.slane %v1183, %v1210
    %v1212 = vcombine.high %v1190, %v1190
    %v1213 = vcombine.high %v1197, %v1197
    %v1214 = vcombine.high %v1204, %v1204
    %v1215 = vcombine.high %v1211, %v1211
    %v1216 = vlaneseq
    %v1217 = vshrl.u32 %v1216, 7
    %v1218 = vsub.s32 0, %v1217
    %v1219 = vrot.slane %v1190, %v1218
    %v1220 = vlaneseq
    %v1221 = vshrl.u32 %v1220, 7
    %v1222 = vsub.s32 0, %v1221
    %v1223 = vrot.slane %v1204, %v1222
    %v1224 = vlaneseq
    %v1225 = vshrl.u32 %v1224, 7
    %v1226 = vsub.s32 0, %v1225
    %v1227 = vrot.slane %v1212, %v1226
    %v1228 = vlaneseq
    %v1229 = vshrl.u32 %v1228, 7
    %v1230 = vsub.s32 0, %v1229
    %v1231 = vrot.slane %v1214, %v1230
    %v1232 = vlaneseq
    %v1233 = vshrl.u32 %v1232, 7
    %v1234 = vsub.s32 0, %v1233
    %v1235 = vrot.slane %v1197, %v1234
    %v1236 = vlaneseq
    %v1237 = vshrl.u32 %v1236, 7
    %v1238 = vsub.s32 0, %v1237
    %v1239 = vrot.slane %v1211, %v1238
    %v1240 = vlaneseq
    %v1241 = vshrl.u32 %v1240, 7
    %v1242 = vsub.s32 0, %v1241
    %v1243 = vrot.slane %v1213, %v1242
    %v1244 = vlaneseq
    %v1245 = vshrl.u32 %v1244, 7
    %v1246 = vsub.s32 0, %v1245
    %v1247 = vrot.slane %v1215, %v1246
    %v1256 = vadd.f32 %v1219, %v231
    %v1257 = vadd.f32 %v1223, %v238
    %v1258 = vadd.f32 %v1227, %v245
    %v1259 = vadd.f32 %v1231, %v252
    %v1260 = vadd.f32 %v1235, %v259
    %v1261 = vadd.f32 %v1239, %v266
    %v1262 = vadd.f32 %v1243, %v273
    %v1263 = vadd.f32 %v1247, %v280
    %v1264 = vadd.f32 %v1256, %v958
    %v1265 = vadd.f32 %v1257, %v958
    %v1266 = vadd.f32 %v1258, %v958
    %v1267 = vadd.f32 %v1259, %v958
    %v1268 = vadd.f32 %v1260, %v958
    %v1269 = vadd.f32 %v1261, %v958
    %v1270 = vadd.f32 %v1262, %v958
    %v1271 = vadd.f32 %v1263, %v958
    %v1272 = vsel %vm112, %v1264, -inf
    %v1273 = vrot.slane %v1272, 4
    %v1274 = vmax.f32 %v1272, %v1273
    %v1275 = vrot.slane %v1274, 2
    %v1276 = vmax.f32 %v1274, %v1275
    %v1277 = vrot.slane %v1276, 1
    %v1278 = vmax.f32 %v1276, %v1277
    %v1279 = vsel %vm112, %v1265, -inf
    %v1280 = vrot.slane %v1279, 4
    %v1281 = vmax.f32 %v1279, %v1280
    %v1282 = vrot.slane %v1281, 2
    %v1283 = vmax.f32 %v1281, %v1282
    %v1284 = vrot.slane %v1283, 1
    %v1285 = vmax.f32 %v1283, %v1284
    %v1286 = vsel %vm112, %v1266, -inf
    %v1287 = vrot.slane %v1286, 4
    %v1288 = vmax.f32 %v1286, %v1287
    %v1289 = vrot.slane %v1288, 2
    %v1290 = vmax.f32 %v1288, %v1289
    %v1291 = vrot.slane %v1290, 1
    %v1292 = vmax.f32 %v1290, %v1291
    %v1293 = vsel %vm112, %v1267, -inf
    %v1294 = vrot.slane %v1293, 4
    %v1295 = vmax.f32 %v1293, %v1294
    %v1296 = vrot.slane %v1295, 2
    %v1297 = vmax.f32 %v1295, %v1296
    %v1298 = vrot.slane %v1297, 1
    %v1299 = vmax.f32 %v1297, %v1298
    %v1300 = vsel %vm112, %v1268, -inf
    %v1301 = vrot.slane %v1300, 4
    %v1302 = vmax.f32 %v1300, %v1301
    %v1303 = vrot.slane %v1302, 2
    %v1304 = vmax.f32 %v1302, %v1303
    %v1305 = vrot.slane %v1304, 1
    %v1306 = vmax.f32 %v1304, %v1305
    %v1307 = vsel %vm112, %v1269, -inf
    %v1308 = vrot.slane %v1307, 4
    %v1309 = vmax.f32 %v1307, %v1308
    %v1310 = vrot.slane %v1309, 2
    %v1311 = vmax.f32 %v1309, %v1310
    %v1312 = vrot.slane %v1311, 1
    %v1313 = vmax.f32 %v1311, %v1312
    %v1314 = vsel %vm112, %v1270, -inf
    %v1315 = vrot.slane %v1314, 4
    %v1316 = vmax.f32 %v1314, %v1315
    %v1317 = vrot.slane %v1316, 2
    %v1318 = vmax.f32 %v1316, %v1317
    %v1319 = vrot.slane %v1318, 1
    %v1320 = vmax.f32 %v1318, %v1319
    %v1321 = vsel %vm112, %v1271, -inf
    %v1322 = vrot.slane %v1321, 4
    %v1323 = vmax.f32 %v1321, %v1322
    %v1324 = vrot.slane %v1323, 2
    %v1325 = vmax.f32 %v1323, %v1324
    %v1326 = vrot.slane %v1325, 1
    %v1327 = vmax.f32 %v1325, %v1326
    %v1328 = vsub.f32 %v1264, %v1278
    %v1329 = vsub.f32 %v1265, %v1285
    %v1330 = vsub.f32 %v1266, %v1292
    %v1331 = vsub.f32 %v1267, %v1299
    %v1332 = vsub.f32 %v1268, %v1306
    %v1333 = vsub.f32 %v1269, %v1313
    %v1334 = vsub.f32 %v1270, %v1320
    %v1335 = vsub.f32 %v1271, %v1327
    %v1336 = vmul.f32 %v1328, 1.442695
    %v1337 = vpow.pop %v1336
    %v1338 = vmul.f32 %v1329, 1.442695
    %v1339 = vpow.pop %v1338
    %v1340 = vmul.f32 %v1330, 1.442695
    %v1341 = vpow.pop %v1340
    %v1342 = vmul.f32 %v1331, 1.442695
    %v1343 = vpow.pop %v1342
    %v1344 = vmul.f32 %v1332, 1.442695
    %v1345 = vpow.pop %v1344
    %v1346 = vmul.f32 %v1333, 1.442695
    %v1347 = vpow.pop %v1346
    %v1348 = vmul.f32 %v1334, 1.442695
    %v1349 = vpow.pop %v1348
    %v1350 = vmul.f32 %v1335, 1.442695
    %v1351 = vpow.pop %v1350
    %v1352 = vsel %vm112, %v1337, 0.0
    %v1353 = vrot.slane %v1352, 4
    %v1354 = vadd.f32 %v1352, %v1353
    %v1355 = vrot.slane %v1354, 2
    %v1356 = vadd.f32 %v1354, %v1355
    %v1357 = vrot.slane %v1356, 1
    %v1358 = vadd.f32 %v1356, %v1357
    %v1359 = vsel %vm112, %v1339, 0.0
    %v1360 = vrot.slane %v1359, 4
    %v1361 = vadd.f32 %v1359, %v1360
    %v1362 = vrot.slane %v1361, 2
    %v1363 = vadd.f32 %v1361, %v1362
    %v1364 = vrot.slane %v1363, 1
    %v1365 = vadd.f32 %v1363, %v1364
    %v1366 = vsel %vm112, %v1341, 0.0
    %v1367 = vrot.slane %v1366, 4
    %v1368 = vadd.f32 %v1366, %v1367
    %v1369 = vrot.slane %v1368, 2
    %v1370 = vadd.f32 %v1368, %v1369
    %v1371 = vrot.slane %v1370, 1
    %v1372 = vadd.f32 %v1370, %v1371
    %v1373 = vsel %vm112, %v1343, 0.0
    %v1374 = vrot.slane %v1373, 4
    %v1375 = vadd.f32 %v1373, %v1374
    %v1376 = vrot.slane %v1375, 2
    %v1377 = vadd.f32 %v1375, %v1376
    %v1378 = vrot.slane %v1377, 1
    %v1379 = vadd.f32 %v1377, %v1378
    %v1380 = vsel %vm112, %v1345, 0.0
    %v1381 = vrot.slane %v1380, 4
    %v1382 = vadd.f32 %v1380, %v1381
    %v1383 = vrot.slane %v1382, 2
    %v1384 = vadd.f32 %v1382, %v1383
    %v1385 = vrot.slane %v1384, 1
    %v1386 = vadd.f32 %v1384, %v1385
    %v1387 = vsel %vm112, %v1347, 0.0
    %v1388 = vrot.slane %v1387, 4
    %v1389 = vadd.f32 %v1387, %v1388
    %v1390 = vrot.slane %v1389, 2
    %v1391 = vadd.f32 %v1389, %v1390
    %v1392 = vrot.slane %v1391, 1
    %v1393 = vadd.f32 %v1391, %v1392
    %v1394 = vsel %vm112, %v1349, 0.0
    %v1395 = vrot.slane %v1394, 4
    %v1396 = vadd.f32 %v1394, %v1395
    %v1397 = vrot.slane %v1396, 2
    %v1398 = vadd.f32 %v1396, %v1397
    %v1399 = vrot.slane %v1398, 1
    %v1400 = vadd.f32 %v1398, %v1399
    %v1401 = vsel %vm112, %v1351, 0.0
    %v1402 = vrot.slane %v1401, 4
    %v1403 = vadd.f32 %v1401, %v1402
    %v1404 = vrot.slane %v1403, 2
    %v1405 = vadd.f32 %v1403, %v1404
    %v1406 = vrot.slane %v1405, 1
    %v1407 = vadd.f32 %v1405, %v1406
    %v1408 = vlog2.pop %v1358
    %v1409 = vmul.f32 %v1408, 0.6931472
    %v1410 = vlog2.pop %v1365
    %v1411 = vmul.f32 %v1410, 0.6931472
    %v1412 = vlog2.pop %v1372
    %v1413 = vmul.f32 %v1412, 0.6931472
    %v1414 = vlog2.pop %v1379
    %v1415 = vmul.f32 %v1414, 0.6931472
    %v1416 = vlog2.pop %v1386
    %v1417 = vmul.f32 %v1416, 0.6931472
    %v1418 = vlog2.pop %v1393
    %v1419 = vmul.f32 %v1418, 0.6931472
    %v1420 = vlog2.pop %v1400
    %v1421 = vmul.f32 %v1420, 0.6931472
    %v1422 = vlog2.pop %v1407
    %v1423 = vmul.f32 %v1422, 0.6931472
    %v1424 = vadd.f32 %v1278, %v1409
    %v1425 = vadd.f32 %v1285, %v1411
    %v1426 = vadd.f32 %v1292, %v1413
    %v1427 = vadd.f32 %v1299, %v1415
    %v1428 = vadd.f32 %v1306, %v1417
    %v1429 = vadd.f32 %v1313, %v1419
    %v1430 = vadd.f32 %v1320, %v1421
    %v1431 = vadd.f32 %v1327, %v1423
    %v1432 = vsel %vm1165, 1, 0
    %v1433 = vlaneseq
    %v1434 = vshrl.u32 %v1433, 7
    %v1435 = vsub.s32 0, %v1434
    %v1436 = vrot.slane %v1432, %v1435
    %vm1437 = vcmp.eq.s32.totalorder %v1436, 1
    %v1446 = vsel %vm511, %v1425, %v1424
    %v1447 = vsel %vm513, %v1426, %v1446
    %v1448 = vsel %vm515, %v1427, %v1447
    %v1449 = vsel %vm517, %v1428, %v1448
    %v1450 = vsel %vm519, %v1429, %v1449
    %v1451 = vsel %vm521, %v1430, %v1450
    %v1452 = vsel %vm523, %v1431, %v1451
    %v1454 = vsel %vm1437, %v1452, %v958
    %v1455 = vadd.f32 %v1256, %v1144
    %v1456 = vadd.f32 %v1257, %v1144
    %v1457 = vadd.f32 %v1258, %v1144
    %v1458 = vadd.f32 %v1259, %v1144
    %v1459 = vadd.f32 %v1260, %v1144
    %v1460 = vadd.f32 %v1261, %v1144
    %v1461 = vadd.f32 %v1262, %v1144
    %v1462 = vadd.f32 %v1263, %v1144
    %v1463 = vsel %vm112, %v1455, -inf
    %v1464 = vrot.slane %v1463, 4
    %v1465 = vmax.f32 %v1463, %v1464
    %v1466 = vrot.slane %v1465, 2
    %v1467 = vmax.f32 %v1465, %v1466
    %v1468 = vrot.slane %v1467, 1
    %v1469 = vmax.f32 %v1467, %v1468
    %v1470 = vsel %vm112, %v1456, -inf
    %v1471 = vrot.slane %v1470, 4
    %v1472 = vmax.f32 %v1470, %v1471
    %v1473 = vrot.slane %v1472, 2
    %v1474 = vmax.f32 %v1472, %v1473
    %v1475 = vrot.slane %v1474, 1
    %v1476 = vmax.f32 %v1474, %v1475
    %v1477 = vsel %vm112, %v1457, -inf
    %v1478 = vrot.slane %v1477, 4
    %v1479 = vmax.f32 %v1477, %v1478
    %v1480 = vrot.slane %v1479, 2
    %v1481 = vmax.f32 %v1479, %v1480
    %v1482 = vrot.slane %v1481, 1
    %v1483 = vmax.f32 %v1481, %v1482
    %v1484 = vsel %vm112, %v1458, -inf
    %v1485 = vrot.slane %v1484, 4
    %v1486 = vmax.f32 %v1484, %v1485
    %v1487 = vrot.slane %v1486, 2
    %v1488 = vmax.f32 %v1486, %v1487
    %v1489 = vrot.slane %v1488, 1
    %v1490 = vmax.f32 %v1488, %v1489
    %v1491 = vsel %vm112, %v1459, -inf
    %v1492 = vrot.slane %v1491, 4
    %v1493 = vmax.f32 %v1491, %v1492
    %v1494 = vrot.slane %v1493, 2
    %v1495 = vmax.f32 %v1493, %v1494
    %v1496 = vrot.slane %v1495, 1
    %v1497 = vmax.f32 %v1495, %v1496
    %v1498 = vsel %vm112, %v1460, -inf
    %v1499 = vrot.slane %v1498, 4
    %v1500 = vmax.f32 %v1498, %v1499
    %v1501 = vrot.slane %v1500, 2
    %v1502 = vmax.f32 %v1500, %v1501
    %v1503 = vrot.slane %v1502, 1
    %v1504 = vmax.f32 %v1502, %v1503
    %v1505 = vsel %vm112, %v1461, -inf
    %v1506 = vrot.slane %v1505, 4
    %v1507 = vmax.f32 %v1505, %v1506
    %v1508 = vrot.slane %v1507, 2
    %v1509 = vmax.f32 %v1507, %v1508
    %v1510 = vrot.slane %v1509, 1
    %v1511 = vmax.f32 %v1509, %v1510
    %v1512 = vsel %vm112, %v1462, -inf
    %v1513 = vrot.slane %v1512, 4
    %v1514 = vmax.f32 %v1512, %v1513
    %v1515 = vrot.slane %v1514, 2
    %v1516 = vmax.f32 %v1514, %v1515
    %v1517 = vrot.slane %v1516, 1
    %v1518 = vmax.f32 %v1516, %v1517
    %vm1519 = vcmp.eq.f32.partialorder %v1455, %v1469
    %vm1520 = vcmp.eq.f32.partialorder %v1456, %v1476
    %vm1521 = vcmp.eq.f32.partialorder %v1457, %v1483
    %vm1522 = vcmp.eq.f32.partialorder %v1458, %v1490
    %vm1523 = vcmp.eq.f32.partialorder %v1459, %v1497
    %vm1524 = vcmp.eq.f32.partialorder %v1460, %v1504
    %vm1525 = vcmp.eq.f32.partialorder %v1461, %v1511
    %vm1526 = vcmp.eq.f32.partialorder %v1462, %v1518
    %v1527 = vsel %vm1519, %v44, 8
    %v1528 = vsel %vm1520, %v44, 8
    %v1529 = vsel %vm1521, %v44, 8
    %v1530 = vsel %vm1522, %v44, 8
    %v1531 = vsel %vm1523, %v44, 8
    %v1532 = vsel %vm1524, %v44, 8
    %v1533 = vsel %vm1525, %v44, 8
    %v1534 = vsel %vm1526, %v44, 8
    %v1535 = vsel %vm112, %v1527, 2147483647
    %v1536 = vrot.slane %v1535, 4
    %vm1537 = vcmp.lt.s32.totalorder %v1535, %v1536
    %v1538 = vsel %vm1537, %v1535, %v1536
    %v1539 = vrot.slane %v1538, 2
    %vm1540 = vcmp.lt.s32.totalorder %v1538, %v1539
    %v1541 = vsel %vm1540, %v1538, %v1539
    %v1542 = vrot.slane %v1541, 1
    %vm1543 = vcmp.lt.s32.totalorder %v1541, %v1542
    %v1544 = vsel %vm1543, %v1541, %v1542
    %v1545 = vsel %vm112, %v1528, 2147483647
    %v1546 = vrot.slane %v1545, 4
    %vm1547 = vcmp.lt.s32.totalorder %v1545, %v1546
    %v1548 = vsel %vm1547, %v1545, %v1546
    %v1549 = vrot.slane %v1548, 2
    %vm1550 = vcmp.lt.s32.totalorder %v1548, %v1549
    %v1551 = vsel %vm1550, %v1548, %v1549
    %v1552 = vrot.slane %v1551, 1
    %vm1553 = vcmp.lt.s32.totalorder %v1551, %v1552
    %v1554 = vsel %vm1553, %v1551, %v1552
    %v1555 = vsel %vm112, %v1529, 2147483647
    %v1556 = vrot.slane %v1555, 4
    %vm1557 = vcmp.lt.s32.totalorder %v1555, %v1556
    %v1558 = vsel %vm1557, %v1555, %v1556
    %v1559 = vrot.slane %v1558, 2
    %vm1560 = vcmp.lt.s32.totalorder %v1558, %v1559
    %v1561 = vsel %vm1560, %v1558, %v1559
    %v1562 = vrot.slane %v1561, 1
    %vm1563 = vcmp.lt.s32.totalorder %v1561, %v1562
    %v1564 = vsel %vm1563, %v1561, %v1562
    %v1565 = vsel %vm112, %v1530, 2147483647
    %v1566 = vrot.slane %v1565, 4
    %vm1567 = vcmp.lt.s32.totalorder %v1565, %v1566
    %v1568 = vsel %vm1567, %v1565, %v1566
    %v1569 = vrot.slane %v1568, 2
    %vm1570 = vcmp.lt.s32.totalorder %v1568, %v1569
    %v1571 = vsel %vm1570, %v1568, %v1569
    %v1572 = vrot.slane %v1571, 1
    %vm1573 = vcmp.lt.s32.totalorder %v1571, %v1572
    %v1574 = vsel %vm1573, %v1571, %v1572
    %v1575 = vsel %vm112, %v1531, 2147483647
    %v1576 = vrot.slane %v1575, 4
    %vm1577 = vcmp.lt.s32.totalorder %v1575, %v1576
    %v1578 = vsel %vm1577, %v1575, %v1576
    %v1579 = vrot.slane %v1578, 2
    %vm1580 = vcmp.lt.s32.totalorder %v1578, %v1579
    %v1581 = vsel %vm1580, %v1578, %v1579
    %v1582 = vrot.slane %v1581, 1
    %vm1583 = vcmp.lt.s32.totalorder %v1581, %v1582
    %v1584 = vsel %vm1583, %v1581, %v1582
    %v1585 = vsel %vm112, %v1532, 2147483647
    %v1586 = vrot.slane %v1585, 4
    %vm1587 = vcmp.lt.s32.totalorder %v1585, %v1586
    %v1588 = vsel %vm1587, %v1585, %v1586
    %v1589 = vrot.slane %v1588, 2
    %vm1590 = vcmp.lt.s32.totalorder %v1588, %v1589
    %v1591 = vsel %vm1590, %v1588, %v1589
    %v1592 = vrot.slane %v1591, 1
    %vm1593 = vcmp.lt.s32.totalorder %v1591, %v1592
    %v1594 = vsel %vm1593, %v1591, %v1592
    %v1595 = vsel %vm112, %v1533, 2147483647
    %v1596 = vrot.slane %v1595, 4
    %vm1597 = vcmp.lt.s32.totalorder %v1595, %v1596
    %v1598 = vsel %vm1597, %v1595, %v1596
    %v1599 = vrot.slane %v1598, 2
    %vm1600 = vcmp.lt.s32.totalorder %v1598, %v1599
    %v1601 = vsel %vm1600, %v1598, %v1599
    %v1602 = vrot.slane %v1601, 1
    %vm1603 = vcmp.lt.s32.totalorder %v1601, %v1602
    %v1604 = vsel %vm1603, %v1601, %v1602
    %v1605 = vsel %vm112, %v1534, 2147483647
    %v1606 = vrot.slane %v1605, 4
    %vm1607 = vcmp.lt.s32.totalorder %v1605, %v1606
    %v1608 = vsel %vm1607, %v1605, %v1606
    %v1609 = vrot.slane %v1608, 2
    %vm1610 = vcmp.lt.s32.totalorder %v1608, %v1609
    %v1611 = vsel %vm1610, %v1608, %v1609
    %v1612 = vrot.slane %v1611, 1
    %vm1613 = vcmp.lt.s32.totalorder %v1611, %v1612
    %v1614 = vsel %vm1613, %v1611, %v1612
    %v1615 = vsel %vm511, %v1554, %v1544
    %v1616 = vsel %vm513, %v1564, %v1615
    %v1617 = vsel %vm515, %v1574, %v1616
    %v1618 = vsel %vm517, %v1584, %v1617
    %v1619 = vsel %vm519, %v1594, %v1618
    %v1620 = vsel %vm521, %v1604, %v1619
    %v1621 = vsel %vm523, %v1614, %v1620
    %s1622 = scalar_lea.vmem [#allocation3], 24
    %1623 = vst.msk [vmem:[%s1622] sm:$0xff] %vm112, %v1621
    %v1632 = vsel %vm511, %v1476, %v1469
    %v1633 = vsel %vm513, %v1483, %v1632
    %v1634 = vsel %vm515, %v1490, %v1633
    %v1635 = vsel %vm517, %v1497, %v1634
    %v1636 = vsel %vm519, %v1504, %v1635
    %v1637 = vsel %vm521, %v1511, %v1636
    %v1638 = vsel %vm523, %v1518, %v1637
    %v1640 = vsel %vm1437, %v1638, %v1144
    %s1641 = scalar_lea.vmem %s6, 3
    %v1642 = vld [vmem:[%s1641] sm:$0x1]
    %v1643 = vlaneseq
    %v1644 = vshrl.u32 %v1643, 7
    %v1645 = vsub.s32 0, %v1644
    %v1646 = vrot.slane %v1642, %v1645
    %vm1647 = vcmp.eq.s32.totalorder %v44, %v1646
    %v1648 = vsel %vm1647, %v1162, 0.0
    %v1649 = vsel %vm112, %v1648, 0.0
    %v1650 = vrot.slane %v1649, 4
    %v1651 = vadd.f32 %v1649, %v1650
    %v1652 = vrot.slane %v1651, 2
    %v1653 = vadd.f32 %v1651, %v1652
    %v1654 = vrot.slane %v1653, 1
    %v1655 = vadd.f32 %v1653, %v1654
    %v1656 = vmul.f32 %v1164, %v1655
    %v1657 = vadd.f32 %v1161, %v1656
    %v1658 = vld [vmem:[%s133] sm:$0xff]
    %s1659 = scalar_lea.vmem %s7, 4
    %v1660 = vld [vmem:[%s1659] sm:$0x1]
    %vm1661 = vcmp.gt.f32.partialorder %v1660, 0.5
    %v1663 = vcombine.high %v1658, %v1658
    %v1665 = vunpack.c.l.s4 1966171168
    %v1666 = vunpack.c.0.s8 %v1665
    %v1667 = vlaneseq
    %v1668 = vshrl.u32 %v1667, 7
    %v1669 = vsub.s32 %v1666, %v1668
    %v1670 = vrot.slane %v1658, %v1669
    %v1672 = vunpack.c.l.s4 1966171168
    %v1673 = vunpack.c.0.s8 %v1672
    %v1674 = vlaneseq
    %v1675 = vshrl.u32 %v1674, 7
    %v1676 = vsub.s32 %v1673, %v1675
    %v1677 = vrot.slane %v1663, %v1676
    %v1678 = vcombine.high %v1670, %v1670
    %v1679 = vcombine.high %v1677, %v1677
    %v1681 = vunpack.c.l.s4 1966171168
    %v1682 = vunpack.c.0.s8 %v1681
    %v1683 = vlaneseq
    %v1684 = vshrl.u32 %v1683, 7
    %v1685 = vsub.s32 %v1682, %v1684
    %v1686 = vrot.slane %v1670, %v1685
    %v1688 = vunpack.c.l.s4 1966171168
    %v1689 = vunpack.c.0.s8 %v1688
    %v1690 = vlaneseq
    %v1691 = vshrl.u32 %v1690, 7
    %v1692 = vsub.s32 %v1689, %v1691
    %v1693 = vrot.slane %v1677, %v1692
    %v1695 = vunpack.c.l.s4 1966171168
    %v1696 = vunpack.c.0.s8 %v1695
    %v1697 = vlaneseq
    %v1698 = vshrl.u32 %v1697, 7
    %v1699 = vsub.s32 %v1696, %v1698
    %v1700 = vrot.slane %v1678, %v1699
    %v1702 = vunpack.c.l.s4 1966171168
    %v1703 = vunpack.c.0.s8 %v1702
    %v1704 = vlaneseq
    %v1705 = vshrl.u32 %v1704, 7
    %v1706 = vsub.s32 %v1703, %v1705
    %v1707 = vrot.slane %v1679, %v1706
    %v1708 = vcombine.high %v1686, %v1686
    %v1709 = vcombine.high %v1693, %v1693
    %v1710 = vcombine.high %v1700, %v1700
    %v1711 = vcombine.high %v1707, %v1707
    %v1712 = vlaneseq
    %v1713 = vshrl.u32 %v1712, 7
    %v1714 = vsub.s32 0, %v1713
    %v1715 = vrot.slane %v1686, %v1714
    %v1716 = vlaneseq
    %v1717 = vshrl.u32 %v1716, 7
    %v1718 = vsub.s32 0, %v1717
    %v1719 = vrot.slane %v1700, %v1718
    %v1720 = vlaneseq
    %v1721 = vshrl.u32 %v1720, 7
    %v1722 = vsub.s32 0, %v1721
    %v1723 = vrot.slane %v1708, %v1722
    %v1724 = vlaneseq
    %v1725 = vshrl.u32 %v1724, 7
    %v1726 = vsub.s32 0, %v1725
    %v1727 = vrot.slane %v1710, %v1726
    %v1728 = vlaneseq
    %v1729 = vshrl.u32 %v1728, 7
    %v1730 = vsub.s32 0, %v1729
    %v1731 = vrot.slane %v1693, %v1730
    %v1732 = vlaneseq
    %v1733 = vshrl.u32 %v1732, 7
    %v1734 = vsub.s32 0, %v1733
    %v1735 = vrot.slane %v1707, %v1734
    %v1736 = vlaneseq
    %v1737 = vshrl.u32 %v1736, 7
    %v1738 = vsub.s32 0, %v1737
    %v1739 = vrot.slane %v1709, %v1738
    %v1740 = vlaneseq
    %v1741 = vshrl.u32 %v1740, 7
    %v1742 = vsub.s32 0, %v1741
    %v1743 = vrot.slane %v1711, %v1742
    %v1752 = vadd.f32 %v1715, %v231
    %v1753 = vadd.f32 %v1719, %v238
    %v1754 = vadd.f32 %v1723, %v245
    %v1755 = vadd.f32 %v1727, %v252
    %v1756 = vadd.f32 %v1731, %v259
    %v1757 = vadd.f32 %v1735, %v266
    %v1758 = vadd.f32 %v1739, %v273
    %v1759 = vadd.f32 %v1743, %v280
    %v1760 = vadd.f32 %v1752, %v1454
    %v1761 = vadd.f32 %v1753, %v1454
    %v1762 = vadd.f32 %v1754, %v1454
    %v1763 = vadd.f32 %v1755, %v1454
    %v1764 = vadd.f32 %v1756, %v1454
    %v1765 = vadd.f32 %v1757, %v1454
    %v1766 = vadd.f32 %v1758, %v1454
    %v1767 = vadd.f32 %v1759, %v1454
    %v1768 = vsel %vm112, %v1760, -inf
    %v1769 = vrot.slane %v1768, 4
    %v1770 = vmax.f32 %v1768, %v1769
    %v1771 = vrot.slane %v1770, 2
    %v1772 = vmax.f32 %v1770, %v1771
    %v1773 = vrot.slane %v1772, 1
    %v1774 = vmax.f32 %v1772, %v1773
    %v1775 = vsel %vm112, %v1761, -inf
    %v1776 = vrot.slane %v1775, 4
    %v1777 = vmax.f32 %v1775, %v1776
    %v1778 = vrot.slane %v1777, 2
    %v1779 = vmax.f32 %v1777, %v1778
    %v1780 = vrot.slane %v1779, 1
    %v1781 = vmax.f32 %v1779, %v1780
    %v1782 = vsel %vm112, %v1762, -inf
    %v1783 = vrot.slane %v1782, 4
    %v1784 = vmax.f32 %v1782, %v1783
    %v1785 = vrot.slane %v1784, 2
    %v1786 = vmax.f32 %v1784, %v1785
    %v1787 = vrot.slane %v1786, 1
    %v1788 = vmax.f32 %v1786, %v1787
    %v1789 = vsel %vm112, %v1763, -inf
    %v1790 = vrot.slane %v1789, 4
    %v1791 = vmax.f32 %v1789, %v1790
    %v1792 = vrot.slane %v1791, 2
    %v1793 = vmax.f32 %v1791, %v1792
    %v1794 = vrot.slane %v1793, 1
    %v1795 = vmax.f32 %v1793, %v1794
    %v1796 = vsel %vm112, %v1764, -inf
    %v1797 = vrot.slane %v1796, 4
    %v1798 = vmax.f32 %v1796, %v1797
    %v1799 = vrot.slane %v1798, 2
    %v1800 = vmax.f32 %v1798, %v1799
    %v1801 = vrot.slane %v1800, 1
    %v1802 = vmax.f32 %v1800, %v1801
    %v1803 = vsel %vm112, %v1765, -inf
    %v1804 = vrot.slane %v1803, 4
    %v1805 = vmax.f32 %v1803, %v1804
    %v1806 = vrot.slane %v1805, 2
    %v1807 = vmax.f32 %v1805, %v1806
    %v1808 = vrot.slane %v1807, 1
    %v1809 = vmax.f32 %v1807, %v1808
    %v1810 = vsel %vm112, %v1766, -inf
    %v1811 = vrot.slane %v1810, 4
    %v1812 = vmax.f32 %v1810, %v1811
    %v1813 = vrot.slane %v1812, 2
    %v1814 = vmax.f32 %v1812, %v1813
    %v1815 = vrot.slane %v1814, 1
    %v1816 = vmax.f32 %v1814, %v1815
    %v1817 = vsel %vm112, %v1767, -inf
    %v1818 = vrot.slane %v1817, 4
    %v1819 = vmax.f32 %v1817, %v1818
    %v1820 = vrot.slane %v1819, 2
    %v1821 = vmax.f32 %v1819, %v1820
    %v1822 = vrot.slane %v1821, 1
    %v1823 = vmax.f32 %v1821, %v1822
    %v1824 = vsub.f32 %v1760, %v1774
    %v1825 = vsub.f32 %v1761, %v1781
    %v1826 = vsub.f32 %v1762, %v1788
    %v1827 = vsub.f32 %v1763, %v1795
    %v1828 = vsub.f32 %v1764, %v1802
    %v1829 = vsub.f32 %v1765, %v1809
    %v1830 = vsub.f32 %v1766, %v1816
    %v1831 = vsub.f32 %v1767, %v1823
    %v1832 = vmul.f32 %v1824, 1.442695
    %v1833 = vpow.pop %v1832
    %v1834 = vmul.f32 %v1825, 1.442695
    %v1835 = vpow.pop %v1834
    %v1836 = vmul.f32 %v1826, 1.442695
    %v1837 = vpow.pop %v1836
    %v1838 = vmul.f32 %v1827, 1.442695
    %v1839 = vpow.pop %v1838
    %v1840 = vmul.f32 %v1828, 1.442695
    %v1841 = vpow.pop %v1840
    %v1842 = vmul.f32 %v1829, 1.442695
    %v1843 = vpow.pop %v1842
    %v1844 = vmul.f32 %v1830, 1.442695
    %v1845 = vpow.pop %v1844
    %v1846 = vmul.f32 %v1831, 1.442695
    %v1847 = vpow.pop %v1846
    %v1848 = vsel %vm112, %v1833, 0.0
    %v1849 = vrot.slane %v1848, 4
    %v1850 = vadd.f32 %v1848, %v1849
    %v1851 = vrot.slane %v1850, 2
    %v1852 = vadd.f32 %v1850, %v1851
    %v1853 = vrot.slane %v1852, 1
    %v1854 = vadd.f32 %v1852, %v1853
    %v1855 = vsel %vm112, %v1835, 0.0
    %v1856 = vrot.slane %v1855, 4
    %v1857 = vadd.f32 %v1855, %v1856
    %v1858 = vrot.slane %v1857, 2
    %v1859 = vadd.f32 %v1857, %v1858
    %v1860 = vrot.slane %v1859, 1
    %v1861 = vadd.f32 %v1859, %v1860
    %v1862 = vsel %vm112, %v1837, 0.0
    %v1863 = vrot.slane %v1862, 4
    %v1864 = vadd.f32 %v1862, %v1863
    %v1865 = vrot.slane %v1864, 2
    %v1866 = vadd.f32 %v1864, %v1865
    %v1867 = vrot.slane %v1866, 1
    %v1868 = vadd.f32 %v1866, %v1867
    %v1869 = vsel %vm112, %v1839, 0.0
    %v1870 = vrot.slane %v1869, 4
    %v1871 = vadd.f32 %v1869, %v1870
    %v1872 = vrot.slane %v1871, 2
    %v1873 = vadd.f32 %v1871, %v1872
    %v1874 = vrot.slane %v1873, 1
    %v1875 = vadd.f32 %v1873, %v1874
    %v1876 = vsel %vm112, %v1841, 0.0
    %v1877 = vrot.slane %v1876, 4
    %v1878 = vadd.f32 %v1876, %v1877
    %v1879 = vrot.slane %v1878, 2
    %v1880 = vadd.f32 %v1878, %v1879
    %v1881 = vrot.slane %v1880, 1
    %v1882 = vadd.f32 %v1880, %v1881
    %v1883 = vsel %vm112, %v1843, 0.0
    %v1884 = vrot.slane %v1883, 4
    %v1885 = vadd.f32 %v1883, %v1884
    %v1886 = vrot.slane %v1885, 2
    %v1887 = vadd.f32 %v1885, %v1886
    %v1888 = vrot.slane %v1887, 1
    %v1889 = vadd.f32 %v1887, %v1888
    %v1890 = vsel %vm112, %v1845, 0.0
    %v1891 = vrot.slane %v1890, 4
    %v1892 = vadd.f32 %v1890, %v1891
    %v1893 = vrot.slane %v1892, 2
    %v1894 = vadd.f32 %v1892, %v1893
    %v1895 = vrot.slane %v1894, 1
    %v1896 = vadd.f32 %v1894, %v1895
    %v1897 = vsel %vm112, %v1847, 0.0
    %v1898 = vrot.slane %v1897, 4
    %v1899 = vadd.f32 %v1897, %v1898
    %v1900 = vrot.slane %v1899, 2
    %v1901 = vadd.f32 %v1899, %v1900
    %v1902 = vrot.slane %v1901, 1
    %v1903 = vadd.f32 %v1901, %v1902
    %v1904 = vlog2.pop %v1854
    %v1905 = vmul.f32 %v1904, 0.6931472
    %v1906 = vlog2.pop %v1861
    %v1907 = vmul.f32 %v1906, 0.6931472
    %v1908 = vlog2.pop %v1868
    %v1909 = vmul.f32 %v1908, 0.6931472
    %v1910 = vlog2.pop %v1875
    %v1911 = vmul.f32 %v1910, 0.6931472
    %v1912 = vlog2.pop %v1882
    %v1913 = vmul.f32 %v1912, 0.6931472
    %v1914 = vlog2.pop %v1889
    %v1915 = vmul.f32 %v1914, 0.6931472
    %v1916 = vlog2.pop %v1896
    %v1917 = vmul.f32 %v1916, 0.6931472
    %v1918 = vlog2.pop %v1903
    %v1919 = vmul.f32 %v1918, 0.6931472
    %v1920 = vadd.f32 %v1774, %v1905
    %v1921 = vadd.f32 %v1781, %v1907
    %v1922 = vadd.f32 %v1788, %v1909
    %v1923 = vadd.f32 %v1795, %v1911
    %v1924 = vadd.f32 %v1802, %v1913
    %v1925 = vadd.f32 %v1809, %v1915
    %v1926 = vadd.f32 %v1816, %v1917
    %v1927 = vadd.f32 %v1823, %v1919
    %v1928 = vsel %vm1661, 1, 0
    %v1929 = vlaneseq
    %v1930 = vshrl.u32 %v1929, 7
    %v1931 = vsub.s32 0, %v1930
    %v1932 = vrot.slane %v1928, %v1931
    %vm1933 = vcmp.eq.s32.totalorder %v1932, 1
    %v1942 = vsel %vm511, %v1921, %v1920
    %v1943 = vsel %vm513, %v1922, %v1942
    %v1944 = vsel %vm515, %v1923, %v1943
    %v1945 = vsel %vm517, %v1924, %v1944
    %v1946 = vsel %vm519, %v1925, %v1945
    %v1947 = vsel %vm521, %v1926, %v1946
    %v1948 = vsel %vm523, %v1927, %v1947
    %v1950 = vsel %vm1933, %v1948, %v1454
    %v1951 = vadd.f32 %v1752, %v1640
    %v1952 = vadd.f32 %v1753, %v1640
    %v1953 = vadd.f32 %v1754, %v1640
    %v1954 = vadd.f32 %v1755, %v1640
    %v1955 = vadd.f32 %v1756, %v1640
    %v1956 = vadd.f32 %v1757, %v1640
    %v1957 = vadd.f32 %v1758, %v1640
    %v1958 = vadd.f32 %v1759, %v1640
    %v1959 = vsel %vm112, %v1951, -inf
    %v1960 = vrot.slane %v1959, 4
    %v1961 = vmax.f32 %v1959, %v1960
    %v1962 = vrot.slane %v1961, 2
    %v1963 = vmax.f32 %v1961, %v1962
    %v1964 = vrot.slane %v1963, 1
    %v1965 = vmax.f32 %v1963, %v1964
    %v1966 = vsel %vm112, %v1952, -inf
    %v1967 = vrot.slane %v1966, 4
    %v1968 = vmax.f32 %v1966, %v1967
    %v1969 = vrot.slane %v1968, 2
    %v1970 = vmax.f32 %v1968, %v1969
    %v1971 = vrot.slane %v1970, 1
    %v1972 = vmax.f32 %v1970, %v1971
    %v1973 = vsel %vm112, %v1953, -inf
    %v1974 = vrot.slane %v1973, 4
    %v1975 = vmax.f32 %v1973, %v1974
    %v1976 = vrot.slane %v1975, 2
    %v1977 = vmax.f32 %v1975, %v1976
    %v1978 = vrot.slane %v1977, 1
    %v1979 = vmax.f32 %v1977, %v1978
    %v1980 = vsel %vm112, %v1954, -inf
    %v1981 = vrot.slane %v1980, 4
    %v1982 = vmax.f32 %v1980, %v1981
    %v1983 = vrot.slane %v1982, 2
    %v1984 = vmax.f32 %v1982, %v1983
    %v1985 = vrot.slane %v1984, 1
    %v1986 = vmax.f32 %v1984, %v1985
    %v1987 = vsel %vm112, %v1955, -inf
    %v1988 = vrot.slane %v1987, 4
    %v1989 = vmax.f32 %v1987, %v1988
    %v1990 = vrot.slane %v1989, 2
    %v1991 = vmax.f32 %v1989, %v1990
    %v1992 = vrot.slane %v1991, 1
    %v1993 = vmax.f32 %v1991, %v1992
    %v1994 = vsel %vm112, %v1956, -inf
    %v1995 = vrot.slane %v1994, 4
    %v1996 = vmax.f32 %v1994, %v1995
    %v1997 = vrot.slane %v1996, 2
    %v1998 = vmax.f32 %v1996, %v1997
    %v1999 = vrot.slane %v1998, 1
    %v2000 = vmax.f32 %v1998, %v1999
    %v2001 = vsel %vm112, %v1957, -inf
    %v2002 = vrot.slane %v2001, 4
    %v2003 = vmax.f32 %v2001, %v2002
    %v2004 = vrot.slane %v2003, 2
    %v2005 = vmax.f32 %v2003, %v2004
    %v2006 = vrot.slane %v2005, 1
    %v2007 = vmax.f32 %v2005, %v2006
    %v2008 = vsel %vm112, %v1958, -inf
    %v2009 = vrot.slane %v2008, 4
    %v2010 = vmax.f32 %v2008, %v2009
    %v2011 = vrot.slane %v2010, 2
    %v2012 = vmax.f32 %v2010, %v2011
    %v2013 = vrot.slane %v2012, 1
    %v2014 = vmax.f32 %v2012, %v2013
    %vm2015 = vcmp.eq.f32.partialorder %v1951, %v1965
    %vm2016 = vcmp.eq.f32.partialorder %v1952, %v1972
    %vm2017 = vcmp.eq.f32.partialorder %v1953, %v1979
    %vm2018 = vcmp.eq.f32.partialorder %v1954, %v1986
    %vm2019 = vcmp.eq.f32.partialorder %v1955, %v1993
    %vm2020 = vcmp.eq.f32.partialorder %v1956, %v2000
    %vm2021 = vcmp.eq.f32.partialorder %v1957, %v2007
    %vm2022 = vcmp.eq.f32.partialorder %v1958, %v2014
    %v2023 = vsel %vm2015, %v44, 8
    %v2024 = vsel %vm2016, %v44, 8
    %v2025 = vsel %vm2017, %v44, 8
    %v2026 = vsel %vm2018, %v44, 8
    %v2027 = vsel %vm2019, %v44, 8
    %v2028 = vsel %vm2020, %v44, 8
    %v2029 = vsel %vm2021, %v44, 8
    %v2030 = vsel %vm2022, %v44, 8
    %v2031 = vsel %vm112, %v2023, 2147483647
    %v2032 = vrot.slane %v2031, 4
    %vm2033 = vcmp.lt.s32.totalorder %v2031, %v2032
    %v2034 = vsel %vm2033, %v2031, %v2032
    %v2035 = vrot.slane %v2034, 2
    %vm2036 = vcmp.lt.s32.totalorder %v2034, %v2035
    %v2037 = vsel %vm2036, %v2034, %v2035
    %v2038 = vrot.slane %v2037, 1
    %vm2039 = vcmp.lt.s32.totalorder %v2037, %v2038
    %v2040 = vsel %vm2039, %v2037, %v2038
    %v2041 = vsel %vm112, %v2024, 2147483647
    %v2042 = vrot.slane %v2041, 4
    %vm2043 = vcmp.lt.s32.totalorder %v2041, %v2042
    %v2044 = vsel %vm2043, %v2041, %v2042
    %v2045 = vrot.slane %v2044, 2
    %vm2046 = vcmp.lt.s32.totalorder %v2044, %v2045
    %v2047 = vsel %vm2046, %v2044, %v2045
    %v2048 = vrot.slane %v2047, 1
    %vm2049 = vcmp.lt.s32.totalorder %v2047, %v2048
    %v2050 = vsel %vm2049, %v2047, %v2048
    %v2051 = vsel %vm112, %v2025, 2147483647
    %v2052 = vrot.slane %v2051, 4
    %vm2053 = vcmp.lt.s32.totalorder %v2051, %v2052
    %v2054 = vsel %vm2053, %v2051, %v2052
    %v2055 = vrot.slane %v2054, 2
    %vm2056 = vcmp.lt.s32.totalorder %v2054, %v2055
    %v2057 = vsel %vm2056, %v2054, %v2055
    %v2058 = vrot.slane %v2057, 1
    %vm2059 = vcmp.lt.s32.totalorder %v2057, %v2058
    %v2060 = vsel %vm2059, %v2057, %v2058
    %v2061 = vsel %vm112, %v2026, 2147483647
    %v2062 = vrot.slane %v2061, 4
    %vm2063 = vcmp.lt.s32.totalorder %v2061, %v2062
    %v2064 = vsel %vm2063, %v2061, %v2062
    %v2065 = vrot.slane %v2064, 2
    %vm2066 = vcmp.lt.s32.totalorder %v2064, %v2065
    %v2067 = vsel %vm2066, %v2064, %v2065
    %v2068 = vrot.slane %v2067, 1
    %vm2069 = vcmp.lt.s32.totalorder %v2067, %v2068
    %v2070 = vsel %vm2069, %v2067, %v2068
    %v2071 = vsel %vm112, %v2027, 2147483647
    %v2072 = vrot.slane %v2071, 4
    %vm2073 = vcmp.lt.s32.totalorder %v2071, %v2072
    %v2074 = vsel %vm2073, %v2071, %v2072
    %v2075 = vrot.slane %v2074, 2
    %vm2076 = vcmp.lt.s32.totalorder %v2074, %v2075
    %v2077 = vsel %vm2076, %v2074, %v2075
    %v2078 = vrot.slane %v2077, 1
    %vm2079 = vcmp.lt.s32.totalorder %v2077, %v2078
    %v2080 = vsel %vm2079, %v2077, %v2078
    %v2081 = vsel %vm112, %v2028, 2147483647
    %v2082 = vrot.slane %v2081, 4
    %vm2083 = vcmp.lt.s32.totalorder %v2081, %v2082
    %v2084 = vsel %vm2083, %v2081, %v2082
    %v2085 = vrot.slane %v2084, 2
    %vm2086 = vcmp.lt.s32.totalorder %v2084, %v2085
    %v2087 = vsel %vm2086, %v2084, %v2085
    %v2088 = vrot.slane %v2087, 1
    %vm2089 = vcmp.lt.s32.totalorder %v2087, %v2088
    %v2090 = vsel %vm2089, %v2087, %v2088
    %v2091 = vsel %vm112, %v2029, 2147483647
    %v2092 = vrot.slane %v2091, 4
    %vm2093 = vcmp.lt.s32.totalorder %v2091, %v2092
    %v2094 = vsel %vm2093, %v2091, %v2092
    %v2095 = vrot.slane %v2094, 2
    %vm2096 = vcmp.lt.s32.totalorder %v2094, %v2095
    %v2097 = vsel %vm2096, %v2094, %v2095
    %v2098 = vrot.slane %v2097, 1
    %vm2099 = vcmp.lt.s32.totalorder %v2097, %v2098
    %v2100 = vsel %vm2099, %v2097, %v2098
    %v2101 = vsel %vm112, %v2030, 2147483647
    %v2102 = vrot.slane %v2101, 4
    %vm2103 = vcmp.lt.s32.totalorder %v2101, %v2102
    %v2104 = vsel %vm2103, %v2101, %v2102
    %v2105 = vrot.slane %v2104, 2
    %vm2106 = vcmp.lt.s32.totalorder %v2104, %v2105
    %v2107 = vsel %vm2106, %v2104, %v2105
    %v2108 = vrot.slane %v2107, 1
    %vm2109 = vcmp.lt.s32.totalorder %v2107, %v2108
    %v2110 = vsel %vm2109, %v2107, %v2108
    %v2111 = vsel %vm511, %v2050, %v2040
    %v2112 = vsel %vm513, %v2060, %v2111
    %v2113 = vsel %vm515, %v2070, %v2112
    %v2114 = vsel %vm517, %v2080, %v2113
    %v2115 = vsel %vm519, %v2090, %v2114
    %v2116 = vsel %vm521, %v2100, %v2115
    %v2117 = vsel %vm523, %v2110, %v2116
    %s2118 = scalar_lea.vmem [#allocation3], 32
    %2119 = vst.msk [vmem:[%s2118] sm:$0xff] %vm112, %v2117
    %v2128 = vsel %vm511, %v1972, %v1965
    %v2129 = vsel %vm513, %v1979, %v2128
    %v2130 = vsel %vm515, %v1986, %v2129
    %v2131 = vsel %vm517, %v1993, %v2130
    %v2132 = vsel %vm519, %v2000, %v2131
    %v2133 = vsel %vm521, %v2007, %v2132
    %v2134 = vsel %vm523, %v2014, %v2133
    %v2136 = vsel %vm1933, %v2134, %v1640
    %s2137 = scalar_lea.vmem %s6, 4
    %v2138 = vld [vmem:[%s2137] sm:$0x1]
    %v2139 = vlaneseq
    %v2140 = vshrl.u32 %v2139, 7
    %v2141 = vsub.s32 0, %v2140
    %v2142 = vrot.slane %v2138, %v2141
    %vm2143 = vcmp.eq.s32.totalorder %v44, %v2142
    %v2144 = vsel %vm2143, %v1658, 0.0
    %v2145 = vsel %vm112, %v2144, 0.0
    %v2146 = vrot.slane %v2145, 4
    %v2147 = vadd.f32 %v2145, %v2146
    %v2148 = vrot.slane %v2147, 2
    %v2149 = vadd.f32 %v2147, %v2148
    %v2150 = vrot.slane %v2149, 1
    %v2151 = vadd.f32 %v2149, %v2150
    %v2152 = vmul.f32 %v1660, %v2151
    %v2153 = vadd.f32 %v1657, %v2152
    %v2154 = vld [vmem:[%s138] sm:$0xff]
    %s2155 = scalar_lea.vmem %s7, 5
    %v2156 = vld [vmem:[%s2155] sm:$0x1]
    %vm2157 = vcmp.gt.f32.partialorder %v2156, 0.5
    %v2159 = vcombine.high %v2154, %v2154
    %v2161 = vunpack.c.l.s4 1966171168
    %v2162 = vunpack.c.0.s8 %v2161
    %v2163 = vlaneseq
    %v2164 = vshrl.u32 %v2163, 7
    %v2165 = vsub.s32 %v2162, %v2164
    %v2166 = vrot.slane %v2154, %v2165
    %v2168 = vunpack.c.l.s4 1966171168
    %v2169 = vunpack.c.0.s8 %v2168
    %v2170 = vlaneseq
    %v2171 = vshrl.u32 %v2170, 7
    %v2172 = vsub.s32 %v2169, %v2171
    %v2173 = vrot.slane %v2159, %v2172
    %v2174 = vcombine.high %v2166, %v2166
    %v2175 = vcombine.high %v2173, %v2173
    %v2177 = vunpack.c.l.s4 1966171168
    %v2178 = vunpack.c.0.s8 %v2177
    %v2179 = vlaneseq
    %v2180 = vshrl.u32 %v2179, 7
    %v2181 = vsub.s32 %v2178, %v2180
    %v2182 = vrot.slane %v2166, %v2181
    %v2184 = vunpack.c.l.s4 1966171168
    %v2185 = vunpack.c.0.s8 %v2184
    %v2186 = vlaneseq
    %v2187 = vshrl.u32 %v2186, 7
    %v2188 = vsub.s32 %v2185, %v2187
    %v2189 = vrot.slane %v2173, %v2188
    %v2191 = vunpack.c.l.s4 1966171168
    %v2192 = vunpack.c.0.s8 %v2191
    %v2193 = vlaneseq
    %v2194 = vshrl.u32 %v2193, 7
    %v2195 = vsub.s32 %v2192, %v2194
    %v2196 = vrot.slane %v2174, %v2195
    %v2198 = vunpack.c.l.s4 1966171168
    %v2199 = vunpack.c.0.s8 %v2198
    %v2200 = vlaneseq
    %v2201 = vshrl.u32 %v2200, 7
    %v2202 = vsub.s32 %v2199, %v2201
    %v2203 = vrot.slane %v2175, %v2202
    %v2204 = vcombine.high %v2182, %v2182
    %v2205 = vcombine.high %v2189, %v2189
    %v2206 = vcombine.high %v2196, %v2196
    %v2207 = vcombine.high %v2203, %v2203
    %v2208 = vlaneseq
    %v2209 = vshrl.u32 %v2208, 7
    %v2210 = vsub.s32 0, %v2209
    %v2211 = vrot.slane %v2182, %v2210
    %v2212 = vlaneseq
    %v2213 = vshrl.u32 %v2212, 7
    %v2214 = vsub.s32 0, %v2213
    %v2215 = vrot.slane %v2196, %v2214
    %v2216 = vlaneseq
    %v2217 = vshrl.u32 %v2216, 7
    %v2218 = vsub.s32 0, %v2217
    %v2219 = vrot.slane %v2204, %v2218
    %v2220 = vlaneseq
    %v2221 = vshrl.u32 %v2220, 7
    %v2222 = vsub.s32 0, %v2221
    %v2223 = vrot.slane %v2206, %v2222
    %v2224 = vlaneseq
    %v2225 = vshrl.u32 %v2224, 7
    %v2226 = vsub.s32 0, %v2225
    %v2227 = vrot.slane %v2189, %v2226
    %v2228 = vlaneseq
    %v2229 = vshrl.u32 %v2228, 7
    %v2230 = vsub.s32 0, %v2229
    %v2231 = vrot.slane %v2203, %v2230
    %v2232 = vlaneseq
    %v2233 = vshrl.u32 %v2232, 7
    %v2234 = vsub.s32 0, %v2233
    %v2235 = vrot.slane %v2205, %v2234
    %v2236 = vlaneseq
    %v2237 = vshrl.u32 %v2236, 7
    %v2238 = vsub.s32 0, %v2237
    %v2239 = vrot.slane %v2207, %v2238
    %v2248 = vadd.f32 %v2211, %v231
    %v2249 = vadd.f32 %v2215, %v238
    %v2250 = vadd.f32 %v2219, %v245
    %v2251 = vadd.f32 %v2223, %v252
    %v2252 = vadd.f32 %v2227, %v259
    %v2253 = vadd.f32 %v2231, %v266
    %v2254 = vadd.f32 %v2235, %v273
    %v2255 = vadd.f32 %v2239, %v280
    %v2256 = vadd.f32 %v2248, %v1950
    %v2257 = vadd.f32 %v2249, %v1950
    %v2258 = vadd.f32 %v2250, %v1950
    %v2259 = vadd.f32 %v2251, %v1950
    %v2260 = vadd.f32 %v2252, %v1950
    %v2261 = vadd.f32 %v2253, %v1950
    %v2262 = vadd.f32 %v2254, %v1950
    %v2263 = vadd.f32 %v2255, %v1950
    %v2264 = vsel %vm112, %v2256, -inf
    %v2265 = vrot.slane %v2264, 4
    %v2266 = vmax.f32 %v2264, %v2265
    %v2267 = vrot.slane %v2266, 2
    %v2268 = vmax.f32 %v2266, %v2267
    %v2269 = vrot.slane %v2268, 1
    %v2270 = vmax.f32 %v2268, %v2269
    %v2271 = vsel %vm112, %v2257, -inf
    %v2272 = vrot.slane %v2271, 4
    %v2273 = vmax.f32 %v2271, %v2272
    %v2274 = vrot.slane %v2273, 2
    %v2275 = vmax.f32 %v2273, %v2274
    %v2276 = vrot.slane %v2275, 1
    %v2277 = vmax.f32 %v2275, %v2276
    %v2278 = vsel %vm112, %v2258, -inf
    %v2279 = vrot.slane %v2278, 4
    %v2280 = vmax.f32 %v2278, %v2279
    %v2281 = vrot.slane %v2280, 2
    %v2282 = vmax.f32 %v2280, %v2281
    %v2283 = vrot.slane %v2282, 1
    %v2284 = vmax.f32 %v2282, %v2283
    %v2285 = vsel %vm112, %v2259, -inf
    %v2286 = vrot.slane %v2285, 4
    %v2287 = vmax.f32 %v2285, %v2286
    %v2288 = vrot.slane %v2287, 2
    %v2289 = vmax.f32 %v2287, %v2288
    %v2290 = vrot.slane %v2289, 1
    %v2291 = vmax.f32 %v2289, %v2290
    %v2292 = vsel %vm112, %v2260, -inf
    %v2293 = vrot.slane %v2292, 4
    %v2294 = vmax.f32 %v2292, %v2293
    %v2295 = vrot.slane %v2294, 2
    %v2296 = vmax.f32 %v2294, %v2295
    %v2297 = vrot.slane %v2296, 1
    %v2298 = vmax.f32 %v2296, %v2297
    %v2299 = vsel %vm112, %v2261, -inf
    %v2300 = vrot.slane %v2299, 4
    %v2301 = vmax.f32 %v2299, %v2300
    %v2302 = vrot.slane %v2301, 2
    %v2303 = vmax.f32 %v2301, %v2302
    %v2304 = vrot.slane %v2303, 1
    %v2305 = vmax.f32 %v2303, %v2304
    %v2306 = vsel %vm112, %v2262, -inf
    %v2307 = vrot.slane %v2306, 4
    %v2308 = vmax.f32 %v2306, %v2307
    %v2309 = vrot.slane %v2308, 2
    %v2310 = vmax.f32 %v2308, %v2309
    %v2311 = vrot.slane %v2310, 1
    %v2312 = vmax.f32 %v2310, %v2311
    %v2313 = vsel %vm112, %v2263, -inf
    %v2314 = vrot.slane %v2313, 4
    %v2315 = vmax.f32 %v2313, %v2314
    %v2316 = vrot.slane %v2315, 2
    %v2317 = vmax.f32 %v2315, %v2316
    %v2318 = vrot.slane %v2317, 1
    %v2319 = vmax.f32 %v2317, %v2318
    %v2320 = vsub.f32 %v2256, %v2270
    %v2321 = vsub.f32 %v2257, %v2277
    %v2322 = vsub.f32 %v2258, %v2284
    %v2323 = vsub.f32 %v2259, %v2291
    %v2324 = vsub.f32 %v2260, %v2298
    %v2325 = vsub.f32 %v2261, %v2305
    %v2326 = vsub.f32 %v2262, %v2312
    %v2327 = vsub.f32 %v2263, %v2319
    %v2328 = vmul.f32 %v2320, 1.442695
    %v2329 = vpow.pop %v2328
    %v2330 = vmul.f32 %v2321, 1.442695
    %v2331 = vpow.pop %v2330
    %v2332 = vmul.f32 %v2322, 1.442695
    %v2333 = vpow.pop %v2332
    %v2334 = vmul.f32 %v2323, 1.442695
    %v2335 = vpow.pop %v2334
    %v2336 = vmul.f32 %v2324, 1.442695
    %v2337 = vpow.pop %v2336
    %v2338 = vmul.f32 %v2325, 1.442695
    %v2339 = vpow.pop %v2338
    %v2340 = vmul.f32 %v2326, 1.442695
    %v2341 = vpow.pop %v2340
    %v2342 = vmul.f32 %v2327, 1.442695
    %v2343 = vpow.pop %v2342
    %v2344 = vsel %vm112, %v2329, 0.0
    %v2345 = vrot.slane %v2344, 4
    %v2346 = vadd.f32 %v2344, %v2345
    %v2347 = vrot.slane %v2346, 2
    %v2348 = vadd.f32 %v2346, %v2347
    %v2349 = vrot.slane %v2348, 1
    %v2350 = vadd.f32 %v2348, %v2349
    %v2351 = vsel %vm112, %v2331, 0.0
    %v2352 = vrot.slane %v2351, 4
    %v2353 = vadd.f32 %v2351, %v2352
    %v2354 = vrot.slane %v2353, 2
    %v2355 = vadd.f32 %v2353, %v2354
    %v2356 = vrot.slane %v2355, 1
    %v2357 = vadd.f32 %v2355, %v2356
    %v2358 = vsel %vm112, %v2333, 0.0
    %v2359 = vrot.slane %v2358, 4
    %v2360 = vadd.f32 %v2358, %v2359
    %v2361 = vrot.slane %v2360, 2
    %v2362 = vadd.f32 %v2360, %v2361
    %v2363 = vrot.slane %v2362, 1
    %v2364 = vadd.f32 %v2362, %v2363
    %v2365 = vsel %vm112, %v2335, 0.0
    %v2366 = vrot.slane %v2365, 4
    %v2367 = vadd.f32 %v2365, %v2366
    %v2368 = vrot.slane %v2367, 2
    %v2369 = vadd.f32 %v2367, %v2368
    %v2370 = vrot.slane %v2369, 1
    %v2371 = vadd.f32 %v2369, %v2370
    %v2372 = vsel %vm112, %v2337, 0.0
    %v2373 = vrot.slane %v2372, 4
    %v2374 = vadd.f32 %v2372, %v2373
    %v2375 = vrot.slane %v2374, 2
    %v2376 = vadd.f32 %v2374, %v2375
    %v2377 = vrot.slane %v2376, 1
    %v2378 = vadd.f32 %v2376, %v2377
    %v2379 = vsel %vm112, %v2339, 0.0
    %v2380 = vrot.slane %v2379, 4
    %v2381 = vadd.f32 %v2379, %v2380
    %v2382 = vrot.slane %v2381, 2
    %v2383 = vadd.f32 %v2381, %v2382
    %v2384 = vrot.slane %v2383, 1
    %v2385 = vadd.f32 %v2383, %v2384
    %v2386 = vsel %vm112, %v2341, 0.0
    %v2387 = vrot.slane %v2386, 4
    %v2388 = vadd.f32 %v2386, %v2387
    %v2389 = vrot.slane %v2388, 2
    %v2390 = vadd.f32 %v2388, %v2389
    %v2391 = vrot.slane %v2390, 1
    %v2392 = vadd.f32 %v2390, %v2391
    %v2393 = vsel %vm112, %v2343, 0.0
    %v2394 = vrot.slane %v2393, 4
    %v2395 = vadd.f32 %v2393, %v2394
    %v2396 = vrot.slane %v2395, 2
    %v2397 = vadd.f32 %v2395, %v2396
    %v2398 = vrot.slane %v2397, 1
    %v2399 = vadd.f32 %v2397, %v2398
    %v2400 = vlog2.pop %v2350
    %v2401 = vmul.f32 %v2400, 0.6931472
    %v2402 = vlog2.pop %v2357
    %v2403 = vmul.f32 %v2402, 0.6931472
    %v2404 = vlog2.pop %v2364
    %v2405 = vmul.f32 %v2404, 0.6931472
    %v2406 = vlog2.pop %v2371
    %v2407 = vmul.f32 %v2406, 0.6931472
    %v2408 = vlog2.pop %v2378
    %v2409 = vmul.f32 %v2408, 0.6931472
    %v2410 = vlog2.pop %v2385
    %v2411 = vmul.f32 %v2410, 0.6931472
    %v2412 = vlog2.pop %v2392
    %v2413 = vmul.f32 %v2412, 0.6931472
    %v2414 = vlog2.pop %v2399
    %v2415 = vmul.f32 %v2414, 0.6931472
    %v2416 = vadd.f32 %v2270, %v2401
    %v2417 = vadd.f32 %v2277, %v2403
    %v2418 = vadd.f32 %v2284, %v2405
    %v2419 = vadd.f32 %v2291, %v2407
    %v2420 = vadd.f32 %v2298, %v2409
    %v2421 = vadd.f32 %v2305, %v2411
    %v2422 = vadd.f32 %v2312, %v2413
    %v2423 = vadd.f32 %v2319, %v2415
    %v2424 = vsel %vm2157, 1, 0
    %v2425 = vlaneseq
    %v2426 = vshrl.u32 %v2425, 7
    %v2427 = vsub.s32 0, %v2426
    %v2428 = vrot.slane %v2424, %v2427
    %vm2429 = vcmp.eq.s32.totalorder %v2428, 1
    %v2438 = vsel %vm511, %v2417, %v2416
    %v2439 = vsel %vm513, %v2418, %v2438
    %v2440 = vsel %vm515, %v2419, %v2439
    %v2441 = vsel %vm517, %v2420, %v2440
    %v2442 = vsel %vm519, %v2421, %v2441
    %v2443 = vsel %vm521, %v2422, %v2442
    %v2444 = vsel %vm523, %v2423, %v2443
    %v2446 = vsel %vm2429, %v2444, %v1950
    %v2447 = vadd.f32 %v2248, %v2136
    %v2448 = vadd.f32 %v2249, %v2136
    %v2449 = vadd.f32 %v2250, %v2136
    %v2450 = vadd.f32 %v2251, %v2136
    %v2451 = vadd.f32 %v2252, %v2136
    %v2452 = vadd.f32 %v2253, %v2136
    %v2453 = vadd.f32 %v2254, %v2136
    %v2454 = vadd.f32 %v2255, %v2136
    %v2455 = vsel %vm112, %v2447, -inf
    %v2456 = vrot.slane %v2455, 4
    %v2457 = vmax.f32 %v2455, %v2456
    %v2458 = vrot.slane %v2457, 2
    %v2459 = vmax.f32 %v2457, %v2458
    %v2460 = vrot.slane %v2459, 1
    %v2461 = vmax.f32 %v2459, %v2460
    %v2462 = vsel %vm112, %v2448, -inf
    %v2463 = vrot.slane %v2462, 4
    %v2464 = vmax.f32 %v2462, %v2463
    %v2465 = vrot.slane %v2464, 2
    %v2466 = vmax.f32 %v2464, %v2465
    %v2467 = vrot.slane %v2466, 1
    %v2468 = vmax.f32 %v2466, %v2467
    %v2469 = vsel %vm112, %v2449, -inf
    %v2470 = vrot.slane %v2469, 4
    %v2471 = vmax.f32 %v2469, %v2470
    %v2472 = vrot.slane %v2471, 2
    %v2473 = vmax.f32 %v2471, %v2472
    %v2474 = vrot.slane %v2473, 1
    %v2475 = vmax.f32 %v2473, %v2474
    %v2476 = vsel %vm112, %v2450, -inf
    %v2477 = vrot.slane %v2476, 4
    %v2478 = vmax.f32 %v2476, %v2477
    %v2479 = vrot.slane %v2478, 2
    %v2480 = vmax.f32 %v2478, %v2479
    %v2481 = vrot.slane %v2480, 1
    %v2482 = vmax.f32 %v2480, %v2481
    %v2483 = vsel %vm112, %v2451, -inf
    %v2484 = vrot.slane %v2483, 4
    %v2485 = vmax.f32 %v2483, %v2484
    %v2486 = vrot.slane %v2485, 2
    %v2487 = vmax.f32 %v2485, %v2486
    %v2488 = vrot.slane %v2487, 1
    %v2489 = vmax.f32 %v2487, %v2488
    %v2490 = vsel %vm112, %v2452, -inf
    %v2491 = vrot.slane %v2490, 4
    %v2492 = vmax.f32 %v2490, %v2491
    %v2493 = vrot.slane %v2492, 2
    %v2494 = vmax.f32 %v2492, %v2493
    %v2495 = vrot.slane %v2494, 1
    %v2496 = vmax.f32 %v2494, %v2495
    %v2497 = vsel %vm112, %v2453, -inf
    %v2498 = vrot.slane %v2497, 4
    %v2499 = vmax.f32 %v2497, %v2498
    %v2500 = vrot.slane %v2499, 2
    %v2501 = vmax.f32 %v2499, %v2500
    %v2502 = vrot.slane %v2501, 1
    %v2503 = vmax.f32 %v2501, %v2502
    %v2504 = vsel %vm112, %v2454, -inf
    %v2505 = vrot.slane %v2504, 4
    %v2506 = vmax.f32 %v2504, %v2505
    %v2507 = vrot.slane %v2506, 2
    %v2508 = vmax.f32 %v2506, %v2507
    %v2509 = vrot.slane %v2508, 1
    %v2510 = vmax.f32 %v2508, %v2509
    %vm2511 = vcmp.eq.f32.partialorder %v2447, %v2461
    %vm2512 = vcmp.eq.f32.partialorder %v2448, %v2468
    %vm2513 = vcmp.eq.f32.partialorder %v2449, %v2475
    %vm2514 = vcmp.eq.f32.partialorder %v2450, %v2482
    %vm2515 = vcmp.eq.f32.partialorder %v2451, %v2489
    %vm2516 = vcmp.eq.f32.partialorder %v2452, %v2496
    %vm2517 = vcmp.eq.f32.partialorder %v2453, %v2503
    %vm2518 = vcmp.eq.f32.partialorder %v2454, %v2510
    %v2519 = vsel %vm2511, %v44, 8
    %v2520 = vsel %vm2512, %v44, 8
    %v2521 = vsel %vm2513, %v44, 8
    %v2522 = vsel %vm2514, %v44, 8
    %v2523 = vsel %vm2515, %v44, 8
    %v2524 = vsel %vm2516, %v44, 8
    %v2525 = vsel %vm2517, %v44, 8
    %v2526 = vsel %vm2518, %v44, 8
    %v2527 = vsel %vm112, %v2519, 2147483647
    %v2528 = vrot.slane %v2527, 4
    %vm2529 = vcmp.lt.s32.totalorder %v2527, %v2528
    %v2530 = vsel %vm2529, %v2527, %v2528
    %v2531 = vrot.slane %v2530, 2
    %vm2532 = vcmp.lt.s32.totalorder %v2530, %v2531
    %v2533 = vsel %vm2532, %v2530, %v2531
    %v2534 = vrot.slane %v2533, 1
    %vm2535 = vcmp.lt.s32.totalorder %v2533, %v2534
    %v2536 = vsel %vm2535, %v2533, %v2534
    %v2537 = vsel %vm112, %v2520, 2147483647
    %v2538 = vrot.slane %v2537, 4
    %vm2539 = vcmp.lt.s32.totalorder %v2537, %v2538
    %v2540 = vsel %vm2539, %v2537, %v2538
    %v2541 = vrot.slane %v2540, 2
    %vm2542 = vcmp.lt.s32.totalorder %v2540, %v2541
    %v2543 = vsel %vm2542, %v2540, %v2541
    %v2544 = vrot.slane %v2543, 1
    %vm2545 = vcmp.lt.s32.totalorder %v2543, %v2544
    %v2546 = vsel %vm2545, %v2543, %v2544
    %v2547 = vsel %vm112, %v2521, 2147483647
    %v2548 = vrot.slane %v2547, 4
    %vm2549 = vcmp.lt.s32.totalorder %v2547, %v2548
    %v2550 = vsel %vm2549, %v2547, %v2548
    %v2551 = vrot.slane %v2550, 2
    %vm2552 = vcmp.lt.s32.totalorder %v2550, %v2551
    %v2553 = vsel %vm2552, %v2550, %v2551
    %v2554 = vrot.slane %v2553, 1
    %vm2555 = vcmp.lt.s32.totalorder %v2553, %v2554
    %v2556 = vsel %vm2555, %v2553, %v2554
    %v2557 = vsel %vm112, %v2522, 2147483647
    %v2558 = vrot.slane %v2557, 4
    %vm2559 = vcmp.lt.s32.totalorder %v2557, %v2558
    %v2560 = vsel %vm2559, %v2557, %v2558
    %v2561 = vrot.slane %v2560, 2
    %vm2562 = vcmp.lt.s32.totalorder %v2560, %v2561
    %v2563 = vsel %vm2562, %v2560, %v2561
    %v2564 = vrot.slane %v2563, 1
    %vm2565 = vcmp.lt.s32.totalorder %v2563, %v2564
    %v2566 = vsel %vm2565, %v2563, %v2564
    %v2567 = vsel %vm112, %v2523, 2147483647
    %v2568 = vrot.slane %v2567, 4
    %vm2569 = vcmp.lt.s32.totalorder %v2567, %v2568
    %v2570 = vsel %vm2569, %v2567, %v2568
    %v2571 = vrot.slane %v2570, 2
    %vm2572 = vcmp.lt.s32.totalorder %v2570, %v2571
    %v2573 = vsel %vm2572, %v2570, %v2571
    %v2574 = vrot.slane %v2573, 1
    %vm2575 = vcmp.lt.s32.totalorder %v2573, %v2574
    %v2576 = vsel %vm2575, %v2573, %v2574
    %v2577 = vsel %vm112, %v2524, 2147483647
    %v2578 = vrot.slane %v2577, 4
    %vm2579 = vcmp.lt.s32.totalorder %v2577, %v2578
    %v2580 = vsel %vm2579, %v2577, %v2578
    %v2581 = vrot.slane %v2580, 2
    %vm2582 = vcmp.lt.s32.totalorder %v2580, %v2581
    %v2583 = vsel %vm2582, %v2580, %v2581
    %v2584 = vrot.slane %v2583, 1
    %vm2585 = vcmp.lt.s32.totalorder %v2583, %v2584
    %v2586 = vsel %vm2585, %v2583, %v2584
    %v2587 = vsel %vm112, %v2525, 2147483647
    %v2588 = vrot.slane %v2587, 4
    %vm2589 = vcmp.lt.s32.totalorder %v2587, %v2588
    %v2590 = vsel %vm2589, %v2587, %v2588
    %v2591 = vrot.slane %v2590, 2
    %vm2592 = vcmp.lt.s32.totalorder %v2590, %v2591
    %v2593 = vsel %vm2592, %v2590, %v2591
    %v2594 = vrot.slane %v2593, 1
    %vm2595 = vcmp.lt.s32.totalorder %v2593, %v2594
    %v2596 = vsel %vm2595, %v2593, %v2594
    %v2597 = vsel %vm112, %v2526, 2147483647
    %v2598 = vrot.slane %v2597, 4
    %vm2599 = vcmp.lt.s32.totalorder %v2597, %v2598
    %v2600 = vsel %vm2599, %v2597, %v2598
    %v2601 = vrot.slane %v2600, 2
    %vm2602 = vcmp.lt.s32.totalorder %v2600, %v2601
    %v2603 = vsel %vm2602, %v2600, %v2601
    %v2604 = vrot.slane %v2603, 1
    %vm2605 = vcmp.lt.s32.totalorder %v2603, %v2604
    %v2606 = vsel %vm2605, %v2603, %v2604
    %v2607 = vsel %vm511, %v2546, %v2536
    %v2608 = vsel %vm513, %v2556, %v2607
    %v2609 = vsel %vm515, %v2566, %v2608
    %v2610 = vsel %vm517, %v2576, %v2609
    %v2611 = vsel %vm519, %v2586, %v2610
    %v2612 = vsel %vm521, %v2596, %v2611
    %v2613 = vsel %vm523, %v2606, %v2612
    %s2614 = scalar_lea.vmem [#allocation3], 40
    %2615 = vst.msk [vmem:[%s2614] sm:$0xff] %vm112, %v2613
    %v2624 = vsel %vm511, %v2468, %v2461
    %v2625 = vsel %vm513, %v2475, %v2624
    %v2626 = vsel %vm515, %v2482, %v2625
    %v2627 = vsel %vm517, %v2489, %v2626
    %v2628 = vsel %vm519, %v2496, %v2627
    %v2629 = vsel %vm521, %v2503, %v2628
    %v2630 = vsel %vm523, %v2510, %v2629
    %v2632 = vsel %vm2429, %v2630, %v2136
    %s2633 = scalar_lea.vmem %s6, 5
    %v2634 = vld [vmem:[%s2633] sm:$0x1]
    %v2635 = vlaneseq
    %v2636 = vshrl.u32 %v2635, 7
    %v2637 = vsub.s32 0, %v2636
    %v2638 = vrot.slane %v2634, %v2637
    %vm2639 = vcmp.eq.s32.totalorder %v44, %v2638
    %v2640 = vsel %vm2639, %v2154, 0.0
    %v2641 = vsel %vm112, %v2640, 0.0
    %v2642 = vrot.slane %v2641, 4
    %v2643 = vadd.f32 %v2641, %v2642
    %v2644 = vrot.slane %v2643, 2
    %v2645 = vadd.f32 %v2643, %v2644
    %v2646 = vrot.slane %v2645, 1
    %v2647 = vadd.f32 %v2645, %v2646
    %v2648 = vmul.f32 %v2156, %v2647
    %v2649 = vadd.f32 %v2153, %v2648
    %v2650 = vld [vmem:[%s143] sm:$0xff]
    %s2651 = scalar_lea.vmem %s7, 6
    %v2652 = vld [vmem:[%s2651] sm:$0x1]
    %vm2653 = vcmp.gt.f32.partialorder %v2652, 0.5
    %v2655 = vcombine.high %v2650, %v2650
    %v2657 = vunpack.c.l.s4 1966171168
    %v2658 = vunpack.c.0.s8 %v2657
    %v2659 = vlaneseq
    %v2660 = vshrl.u32 %v2659, 7
    %v2661 = vsub.s32 %v2658, %v2660
    %v2662 = vrot.slane %v2650, %v2661
    %v2664 = vunpack.c.l.s4 1966171168
    %v2665 = vunpack.c.0.s8 %v2664
    %v2666 = vlaneseq
    %v2667 = vshrl.u32 %v2666, 7
    %v2668 = vsub.s32 %v2665, %v2667
    %v2669 = vrot.slane %v2655, %v2668
    %v2670 = vcombine.high %v2662, %v2662
    %v2671 = vcombine.high %v2669, %v2669
    %v2673 = vunpack.c.l.s4 1966171168
    %v2674 = vunpack.c.0.s8 %v2673
    %v2675 = vlaneseq
    %v2676 = vshrl.u32 %v2675, 7
    %v2677 = vsub.s32 %v2674, %v2676
    %v2678 = vrot.slane %v2662, %v2677
    %v2680 = vunpack.c.l.s4 1966171168
    %v2681 = vunpack.c.0.s8 %v2680
    %v2682 = vlaneseq
    %v2683 = vshrl.u32 %v2682, 7
    %v2684 = vsub.s32 %v2681, %v2683
    %v2685 = vrot.slane %v2669, %v2684
    %v2687 = vunpack.c.l.s4 1966171168
    %v2688 = vunpack.c.0.s8 %v2687
    %v2689 = vlaneseq
    %v2690 = vshrl.u32 %v2689, 7
    %v2691 = vsub.s32 %v2688, %v2690
    %v2692 = vrot.slane %v2670, %v2691
    %v2694 = vunpack.c.l.s4 1966171168
    %v2695 = vunpack.c.0.s8 %v2694
    %v2696 = vlaneseq
    %v2697 = vshrl.u32 %v2696, 7
    %v2698 = vsub.s32 %v2695, %v2697
    %v2699 = vrot.slane %v2671, %v2698
    %v2700 = vcombine.high %v2678, %v2678
    %v2701 = vcombine.high %v2685, %v2685
    %v2702 = vcombine.high %v2692, %v2692
    %v2703 = vcombine.high %v2699, %v2699
    %v2704 = vlaneseq
    %v2705 = vshrl.u32 %v2704, 7
    %v2706 = vsub.s32 0, %v2705
    %v2707 = vrot.slane %v2678, %v2706
    %v2708 = vlaneseq
    %v2709 = vshrl.u32 %v2708, 7
    %v2710 = vsub.s32 0, %v2709
    %v2711 = vrot.slane %v2692, %v2710
    %v2712 = vlaneseq
    %v2713 = vshrl.u32 %v2712, 7
    %v2714 = vsub.s32 0, %v2713
    %v2715 = vrot.slane %v2700, %v2714
    %v2716 = vlaneseq
    %v2717 = vshrl.u32 %v2716, 7
    %v2718 = vsub.s32 0, %v2717
    %v2719 = vrot.slane %v2702, %v2718
    %v2720 = vlaneseq
    %v2721 = vshrl.u32 %v2720, 7
    %v2722 = vsub.s32 0, %v2721
    %v2723 = vrot.slane %v2685, %v2722
    %v2724 = vlaneseq
    %v2725 = vshrl.u32 %v2724, 7
    %v2726 = vsub.s32 0, %v2725
    %v2727 = vrot.slane %v2699, %v2726
    %v2728 = vlaneseq
    %v2729 = vshrl.u32 %v2728, 7
    %v2730 = vsub.s32 0, %v2729
    %v2731 = vrot.slane %v2701, %v2730
    %v2732 = vlaneseq
    %v2733 = vshrl.u32 %v2732, 7
    %v2734 = vsub.s32 0, %v2733
    %v2735 = vrot.slane %v2703, %v2734
    %v2744 = vadd.f32 %v2707, %v231
    %v2745 = vadd.f32 %v2711, %v238
    %v2746 = vadd.f32 %v2715, %v245
    %v2747 = vadd.f32 %v2719, %v252
    %v2748 = vadd.f32 %v2723, %v259
    %v2749 = vadd.f32 %v2727, %v266
    %v2750 = vadd.f32 %v2731, %v273
    %v2751 = vadd.f32 %v2735, %v280
    %v2752 = vadd.f32 %v2744, %v2446
    %v2753 = vadd.f32 %v2745, %v2446
    %v2754 = vadd.f32 %v2746, %v2446
    %v2755 = vadd.f32 %v2747, %v2446
    %v2756 = vadd.f32 %v2748, %v2446
    %v2757 = vadd.f32 %v2749, %v2446
    %v2758 = vadd.f32 %v2750, %v2446
    %v2759 = vadd.f32 %v2751, %v2446
    %v2760 = vsel %vm112, %v2752, -inf
    %v2761 = vrot.slane %v2760, 4
    %v2762 = vmax.f32 %v2760, %v2761
    %v2763 = vrot.slane %v2762, 2
    %v2764 = vmax.f32 %v2762, %v2763
    %v2765 = vrot.slane %v2764, 1
    %v2766 = vmax.f32 %v2764, %v2765
    %v2767 = vsel %vm112, %v2753, -inf
    %v2768 = vrot.slane %v2767, 4
    %v2769 = vmax.f32 %v2767, %v2768
    %v2770 = vrot.slane %v2769, 2
    %v2771 = vmax.f32 %v2769, %v2770
    %v2772 = vrot.slane %v2771, 1
    %v2773 = vmax.f32 %v2771, %v2772
    %v2774 = vsel %vm112, %v2754, -inf
    %v2775 = vrot.slane %v2774, 4
    %v2776 = vmax.f32 %v2774, %v2775
    %v2777 = vrot.slane %v2776, 2
    %v2778 = vmax.f32 %v2776, %v2777
    %v2779 = vrot.slane %v2778, 1
    %v2780 = vmax.f32 %v2778, %v2779
    %v2781 = vsel %vm112, %v2755, -inf
    %v2782 = vrot.slane %v2781, 4
    %v2783 = vmax.f32 %v2781, %v2782
    %v2784 = vrot.slane %v2783, 2
    %v2785 = vmax.f32 %v2783, %v2784
    %v2786 = vrot.slane %v2785, 1
    %v2787 = vmax.f32 %v2785, %v2786
    %v2788 = vsel %vm112, %v2756, -inf
    %v2789 = vrot.slane %v2788, 4
    %v2790 = vmax.f32 %v2788, %v2789
    %v2791 = vrot.slane %v2790, 2
    %v2792 = vmax.f32 %v2790, %v2791
    %v2793 = vrot.slane %v2792, 1
    %v2794 = vmax.f32 %v2792, %v2793
    %v2795 = vsel %vm112, %v2757, -inf
    %v2796 = vrot.slane %v2795, 4
    %v2797 = vmax.f32 %v2795, %v2796
    %v2798 = vrot.slane %v2797, 2
    %v2799 = vmax.f32 %v2797, %v2798
    %v2800 = vrot.slane %v2799, 1
    %v2801 = vmax.f32 %v2799, %v2800
    %v2802 = vsel %vm112, %v2758, -inf
    %v2803 = vrot.slane %v2802, 4
    %v2804 = vmax.f32 %v2802, %v2803
    %v2805 = vrot.slane %v2804, 2
    %v2806 = vmax.f32 %v2804, %v2805
    %v2807 = vrot.slane %v2806, 1
    %v2808 = vmax.f32 %v2806, %v2807
    %v2809 = vsel %vm112, %v2759, -inf
    %v2810 = vrot.slane %v2809, 4
    %v2811 = vmax.f32 %v2809, %v2810
    %v2812 = vrot.slane %v2811, 2
    %v2813 = vmax.f32 %v2811, %v2812
    %v2814 = vrot.slane %v2813, 1
    %v2815 = vmax.f32 %v2813, %v2814
    %v2816 = vsub.f32 %v2752, %v2766
    %v2817 = vsub.f32 %v2753, %v2773
    %v2818 = vsub.f32 %v2754, %v2780
    %v2819 = vsub.f32 %v2755, %v2787
    %v2820 = vsub.f32 %v2756, %v2794
    %v2821 = vsub.f32 %v2757, %v2801
    %v2822 = vsub.f32 %v2758, %v2808
    %v2823 = vsub.f32 %v2759, %v2815
    %v2824 = vmul.f32 %v2816, 1.442695
    %v2825 = vpow.pop %v2824
    %v2826 = vmul.f32 %v2817, 1.442695
    %v2827 = vpow.pop %v2826
    %v2828 = vmul.f32 %v2818, 1.442695
    %v2829 = vpow.pop %v2828
    %v2830 = vmul.f32 %v2819, 1.442695
    %v2831 = vpow.pop %v2830
    %v2832 = vmul.f32 %v2820, 1.442695
    %v2833 = vpow.pop %v2832
    %v2834 = vmul.f32 %v2821, 1.442695
    %v2835 = vpow.pop %v2834
    %v2836 = vmul.f32 %v2822, 1.442695
    %v2837 = vpow.pop %v2836
    %v2838 = vmul.f32 %v2823, 1.442695
    %v2839 = vpow.pop %v2838
    %v2840 = vsel %vm112, %v2825, 0.0
    %v2841 = vrot.slane %v2840, 4
    %v2842 = vadd.f32 %v2840, %v2841
    %v2843 = vrot.slane %v2842, 2
    %v2844 = vadd.f32 %v2842, %v2843
    %v2845 = vrot.slane %v2844, 1
    %v2846 = vadd.f32 %v2844, %v2845
    %v2847 = vsel %vm112, %v2827, 0.0
    %v2848 = vrot.slane %v2847, 4
    %v2849 = vadd.f32 %v2847, %v2848
    %v2850 = vrot.slane %v2849, 2
    %v2851 = vadd.f32 %v2849, %v2850
    %v2852 = vrot.slane %v2851, 1
    %v2853 = vadd.f32 %v2851, %v2852
    %v2854 = vsel %vm112, %v2829, 0.0
    %v2855 = vrot.slane %v2854, 4
    %v2856 = vadd.f32 %v2854, %v2855
    %v2857 = vrot.slane %v2856, 2
    %v2858 = vadd.f32 %v2856, %v2857
    %v2859 = vrot.slane %v2858, 1
    %v2860 = vadd.f32 %v2858, %v2859
    %v2861 = vsel %vm112, %v2831, 0.0
    %v2862 = vrot.slane %v2861, 4
    %v2863 = vadd.f32 %v2861, %v2862
    %v2864 = vrot.slane %v2863, 2
    %v2865 = vadd.f32 %v2863, %v2864
    %v2866 = vrot.slane %v2865, 1
    %v2867 = vadd.f32 %v2865, %v2866
    %v2868 = vsel %vm112, %v2833, 0.0
    %v2869 = vrot.slane %v2868, 4
    %v2870 = vadd.f32 %v2868, %v2869
    %v2871 = vrot.slane %v2870, 2
    %v2872 = vadd.f32 %v2870, %v2871
    %v2873 = vrot.slane %v2872, 1
    %v2874 = vadd.f32 %v2872, %v2873
    %v2875 = vsel %vm112, %v2835, 0.0
    %v2876 = vrot.slane %v2875, 4
    %v2877 = vadd.f32 %v2875, %v2876
    %v2878 = vrot.slane %v2877, 2
    %v2879 = vadd.f32 %v2877, %v2878
    %v2880 = vrot.slane %v2879, 1
    %v2881 = vadd.f32 %v2879, %v2880
    %v2882 = vsel %vm112, %v2837, 0.0
    %v2883 = vrot.slane %v2882, 4
    %v2884 = vadd.f32 %v2882, %v2883
    %v2885 = vrot.slane %v2884, 2
    %v2886 = vadd.f32 %v2884, %v2885
    %v2887 = vrot.slane %v2886, 1
    %v2888 = vadd.f32 %v2886, %v2887
    %v2889 = vsel %vm112, %v2839, 0.0
    %v2890 = vrot.slane %v2889, 4
    %v2891 = vadd.f32 %v2889, %v2890
    %v2892 = vrot.slane %v2891, 2
    %v2893 = vadd.f32 %v2891, %v2892
    %v2894 = vrot.slane %v2893, 1
    %v2895 = vadd.f32 %v2893, %v2894
    %v2896 = vlog2.pop %v2846
    %v2897 = vmul.f32 %v2896, 0.6931472
    %v2898 = vlog2.pop %v2853
    %v2899 = vmul.f32 %v2898, 0.6931472
    %v2900 = vlog2.pop %v2860
    %v2901 = vmul.f32 %v2900, 0.6931472
    %v2902 = vlog2.pop %v2867
    %v2903 = vmul.f32 %v2902, 0.6931472
    %v2904 = vlog2.pop %v2874
    %v2905 = vmul.f32 %v2904, 0.6931472
    %v2906 = vlog2.pop %v2881
    %v2907 = vmul.f32 %v2906, 0.6931472
    %v2908 = vlog2.pop %v2888
    %v2909 = vmul.f32 %v2908, 0.6931472
    %v2910 = vlog2.pop %v2895
    %v2911 = vmul.f32 %v2910, 0.6931472
    %v2912 = vadd.f32 %v2766, %v2897
    %v2913 = vadd.f32 %v2773, %v2899
    %v2914 = vadd.f32 %v2780, %v2901
    %v2915 = vadd.f32 %v2787, %v2903
    %v2916 = vadd.f32 %v2794, %v2905
    %v2917 = vadd.f32 %v2801, %v2907
    %v2918 = vadd.f32 %v2808, %v2909
    %v2919 = vadd.f32 %v2815, %v2911
    %v2920 = vsel %vm2653, 1, 0
    %v2921 = vlaneseq
    %v2922 = vshrl.u32 %v2921, 7
    %v2923 = vsub.s32 0, %v2922
    %v2924 = vrot.slane %v2920, %v2923
    %vm2925 = vcmp.eq.s32.totalorder %v2924, 1
    %v2934 = vsel %vm511, %v2913, %v2912
    %v2935 = vsel %vm513, %v2914, %v2934
    %v2936 = vsel %vm515, %v2915, %v2935
    %v2937 = vsel %vm517, %v2916, %v2936
    %v2938 = vsel %vm519, %v2917, %v2937
    %v2939 = vsel %vm521, %v2918, %v2938
    %v2940 = vsel %vm523, %v2919, %v2939
    %v2942 = vsel %vm2925, %v2940, %v2446
    %v2943 = vadd.f32 %v2744, %v2632
    %v2944 = vadd.f32 %v2745, %v2632
    %v2945 = vadd.f32 %v2746, %v2632
    %v2946 = vadd.f32 %v2747, %v2632
    %v2947 = vadd.f32 %v2748, %v2632
    %v2948 = vadd.f32 %v2749, %v2632
    %v2949 = vadd.f32 %v2750, %v2632
    %v2950 = vadd.f32 %v2751, %v2632
    %v2951 = vsel %vm112, %v2943, -inf
    %v2952 = vrot.slane %v2951, 4
    %v2953 = vmax.f32 %v2951, %v2952
    %v2954 = vrot.slane %v2953, 2
    %v2955 = vmax.f32 %v2953, %v2954
    %v2956 = vrot.slane %v2955, 1
    %v2957 = vmax.f32 %v2955, %v2956
    %v2958 = vsel %vm112, %v2944, -inf
    %v2959 = vrot.slane %v2958, 4
    %v2960 = vmax.f32 %v2958, %v2959
    %v2961 = vrot.slane %v2960, 2
    %v2962 = vmax.f32 %v2960, %v2961
    %v2963 = vrot.slane %v2962, 1
    %v2964 = vmax.f32 %v2962, %v2963
    %v2965 = vsel %vm112, %v2945, -inf
    %v2966 = vrot.slane %v2965, 4
    %v2967 = vmax.f32 %v2965, %v2966
    %v2968 = vrot.slane %v2967, 2
    %v2969 = vmax.f32 %v2967, %v2968
    %v2970 = vrot.slane %v2969, 1
    %v2971 = vmax.f32 %v2969, %v2970
    %v2972 = vsel %vm112, %v2946, -inf
    %v2973 = vrot.slane %v2972, 4
    %v2974 = vmax.f32 %v2972, %v2973
    %v2975 = vrot.slane %v2974, 2
    %v2976 = vmax.f32 %v2974, %v2975
    %v2977 = vrot.slane %v2976, 1
    %v2978 = vmax.f32 %v2976, %v2977
    %v2979 = vsel %vm112, %v2947, -inf
    %v2980 = vrot.slane %v2979, 4
    %v2981 = vmax.f32 %v2979, %v2980
    %v2982 = vrot.slane %v2981, 2
    %v2983 = vmax.f32 %v2981, %v2982
    %v2984 = vrot.slane %v2983, 1
    %v2985 = vmax.f32 %v2983, %v2984
    %v2986 = vsel %vm112, %v2948, -inf
    %v2987 = vrot.slane %v2986, 4
    %v2988 = vmax.f32 %v2986, %v2987
    %v2989 = vrot.slane %v2988, 2
    %v2990 = vmax.f32 %v2988, %v2989
    %v2991 = vrot.slane %v2990, 1
    %v2992 = vmax.f32 %v2990, %v2991
    %v2993 = vsel %vm112, %v2949, -inf
    %v2994 = vrot.slane %v2993, 4
    %v2995 = vmax.f32 %v2993, %v2994
    %v2996 = vrot.slane %v2995, 2
    %v2997 = vmax.f32 %v2995, %v2996
    %v2998 = vrot.slane %v2997, 1
    %v2999 = vmax.f32 %v2997, %v2998
    %v3000 = vsel %vm112, %v2950, -inf
    %v3001 = vrot.slane %v3000, 4
    %v3002 = vmax.f32 %v3000, %v3001
    %v3003 = vrot.slane %v3002, 2
    %v3004 = vmax.f32 %v3002, %v3003
    %v3005 = vrot.slane %v3004, 1
    %v3006 = vmax.f32 %v3004, %v3005
    %vm3007 = vcmp.eq.f32.partialorder %v2943, %v2957
    %vm3008 = vcmp.eq.f32.partialorder %v2944, %v2964
    %vm3009 = vcmp.eq.f32.partialorder %v2945, %v2971
    %vm3010 = vcmp.eq.f32.partialorder %v2946, %v2978
    %vm3011 = vcmp.eq.f32.partialorder %v2947, %v2985
    %vm3012 = vcmp.eq.f32.partialorder %v2948, %v2992
    %vm3013 = vcmp.eq.f32.partialorder %v2949, %v2999
    %vm3014 = vcmp.eq.f32.partialorder %v2950, %v3006
    %v3015 = vsel %vm3007, %v44, 8
    %v3016 = vsel %vm3008, %v44, 8
    %v3017 = vsel %vm3009, %v44, 8
    %v3018 = vsel %vm3010, %v44, 8
    %v3019 = vsel %vm3011, %v44, 8
    %v3020 = vsel %vm3012, %v44, 8
    %v3021 = vsel %vm3013, %v44, 8
    %v3022 = vsel %vm3014, %v44, 8
    %v3023 = vsel %vm112, %v3015, 2147483647
    %v3024 = vrot.slane %v3023, 4
    %vm3025 = vcmp.lt.s32.totalorder %v3023, %v3024
    %v3026 = vsel %vm3025, %v3023, %v3024
    %v3027 = vrot.slane %v3026, 2
    %vm3028 = vcmp.lt.s32.totalorder %v3026, %v3027
    %v3029 = vsel %vm3028, %v3026, %v3027
    %v3030 = vrot.slane %v3029, 1
    %vm3031 = vcmp.lt.s32.totalorder %v3029, %v3030
    %v3032 = vsel %vm3031, %v3029, %v3030
    %v3033 = vsel %vm112, %v3016, 2147483647
    %v3034 = vrot.slane %v3033, 4
    %vm3035 = vcmp.lt.s32.totalorder %v3033, %v3034
    %v3036 = vsel %vm3035, %v3033, %v3034
    %v3037 = vrot.slane %v3036, 2
    %vm3038 = vcmp.lt.s32.totalorder %v3036, %v3037
    %v3039 = vsel %vm3038, %v3036, %v3037
    %v3040 = vrot.slane %v3039, 1
    %vm3041 = vcmp.lt.s32.totalorder %v3039, %v3040
    %v3042 = vsel %vm3041, %v3039, %v3040
    %v3043 = vsel %vm112, %v3017, 2147483647
    %v3044 = vrot.slane %v3043, 4
    %vm3045 = vcmp.lt.s32.totalorder %v3043, %v3044
    %v3046 = vsel %vm3045, %v3043, %v3044
    %v3047 = vrot.slane %v3046, 2
    %vm3048 = vcmp.lt.s32.totalorder %v3046, %v3047
    %v3049 = vsel %vm3048, %v3046, %v3047
    %v3050 = vrot.slane %v3049, 1
    %vm3051 = vcmp.lt.s32.totalorder %v3049, %v3050
    %v3052 = vsel %vm3051, %v3049, %v3050
    %v3053 = vsel %vm112, %v3018, 2147483647
    %v3054 = vrot.slane %v3053, 4
    %vm3055 = vcmp.lt.s32.totalorder %v3053, %v3054
    %v3056 = vsel %vm3055, %v3053, %v3054
    %v3057 = vrot.slane %v3056, 2
    %vm3058 = vcmp.lt.s32.totalorder %v3056, %v3057
    %v3059 = vsel %vm3058, %v3056, %v3057
    %v3060 = vrot.slane %v3059, 1
    %vm3061 = vcmp.lt.s32.totalorder %v3059, %v3060
    %v3062 = vsel %vm3061, %v3059, %v3060
    %v3063 = vsel %vm112, %v3019, 2147483647
    %v3064 = vrot.slane %v3063, 4
    %vm3065 = vcmp.lt.s32.totalorder %v3063, %v3064
    %v3066 = vsel %vm3065, %v3063, %v3064
    %v3067 = vrot.slane %v3066, 2
    %vm3068 = vcmp.lt.s32.totalorder %v3066, %v3067
    %v3069 = vsel %vm3068, %v3066, %v3067
    %v3070 = vrot.slane %v3069, 1
    %vm3071 = vcmp.lt.s32.totalorder %v3069, %v3070
    %v3072 = vsel %vm3071, %v3069, %v3070
    %v3073 = vsel %vm112, %v3020, 2147483647
    %v3074 = vrot.slane %v3073, 4
    %vm3075 = vcmp.lt.s32.totalorder %v3073, %v3074
    %v3076 = vsel %vm3075, %v3073, %v3074
    %v3077 = vrot.slane %v3076, 2
    %vm3078 = vcmp.lt.s32.totalorder %v3076, %v3077
    %v3079 = vsel %vm3078, %v3076, %v3077
    %v3080 = vrot.slane %v3079, 1
    %vm3081 = vcmp.lt.s32.totalorder %v3079, %v3080
    %v3082 = vsel %vm3081, %v3079, %v3080
    %v3083 = vsel %vm112, %v3021, 2147483647
    %v3084 = vrot.slane %v3083, 4
    %vm3085 = vcmp.lt.s32.totalorder %v3083, %v3084
    %v3086 = vsel %vm3085, %v3083, %v3084
    %v3087 = vrot.slane %v3086, 2
    %vm3088 = vcmp.lt.s32.totalorder %v3086, %v3087
    %v3089 = vsel %vm3088, %v3086, %v3087
    %v3090 = vrot.slane %v3089, 1
    %vm3091 = vcmp.lt.s32.totalorder %v3089, %v3090
    %v3092 = vsel %vm3091, %v3089, %v3090
    %v3093 = vsel %vm112, %v3022, 2147483647
    %v3094 = vrot.slane %v3093, 4
    %vm3095 = vcmp.lt.s32.totalorder %v3093, %v3094
    %v3096 = vsel %vm3095, %v3093, %v3094
    %v3097 = vrot.slane %v3096, 2
    %vm3098 = vcmp.lt.s32.totalorder %v3096, %v3097
    %v3099 = vsel %vm3098, %v3096, %v3097
    %v3100 = vrot.slane %v3099, 1
    %vm3101 = vcmp.lt.s32.totalorder %v3099, %v3100
    %v3102 = vsel %vm3101, %v3099, %v3100
    %v3103 = vsel %vm511, %v3042, %v3032
    %v3104 = vsel %vm513, %v3052, %v3103
    %v3105 = vsel %vm515, %v3062, %v3104
    %v3106 = vsel %vm517, %v3072, %v3105
    %v3107 = vsel %vm519, %v3082, %v3106
    %v3108 = vsel %vm521, %v3092, %v3107
    %v3109 = vsel %vm523, %v3102, %v3108
    %s3110 = scalar_lea.vmem [#allocation3], 48
    %3111 = vst.msk [vmem:[%s3110] sm:$0xff] %vm112, %v3109
    %v3120 = vsel %vm511, %v2964, %v2957
    %v3121 = vsel %vm513, %v2971, %v3120
    %v3122 = vsel %vm515, %v2978, %v3121
    %v3123 = vsel %vm517, %v2985, %v3122
    %v3124 = vsel %vm519, %v2992, %v3123
    %v3125 = vsel %vm521, %v2999, %v3124
    %v3126 = vsel %vm523, %v3006, %v3125
    %v3128 = vsel %vm2925, %v3126, %v2632
    %s3129 = scalar_lea.vmem %s6, 6
    %v3130 = vld [vmem:[%s3129] sm:$0x1]
    %v3131 = vlaneseq
    %v3132 = vshrl.u32 %v3131, 7
    %v3133 = vsub.s32 0, %v3132
    %v3134 = vrot.slane %v3130, %v3133
    %vm3135 = vcmp.eq.s32.totalorder %v44, %v3134
    %v3136 = vsel %vm3135, %v2650, 0.0
    %v3137 = vsel %vm112, %v3136, 0.0
    %v3138 = vrot.slane %v3137, 4
    %v3139 = vadd.f32 %v3137, %v3138
    %v3140 = vrot.slane %v3139, 2
    %v3141 = vadd.f32 %v3139, %v3140
    %v3142 = vrot.slane %v3141, 1
    %v3143 = vadd.f32 %v3141, %v3142
    %v3144 = vmul.f32 %v2652, %v3143
    %v3145 = vadd.f32 %v2649, %v3144
    %v3146 = vld [vmem:[%s148] sm:$0xff]
    %s3147 = scalar_lea.vmem %s7, 7
    %v3148 = vld [vmem:[%s3147] sm:$0x1]
    %vm3149 = vcmp.gt.f32.partialorder %v3148, 0.5
    %v3151 = vcombine.high %v3146, %v3146
    %v3153 = vunpack.c.l.s4 1966171168
    %v3154 = vunpack.c.0.s8 %v3153
    %v3155 = vlaneseq
    %v3156 = vshrl.u32 %v3155, 7
    %v3157 = vsub.s32 %v3154, %v3156
    %v3158 = vrot.slane %v3146, %v3157
    %v3160 = vunpack.c.l.s4 1966171168
    %v3161 = vunpack.c.0.s8 %v3160
    %v3162 = vlaneseq
    %v3163 = vshrl.u32 %v3162, 7
    %v3164 = vsub.s32 %v3161, %v3163
    %v3165 = vrot.slane %v3151, %v3164
    %v3166 = vcombine.high %v3158, %v3158
    %v3167 = vcombine.high %v3165, %v3165
    %v3169 = vunpack.c.l.s4 1966171168
    %v3170 = vunpack.c.0.s8 %v3169
    %v3171 = vlaneseq
    %v3172 = vshrl.u32 %v3171, 7
    %v3173 = vsub.s32 %v3170, %v3172
    %v3174 = vrot.slane %v3158, %v3173
    %v3176 = vunpack.c.l.s4 1966171168
    %v3177 = vunpack.c.0.s8 %v3176
    %v3178 = vlaneseq
    %v3179 = vshrl.u32 %v3178, 7
    %v3180 = vsub.s32 %v3177, %v3179
    %v3181 = vrot.slane %v3165, %v3180
    %v3183 = vunpack.c.l.s4 1966171168
    %v3184 = vunpack.c.0.s8 %v3183
    %v3185 = vlaneseq
    %v3186 = vshrl.u32 %v3185, 7
    %v3187 = vsub.s32 %v3184, %v3186
    %v3188 = vrot.slane %v3166, %v3187
    %v3190 = vunpack.c.l.s4 1966171168
    %v3191 = vunpack.c.0.s8 %v3190
    %v3192 = vlaneseq
    %v3193 = vshrl.u32 %v3192, 7
    %v3194 = vsub.s32 %v3191, %v3193
    %v3195 = vrot.slane %v3167, %v3194
    %v3196 = vcombine.high %v3174, %v3174
    %v3197 = vcombine.high %v3181, %v3181
    %v3198 = vcombine.high %v3188, %v3188
    %v3199 = vcombine.high %v3195, %v3195
    %v3200 = vlaneseq
    %v3201 = vshrl.u32 %v3200, 7
    %v3202 = vsub.s32 0, %v3201
    %v3203 = vrot.slane %v3174, %v3202
    %v3204 = vlaneseq
    %v3205 = vshrl.u32 %v3204, 7
    %v3206 = vsub.s32 0, %v3205
    %v3207 = vrot.slane %v3188, %v3206
    %v3208 = vlaneseq
    %v3209 = vshrl.u32 %v3208, 7
    %v3210 = vsub.s32 0, %v3209
    %v3211 = vrot.slane %v3196, %v3210
    %v3212 = vlaneseq
    %v3213 = vshrl.u32 %v3212, 7
    %v3214 = vsub.s32 0, %v3213
    %v3215 = vrot.slane %v3198, %v3214
    %v3216 = vlaneseq
    %v3217 = vshrl.u32 %v3216, 7
    %v3218 = vsub.s32 0, %v3217
    %v3219 = vrot.slane %v3181, %v3218
    %v3220 = vlaneseq
    %v3221 = vshrl.u32 %v3220, 7
    %v3222 = vsub.s32 0, %v3221
    %v3223 = vrot.slane %v3195, %v3222
    %v3224 = vlaneseq
    %v3225 = vshrl.u32 %v3224, 7
    %v3226 = vsub.s32 0, %v3225
    %v3227 = vrot.slane %v3197, %v3226
    %v3228 = vlaneseq
    %v3229 = vshrl.u32 %v3228, 7
    %v3230 = vsub.s32 0, %v3229
    %v3231 = vrot.slane %v3199, %v3230
    %v3240 = vadd.f32 %v3203, %v231
    %v3241 = vadd.f32 %v3207, %v238
    %v3242 = vadd.f32 %v3211, %v245
    %v3243 = vadd.f32 %v3215, %v252
    %v3244 = vadd.f32 %v3219, %v259
    %v3245 = vadd.f32 %v3223, %v266
    %v3246 = vadd.f32 %v3227, %v273
    %v3247 = vadd.f32 %v3231, %v280
    %v3248 = vadd.f32 %v3240, %v2942
    %v3249 = vadd.f32 %v3241, %v2942
    %v3250 = vadd.f32 %v3242, %v2942
    %v3251 = vadd.f32 %v3243, %v2942
    %v3252 = vadd.f32 %v3244, %v2942
    %v3253 = vadd.f32 %v3245, %v2942
    %v3254 = vadd.f32 %v3246, %v2942
    %v3255 = vadd.f32 %v3247, %v2942
    %v3256 = vsel %vm112, %v3248, -inf
    %v3257 = vrot.slane %v3256, 4
    %v3258 = vmax.f32 %v3256, %v3257
    %v3259 = vrot.slane %v3258, 2
    %v3260 = vmax.f32 %v3258, %v3259
    %v3261 = vrot.slane %v3260, 1
    %v3262 = vmax.f32 %v3260, %v3261
    %v3263 = vsel %vm112, %v3249, -inf
    %v3264 = vrot.slane %v3263, 4
    %v3265 = vmax.f32 %v3263, %v3264
    %v3266 = vrot.slane %v3265, 2
    %v3267 = vmax.f32 %v3265, %v3266
    %v3268 = vrot.slane %v3267, 1
    %v3269 = vmax.f32 %v3267, %v3268
    %v3270 = vsel %vm112, %v3250, -inf
    %v3271 = vrot.slane %v3270, 4
    %v3272 = vmax.f32 %v3270, %v3271
    %v3273 = vrot.slane %v3272, 2
    %v3274 = vmax.f32 %v3272, %v3273
    %v3275 = vrot.slane %v3274, 1
    %v3276 = vmax.f32 %v3274, %v3275
    %v3277 = vsel %vm112, %v3251, -inf
    %v3278 = vrot.slane %v3277, 4
    %v3279 = vmax.f32 %v3277, %v3278
    %v3280 = vrot.slane %v3279, 2
    %v3281 = vmax.f32 %v3279, %v3280
    %v3282 = vrot.slane %v3281, 1
    %v3283 = vmax.f32 %v3281, %v3282
    %v3284 = vsel %vm112, %v3252, -inf
    %v3285 = vrot.slane %v3284, 4
    %v3286 = vmax.f32 %v3284, %v3285
    %v3287 = vrot.slane %v3286, 2
    %v3288 = vmax.f32 %v3286, %v3287
    %v3289 = vrot.slane %v3288, 1
    %v3290 = vmax.f32 %v3288, %v3289
    %v3291 = vsel %vm112, %v3253, -inf
    %v3292 = vrot.slane %v3291, 4
    %v3293 = vmax.f32 %v3291, %v3292
    %v3294 = vrot.slane %v3293, 2
    %v3295 = vmax.f32 %v3293, %v3294
    %v3296 = vrot.slane %v3295, 1
    %v3297 = vmax.f32 %v3295, %v3296
    %v3298 = vsel %vm112, %v3254, -inf
    %v3299 = vrot.slane %v3298, 4
    %v3300 = vmax.f32 %v3298, %v3299
    %v3301 = vrot.slane %v3300, 2
    %v3302 = vmax.f32 %v3300, %v3301
    %v3303 = vrot.slane %v3302, 1
    %v3304 = vmax.f32 %v3302, %v3303
    %v3305 = vsel %vm112, %v3255, -inf
    %v3306 = vrot.slane %v3305, 4
    %v3307 = vmax.f32 %v3305, %v3306
    %v3308 = vrot.slane %v3307, 2
    %v3309 = vmax.f32 %v3307, %v3308
    %v3310 = vrot.slane %v3309, 1
    %v3311 = vmax.f32 %v3309, %v3310
    %v3312 = vsub.f32 %v3248, %v3262
    %v3313 = vsub.f32 %v3249, %v3269
    %v3314 = vsub.f32 %v3250, %v3276
    %v3315 = vsub.f32 %v3251, %v3283
    %v3316 = vsub.f32 %v3252, %v3290
    %v3317 = vsub.f32 %v3253, %v3297
    %v3318 = vsub.f32 %v3254, %v3304
    %v3319 = vsub.f32 %v3255, %v3311
    %v3320 = vmul.f32 %v3312, 1.442695
    %v3321 = vpow.pop %v3320
    %v3322 = vmul.f32 %v3313, 1.442695
    %v3323 = vpow.pop %v3322
    %v3324 = vmul.f32 %v3314, 1.442695
    %v3325 = vpow.pop %v3324
    %v3326 = vmul.f32 %v3315, 1.442695
    %v3327 = vpow.pop %v3326
    %v3328 = vmul.f32 %v3316, 1.442695
    %v3329 = vpow.pop %v3328
    %v3330 = vmul.f32 %v3317, 1.442695
    %v3331 = vpow.pop %v3330
    %v3332 = vmul.f32 %v3318, 1.442695
    %v3333 = vpow.pop %v3332
    %v3334 = vmul.f32 %v3319, 1.442695
    %v3335 = vpow.pop %v3334
    %v3336 = vsel %vm112, %v3321, 0.0
    %v3337 = vrot.slane %v3336, 4
    %v3338 = vadd.f32 %v3336, %v3337
    %v3339 = vrot.slane %v3338, 2
    %v3340 = vadd.f32 %v3338, %v3339
    %v3341 = vrot.slane %v3340, 1
    %v3342 = vadd.f32 %v3340, %v3341
    %v3343 = vsel %vm112, %v3323, 0.0
    %v3344 = vrot.slane %v3343, 4
    %v3345 = vadd.f32 %v3343, %v3344
    %v3346 = vrot.slane %v3345, 2
    %v3347 = vadd.f32 %v3345, %v3346
    %v3348 = vrot.slane %v3347, 1
    %v3349 = vadd.f32 %v3347, %v3348
    %v3350 = vsel %vm112, %v3325, 0.0
    %v3351 = vrot.slane %v3350, 4
    %v3352 = vadd.f32 %v3350, %v3351
    %v3353 = vrot.slane %v3352, 2
    %v3354 = vadd.f32 %v3352, %v3353
    %v3355 = vrot.slane %v3354, 1
    %v3356 = vadd.f32 %v3354, %v3355
    %v3357 = vsel %vm112, %v3327, 0.0
    %v3358 = vrot.slane %v3357, 4
    %v3359 = vadd.f32 %v3357, %v3358
    %v3360 = vrot.slane %v3359, 2
    %v3361 = vadd.f32 %v3359, %v3360
    %v3362 = vrot.slane %v3361, 1
    %v3363 = vadd.f32 %v3361, %v3362
    %v3364 = vsel %vm112, %v3329, 0.0
    %v3365 = vrot.slane %v3364, 4
    %v3366 = vadd.f32 %v3364, %v3365
    %v3367 = vrot.slane %v3366, 2
    %v3368 = vadd.f32 %v3366, %v3367
    %v3369 = vrot.slane %v3368, 1
    %v3370 = vadd.f32 %v3368, %v3369
    %v3371 = vsel %vm112, %v3331, 0.0
    %v3372 = vrot.slane %v3371, 4
    %v3373 = vadd.f32 %v3371, %v3372
    %v3374 = vrot.slane %v3373, 2
    %v3375 = vadd.f32 %v3373, %v3374
    %v3376 = vrot.slane %v3375, 1
    %v3377 = vadd.f32 %v3375, %v3376
    %v3378 = vsel %vm112, %v3333, 0.0
    %v3379 = vrot.slane %v3378, 4
    %v3380 = vadd.f32 %v3378, %v3379
    %v3381 = vrot.slane %v3380, 2
    %v3382 = vadd.f32 %v3380, %v3381
    %v3383 = vrot.slane %v3382, 1
    %v3384 = vadd.f32 %v3382, %v3383
    %v3385 = vsel %vm112, %v3335, 0.0
    %v3386 = vrot.slane %v3385, 4
    %v3387 = vadd.f32 %v3385, %v3386
    %v3388 = vrot.slane %v3387, 2
    %v3389 = vadd.f32 %v3387, %v3388
    %v3390 = vrot.slane %v3389, 1
    %v3391 = vadd.f32 %v3389, %v3390
    %v3392 = vlog2.pop %v3342
    %v3393 = vmul.f32 %v3392, 0.6931472
    %v3394 = vlog2.pop %v3349
    %v3395 = vmul.f32 %v3394, 0.6931472
    %v3396 = vlog2.pop %v3356
    %v3397 = vmul.f32 %v3396, 0.6931472
    %v3398 = vlog2.pop %v3363
    %v3399 = vmul.f32 %v3398, 0.6931472
    %v3400 = vlog2.pop %v3370
    %v3401 = vmul.f32 %v3400, 0.6931472
    %v3402 = vlog2.pop %v3377
    %v3403 = vmul.f32 %v3402, 0.6931472
    %v3404 = vlog2.pop %v3384
    %v3405 = vmul.f32 %v3404, 0.6931472
    %v3406 = vlog2.pop %v3391
    %v3407 = vmul.f32 %v3406, 0.6931472
    %v3408 = vadd.f32 %v3262, %v3393
    %v3409 = vadd.f32 %v3269, %v3395
    %v3410 = vadd.f32 %v3276, %v3397
    %v3411 = vadd.f32 %v3283, %v3399
    %v3412 = vadd.f32 %v3290, %v3401
    %v3413 = vadd.f32 %v3297, %v3403
    %v3414 = vadd.f32 %v3304, %v3405
    %v3415 = vadd.f32 %v3311, %v3407
    %v3416 = vsel %vm3149, 1, 0
    %v3417 = vlaneseq
    %v3418 = vshrl.u32 %v3417, 7
    %v3419 = vsub.s32 0, %v3418
    %v3420 = vrot.slane %v3416, %v3419
    %vm3421 = vcmp.eq.s32.totalorder %v3420, 1
    %v3430 = vsel %vm511, %v3409, %v3408
    %v3431 = vsel %vm513, %v3410, %v3430
    %v3432 = vsel %vm515, %v3411, %v3431
    %v3433 = vsel %vm517, %v3412, %v3432
    %v3434 = vsel %vm519, %v3413, %v3433
    %v3435 = vsel %vm521, %v3414, %v3434
    %v3436 = vsel %vm523, %v3415, %v3435
    %v3438 = vsel %vm3421, %v3436, %v2942
    %v3439 = vadd.f32 %v3240, %v3128
    %v3440 = vadd.f32 %v3241, %v3128
    %v3441 = vadd.f32 %v3242, %v3128
    %v3442 = vadd.f32 %v3243, %v3128
    %v3443 = vadd.f32 %v3244, %v3128
    %v3444 = vadd.f32 %v3245, %v3128
    %v3445 = vadd.f32 %v3246, %v3128
    %v3446 = vadd.f32 %v3247, %v3128
    %v3447 = vsel %vm112, %v3439, -inf
    %v3448 = vrot.slane %v3447, 4
    %v3449 = vmax.f32 %v3447, %v3448
    %v3450 = vrot.slane %v3449, 2
    %v3451 = vmax.f32 %v3449, %v3450
    %v3452 = vrot.slane %v3451, 1
    %v3453 = vmax.f32 %v3451, %v3452
    %v3454 = vsel %vm112, %v3440, -inf
    %v3455 = vrot.slane %v3454, 4
    %v3456 = vmax.f32 %v3454, %v3455
    %v3457 = vrot.slane %v3456, 2
    %v3458 = vmax.f32 %v3456, %v3457
    %v3459 = vrot.slane %v3458, 1
    %v3460 = vmax.f32 %v3458, %v3459
    %v3461 = vsel %vm112, %v3441, -inf
    %v3462 = vrot.slane %v3461, 4
    %v3463 = vmax.f32 %v3461, %v3462
    %v3464 = vrot.slane %v3463, 2
    %v3465 = vmax.f32 %v3463, %v3464
    %v3466 = vrot.slane %v3465, 1
    %v3467 = vmax.f32 %v3465, %v3466
    %v3468 = vsel %vm112, %v3442, -inf
    %v3469 = vrot.slane %v3468, 4
    %v3470 = vmax.f32 %v3468, %v3469
    %v3471 = vrot.slane %v3470, 2
    %v3472 = vmax.f32 %v3470, %v3471
    %v3473 = vrot.slane %v3472, 1
    %v3474 = vmax.f32 %v3472, %v3473
    %v3475 = vsel %vm112, %v3443, -inf
    %v3476 = vrot.slane %v3475, 4
    %v3477 = vmax.f32 %v3475, %v3476
    %v3478 = vrot.slane %v3477, 2
    %v3479 = vmax.f32 %v3477, %v3478
    %v3480 = vrot.slane %v3479, 1
    %v3481 = vmax.f32 %v3479, %v3480
    %v3482 = vsel %vm112, %v3444, -inf
    %v3483 = vrot.slane %v3482, 4
    %v3484 = vmax.f32 %v3482, %v3483
    %v3485 = vrot.slane %v3484, 2
    %v3486 = vmax.f32 %v3484, %v3485
    %v3487 = vrot.slane %v3486, 1
    %v3488 = vmax.f32 %v3486, %v3487
    %v3489 = vsel %vm112, %v3445, -inf
    %v3490 = vrot.slane %v3489, 4
    %v3491 = vmax.f32 %v3489, %v3490
    %v3492 = vrot.slane %v3491, 2
    %v3493 = vmax.f32 %v3491, %v3492
    %v3494 = vrot.slane %v3493, 1
    %v3495 = vmax.f32 %v3493, %v3494
    %v3496 = vsel %vm112, %v3446, -inf
    %v3497 = vrot.slane %v3496, 4
    %v3498 = vmax.f32 %v3496, %v3497
    %v3499 = vrot.slane %v3498, 2
    %v3500 = vmax.f32 %v3498, %v3499
    %v3501 = vrot.slane %v3500, 1
    %v3502 = vmax.f32 %v3500, %v3501
    %vm3503 = vcmp.eq.f32.partialorder %v3439, %v3453
    %vm3504 = vcmp.eq.f32.partialorder %v3440, %v3460
    %vm3505 = vcmp.eq.f32.partialorder %v3441, %v3467
    %vm3506 = vcmp.eq.f32.partialorder %v3442, %v3474
    %vm3507 = vcmp.eq.f32.partialorder %v3443, %v3481
    %vm3508 = vcmp.eq.f32.partialorder %v3444, %v3488
    %vm3509 = vcmp.eq.f32.partialorder %v3445, %v3495
    %vm3510 = vcmp.eq.f32.partialorder %v3446, %v3502
    %v3511 = vsel %vm3503, %v44, 8
    %v3512 = vsel %vm3504, %v44, 8
    %v3513 = vsel %vm3505, %v44, 8
    %v3514 = vsel %vm3506, %v44, 8
    %v3515 = vsel %vm3507, %v44, 8
    %v3516 = vsel %vm3508, %v44, 8
    %v3517 = vsel %vm3509, %v44, 8
    %v3518 = vsel %vm3510, %v44, 8
    %v3519 = vsel %vm112, %v3511, 2147483647
    %v3520 = vrot.slane %v3519, 4
    %vm3521 = vcmp.lt.s32.totalorder %v3519, %v3520
    %v3522 = vsel %vm3521, %v3519, %v3520
    %v3523 = vrot.slane %v3522, 2
    %vm3524 = vcmp.lt.s32.totalorder %v3522, %v3523
    %v3525 = vsel %vm3524, %v3522, %v3523
    %v3526 = vrot.slane %v3525, 1
    %vm3527 = vcmp.lt.s32.totalorder %v3525, %v3526
    %v3528 = vsel %vm3527, %v3525, %v3526
    %v3529 = vsel %vm112, %v3512, 2147483647
    %v3530 = vrot.slane %v3529, 4
    %vm3531 = vcmp.lt.s32.totalorder %v3529, %v3530
    %v3532 = vsel %vm3531, %v3529, %v3530
    %v3533 = vrot.slane %v3532, 2
    %vm3534 = vcmp.lt.s32.totalorder %v3532, %v3533
    %v3535 = vsel %vm3534, %v3532, %v3533
    %v3536 = vrot.slane %v3535, 1
    %vm3537 = vcmp.lt.s32.totalorder %v3535, %v3536
    %v3538 = vsel %vm3537, %v3535, %v3536
    %v3539 = vsel %vm112, %v3513, 2147483647
    %v3540 = vrot.slane %v3539, 4
    %vm3541 = vcmp.lt.s32.totalorder %v3539, %v3540
    %v3542 = vsel %vm3541, %v3539, %v3540
    %v3543 = vrot.slane %v3542, 2
    %vm3544 = vcmp.lt.s32.totalorder %v3542, %v3543
    %v3545 = vsel %vm3544, %v3542, %v3543
    %v3546 = vrot.slane %v3545, 1
    %vm3547 = vcmp.lt.s32.totalorder %v3545, %v3546
    %v3548 = vsel %vm3547, %v3545, %v3546
    %v3549 = vsel %vm112, %v3514, 2147483647
    %v3550 = vrot.slane %v3549, 4
    %vm3551 = vcmp.lt.s32.totalorder %v3549, %v3550
    %v3552 = vsel %vm3551, %v3549, %v3550
    %v3553 = vrot.slane %v3552, 2
    %vm3554 = vcmp.lt.s32.totalorder %v3552, %v3553
    %v3555 = vsel %vm3554, %v3552, %v3553
    %v3556 = vrot.slane %v3555, 1
    %vm3557 = vcmp.lt.s32.totalorder %v3555, %v3556
    %v3558 = vsel %vm3557, %v3555, %v3556
    %v3559 = vsel %vm112, %v3515, 2147483647
    %v3560 = vrot.slane %v3559, 4
    %vm3561 = vcmp.lt.s32.totalorder %v3559, %v3560
    %v3562 = vsel %vm3561, %v3559, %v3560
    %v3563 = vrot.slane %v3562, 2
    %vm3564 = vcmp.lt.s32.totalorder %v3562, %v3563
    %v3565 = vsel %vm3564, %v3562, %v3563
    %v3566 = vrot.slane %v3565, 1
    %vm3567 = vcmp.lt.s32.totalorder %v3565, %v3566
    %v3568 = vsel %vm3567, %v3565, %v3566
    %v3569 = vsel %vm112, %v3516, 2147483647
    %v3570 = vrot.slane %v3569, 4
    %vm3571 = vcmp.lt.s32.totalorder %v3569, %v3570
    %v3572 = vsel %vm3571, %v3569, %v3570
    %v3573 = vrot.slane %v3572, 2
    %vm3574 = vcmp.lt.s32.totalorder %v3572, %v3573
    %v3575 = vsel %vm3574, %v3572, %v3573
    %v3576 = vrot.slane %v3575, 1
    %vm3577 = vcmp.lt.s32.totalorder %v3575, %v3576
    %v3578 = vsel %vm3577, %v3575, %v3576
    %v3579 = vsel %vm112, %v3517, 2147483647
    %v3580 = vrot.slane %v3579, 4
    %vm3581 = vcmp.lt.s32.totalorder %v3579, %v3580
    %v3582 = vsel %vm3581, %v3579, %v3580
    %v3583 = vrot.slane %v3582, 2
    %vm3584 = vcmp.lt.s32.totalorder %v3582, %v3583
    %v3585 = vsel %vm3584, %v3582, %v3583
    %v3586 = vrot.slane %v3585, 1
    %vm3587 = vcmp.lt.s32.totalorder %v3585, %v3586
    %v3588 = vsel %vm3587, %v3585, %v3586
    %v3589 = vsel %vm112, %v3518, 2147483647
    %v3590 = vrot.slane %v3589, 4
    %vm3591 = vcmp.lt.s32.totalorder %v3589, %v3590
    %v3592 = vsel %vm3591, %v3589, %v3590
    %v3593 = vrot.slane %v3592, 2
    %vm3594 = vcmp.lt.s32.totalorder %v3592, %v3593
    %v3595 = vsel %vm3594, %v3592, %v3593
    %v3596 = vrot.slane %v3595, 1
    %vm3597 = vcmp.lt.s32.totalorder %v3595, %v3596
    %v3598 = vsel %vm3597, %v3595, %v3596
    %v3599 = vsel %vm511, %v3538, %v3528
    %v3600 = vsel %vm513, %v3548, %v3599
    %v3601 = vsel %vm515, %v3558, %v3600
    %v3602 = vsel %vm517, %v3568, %v3601
    %v3603 = vsel %vm519, %v3578, %v3602
    %v3604 = vsel %vm521, %v3588, %v3603
    %v3605 = vsel %vm523, %v3598, %v3604
    %s3606 = scalar_lea.vmem [#allocation3], 56
    %3607 = vst.msk [vmem:[%s3606] sm:$0xff] %vm112, %v3605
    %v3616 = vsel %vm511, %v3460, %v3453
    %v3617 = vsel %vm513, %v3467, %v3616
    %v3618 = vsel %vm515, %v3474, %v3617
    %v3619 = vsel %vm517, %v3481, %v3618
    %v3620 = vsel %vm519, %v3488, %v3619
    %v3621 = vsel %vm521, %v3495, %v3620
    %v3622 = vsel %vm523, %v3502, %v3621
    %v3624 = vsel %vm3421, %v3622, %v3128
    %s3625 = scalar_lea.vmem %s6, 7
    %v3626 = vld [vmem:[%s3625] sm:$0x1]
    %v3627 = vlaneseq
    %v3628 = vshrl.u32 %v3627, 7
    %v3629 = vsub.s32 0, %v3628
    %v3630 = vrot.slane %v3626, %v3629
    %vm3631 = vcmp.eq.s32.totalorder %v44, %v3630
    %v3632 = vsel %vm3631, %v3146, 0.0
    %v3633 = vsel %vm112, %v3632, 0.0
    %v3634 = vrot.slane %v3633, 4
    %v3635 = vadd.f32 %v3633, %v3634
    %v3636 = vrot.slane %v3635, 2
    %v3637 = vadd.f32 %v3635, %v3636
    %v3638 = vrot.slane %v3637, 1
    %v3639 = vadd.f32 %v3637, %v3638
    %v3640 = vmul.f32 %v3148, %v3639
    %v3641 = vadd.f32 %v3145, %v3640
    %3643 = vset.pattern.permute.xlu0 0
    %3644 = vperm.xlu0 %3643, %v41
    %v3645 = vpop.permute.xlu0 %3644
    %v3647 = vadd.f32 %v3438, %v3645
    %v3648 = vsel %vm112, %v3647, -inf
    %v3649 = vrot.slane %v3648, 4
    %v3650 = vmax.f32 %v3648, %v3649
    %v3651 = vrot.slane %v3650, 2
    %v3652 = vmax.f32 %v3650, %v3651
    %v3653 = vrot.slane %v3652, 1
    %v3654 = vmax.f32 %v3652, %v3653
    %v3655 = vsub.f32 %v3647, %v3654
    %v3656 = vmul.f32 %v3655, 1.442695
    %v3657 = vpow.pop %v3656
    %v3658 = vsel %vm112, %v3657, 0.0
    %v3659 = vrot.slane %v3658, 4
    %v3660 = vadd.f32 %v3658, %v3659
    %v3661 = vrot.slane %v3660, 2
    %v3662 = vadd.f32 %v3660, %v3661
    %v3663 = vrot.slane %v3662, 1
    %v3664 = vadd.f32 %v3662, %v3663
    %v3665 = vlog2.pop %v3664
    %v3666 = vmul.f32 %v3665, 0.6931472
    %v3667 = vadd.f32 %v3654, %v3666
    %v3668 = vld [vmem:[%s9] sm:$0x1]
    %v3669 = vadd.f32 %v3668, %v3641
    %v3670 = vsub.f32 %v3669, %v3667
    %vm3671 = vcmask 24576
    %3672 = vst.msk [vmem:[#allocation5] sm:$0x1] %vm3671, %v3670
    %v3673 = vadd.f32 %v3624, %v3645
    %v3674 = vsel %vm112, %v3673, -inf
    %v3675 = vrot.slane %v3674, 4
    %v3676 = vmax.f32 %v3674, %v3675
    %v3677 = vrot.slane %v3676, 2
    %v3678 = vmax.f32 %v3676, %v3677
    %v3679 = vrot.slane %v3678, 1
    %v3680 = vmax.f32 %v3678, %v3679
    %vm3681 = vcmp.eq.f32.partialorder %v3673, %v3680
    %v3682 = vsel %vm3681, %v44, 8
    %v3683 = vsel %vm112, %v3682, 2147483647
    %v3684 = vrot.slane %v3683, 4
    %vm3685 = vcmp.lt.s32.totalorder %v3683, %v3684
    %v3686 = vsel %vm3685, %v3683, %v3684
    %v3687 = vrot.slane %v3686, 2
    %vm3688 = vcmp.lt.s32.totalorder %v3686, %v3687
    %v3689 = vsel %vm3688, %v3686, %v3687
    %v3690 = vrot.slane %v3689, 1
    %vm3691 = vcmp.lt.s32.totalorder %v3689, %v3690
    %v3692 = vsel %vm3691, %v3689, %v3690
    %vm3693 = vcmp.ge.s32.totalorder %v42, 8
    %v3694 = vsel %vm3693, %v3692, 0
    %s3695 = scalar_lea.vmem [#allocation4], 7
    %3696 = vst.msk [vmem:[%s3695] sm:$0x1] %vm3671, %v3694
    %v3697 = vld [vmem:[%s3606] sm:$0xff]
    %vm3698 = vcmp.eq.s32.totalorder %v44, %v3692
    %v3699 = vsel %vm3698, %v3697, 0
    %v3700 = vsel %vm112, %v3699, 0
    %v3701 = vrot.slane %v3700, 4
    %v3702 = vadd.s32 %v3700, %v3701
    %v3703 = vrot.slane %v3702, 2
    %v3704 = vadd.s32 %v3702, %v3703
    %v3705 = vrot.slane %v3704, 1
    %v3706 = vadd.s32 %v3704, %v3705
    %v3707 = vsel %vm3693, %v3706, %v3692
    %vm3708 = vcmp.ge.s32.totalorder %v42, 7
    %v3709 = vsel %vm3708, %v3707, 0
    %s3710 = scalar_lea.vmem [#allocation4], 6
    %3711 = vst.msk [vmem:[%s3710] sm:$0x1] %vm3671, %v3709
    %v3712 = vld [vmem:[%s3110] sm:$0xff]
    %v3713 = vlaneseq
    %v3714 = vshrl.u32 %v3713, 7
    %v3715 = vsub.s32 0, %v3714
    %v3716 = vrot.slane %v3707, %v3715
    %vm3717 = vcmp.eq.s32.totalorder %v44, %v3716
    %v3718 = vsel %vm3717, %v3712, 0
    %v3719 = vsel %vm112, %v3718, 0
    %v3720 = vrot.slane %v3719, 4
    %v3721 = vadd.s32 %v3719, %v3720
    %v3722 = vrot.slane %v3721, 2
    %v3723 = vadd.s32 %v3721, %v3722
    %v3724 = vrot.slane %v3723, 1
    %v3725 = vadd.s32 %v3723, %v3724
    %v3726 = vsel %vm3708, %v3725, %v3707
    %vm3727 = vcmp.ge.s32.totalorder %v42, 6
    %v3728 = vsel %vm3727, %v3726, 0
    %s3729 = scalar_lea.vmem [#allocation4], 5
    %3730 = vst.msk [vmem:[%s3729] sm:$0x1] %vm3671, %v3728
    %v3731 = vld [vmem:[%s2614] sm:$0xff]
    %v3732 = vlaneseq
    %v3733 = vshrl.u32 %v3732, 7
    %v3734 = vsub.s32 0, %v3733
    %v3735 = vrot.slane %v3726, %v3734
    %vm3736 = vcmp.eq.s32.totalorder %v44, %v3735
    %v3737 = vsel %vm3736, %v3731, 0
    %v3738 = vsel %vm112, %v3737, 0
    %v3739 = vrot.slane %v3738, 4
    %v3740 = vadd.s32 %v3738, %v3739
    %v3741 = vrot.slane %v3740, 2
    %v3742 = vadd.s32 %v3740, %v3741
    %v3743 = vrot.slane %v3742, 1
    %v3744 = vadd.s32 %v3742, %v3743
    %v3745 = vsel %vm3727, %v3744, %v3726
    %vm3746 = vcmp.ge.s32.totalorder %v42, 5
    %v3747 = vsel %vm3746, %v3745, 0
    %s3748 = scalar_lea.vmem [#allocation4], 4
    %3749 = vst.msk [vmem:[%s3748] sm:$0x1] %vm3671, %v3747
    %v3750 = vld [vmem:[%s2118] sm:$0xff]
    %v3751 = vlaneseq
    %v3752 = vshrl.u32 %v3751, 7
    %v3753 = vsub.s32 0, %v3752
    %v3754 = vrot.slane %v3745, %v3753
    %vm3755 = vcmp.eq.s32.totalorder %v44, %v3754
    %v3756 = vsel %vm3755, %v3750, 0
    %v3757 = vsel %vm112, %v3756, 0
    %v3758 = vrot.slane %v3757, 4
    %v3759 = vadd.s32 %v3757, %v3758
    %v3760 = vrot.slane %v3759, 2
    %v3761 = vadd.s32 %v3759, %v3760
    %v3762 = vrot.slane %v3761, 1
    %v3763 = vadd.s32 %v3761, %v3762
    %v3764 = vsel %vm3746, %v3763, %v3745
    %vm3765 = vcmp.ge.s32.totalorder %v42, 4
    %v3766 = vsel %vm3765, %v3764, 0
    %s3767 = scalar_lea.vmem [#allocation4], 3
    %3768 = vst.msk [vmem:[%s3767] sm:$0x1] %vm3671, %v3766
    %v3769 = vld [vmem:[%s1622] sm:$0xff]
    %v3770 = vlaneseq
    %v3771 = vshrl.u32 %v3770, 7
    %v3772 = vsub.s32 0, %v3771
    %v3773 = vrot.slane %v3764, %v3772
    %vm3774 = vcmp.eq.s32.totalorder %v44, %v3773
    %v3775 = vsel %vm3774, %v3769, 0
    %v3776 = vsel %vm112, %v3775, 0
    %v3777 = vrot.slane %v3776, 4
    %v3778 = vadd.s32 %v3776, %v3777
    %v3779 = vrot.slane %v3778, 2
    %v3780 = vadd.s32 %v3778, %v3779
    %v3781 = vrot.slane %v3780, 1
    %v3782 = vadd.s32 %v3780, %v3781
    %v3783 = vsel %vm3765, %v3782, %v3764
    %vm3784 = vcmp.ge.s32.totalorder %v42, 3
    %v3785 = vsel %vm3784, %v3783, 0
    %s3786 = scalar_lea.vmem [#allocation4], 2
    %3787 = vst.msk [vmem:[%s3786] sm:$0x1] %vm3671, %v3785
    %v3788 = vld [vmem:[%s1126] sm:$0xff]
    %v3789 = vlaneseq
    %v3790 = vshrl.u32 %v3789, 7
    %v3791 = vsub.s32 0, %v3790
    %v3792 = vrot.slane %v3783, %v3791
    %vm3793 = vcmp.eq.s32.totalorder %v44, %v3792
    %v3794 = vsel %vm3793, %v3788, 0
    %v3795 = vsel %vm112, %v3794, 0
    %v3796 = vrot.slane %v3795, 4
    %v3797 = vadd.s32 %v3795, %v3796
    %v3798 = vrot.slane %v3797, 2
    %v3799 = vadd.s32 %v3797, %v3798
    %v3800 = vrot.slane %v3799, 1
    %v3801 = vadd.s32 %v3799, %v3800
    %v3802 = vsel %vm3784, %v3801, %v3783
    %vm3803 = vcmp.ge.s32.totalorder %v42, 2
    %v3804 = vsel %vm3803, %v3802, 0
    %s3805 = scalar_lea.vmem [#allocation4], 1
    %3806 = vst.msk [vmem:[%s3805] sm:$0x1] %vm3671, %v3804
    %v3807 = vld [vmem:[%s630] sm:$0xff]
    %v3808 = vlaneseq
    %v3809 = vshrl.u32 %v3808, 7
    %v3810 = vsub.s32 0, %v3809
    %v3811 = vrot.slane %v3802, %v3810
    %vm3812 = vcmp.eq.s32.totalorder %v44, %v3811
    %v3813 = vsel %vm3812, %v3807, 0
    %v3814 = vsel %vm112, %v3813, 0
    %v3815 = vrot.slane %v3814, 4
    %v3816 = vadd.s32 %v3814, %v3815
    %v3817 = vrot.slane %v3816, 2
    %v3818 = vadd.s32 %v3816, %v3817
    %v3819 = vrot.slane %v3818, 1
    %v3820 = vadd.s32 %v3818, %v3819
    %v3821 = vsel %vm3803, %v3820, %v3802
    %vm3822 = vcmp.ge.s32.totalorder %v42, 1
    %v3823 = vsel %vm3822, %v3821, 0
    %3824 = vst.msk [vmem:[#allocation4] sm:$0x1] %vm3671, %v3823
    %v3825 = vld [vmem:[#allocation4] sm:$0x1]
    %v3826 = vld [vmem:[#allocation4 + $0x1] sm:$0x1]
    %v3827 = vld [vmem:[#allocation4 + $0x2] sm:$0x1]
    %v3828 = vld [vmem:[#allocation4 + $0x3] sm:$0x1]
    %v3829 = vld [vmem:[#allocation4 + $0x4] sm:$0x1]
    %v3830 = vld [vmem:[#allocation4 + $0x5] sm:$0x1]
    %v3831 = vld [vmem:[#allocation4 + $0x6] sm:$0x1]
    %v3832 = vld [vmem:[#allocation4 + $0x7] sm:$0x1]
    %3833 = vst.msk [vmem:[%s11] sm:$0x1] %vm3671, %v3825
    %3834 = vst.msk [vmem:[%s11 + $0x1] sm:$0x1] %vm3671, %v3826
    %3835 = vst.msk [vmem:[%s11 + $0x2] sm:$0x1] %vm3671, %v3827
    %3836 = vst.msk [vmem:[%s11 + $0x3] sm:$0x1] %vm3671, %v3828
    %3837 = vst.msk [vmem:[%s11 + $0x4] sm:$0x1] %vm3671, %v3829
    %3838 = vst.msk [vmem:[%s11 + $0x5] sm:$0x1] %vm3671, %v3830
    %3839 = vst.msk [vmem:[%s11 + $0x6] sm:$0x1] %vm3671, %v3831
    %3840 = vst.msk [vmem:[%s11 + $0x7] sm:$0x1] %vm3671, %v3832
    // Predicated region
    $region42: #{tpu_custom_call.1} parent=1 // pred_check
      _
    $region43: #{tpu_custom_call.1} parent=1 // pred_check_branch
      %3842 = sbr.rel (0) target = $region45
    $region44: #{tpu_custom_call.1} parent=1 // pred_region
      %s3844 = ssub.s32 16, 16
      %3845 = vsyncadd [#allocation6], %s3844
      %s3847 = sshll.u32 [#allocation5], 4
      %s3848 = int_to_ptr.vmem [resolvable:$true] %s3847
      %3850 = dma.vmem_to_hbm [thread:$0]  %s3848, 16, %s10, [#allocation6]
    $region45: #{tpu_custom_call.1} parent=1 // pred_fallthru
      _
    // Predicated region
    $region46: #{tpu_custom_call.1} parent=1 // pred_check
      _
    $region47: #{tpu_custom_call.1} parent=1 // pred_check_branch
      %3852 = sbr.rel (0) target = $region49
    $region48: #{tpu_custom_call.1} parent=1 // pred_region
      _
    $region49: #{tpu_custom_call.1} parent=1 // pred_fallthru
      _
    // Predicated region
    $region50: #{tpu_custom_call.1} parent=1 // pred_check
      _
    $region51: #{tpu_custom_call.1} parent=1 // pred_check_branch
      %3854 = sbr.rel (0) target = $region53
    $region52: #{tpu_custom_call.1} parent=1 // pred_region
      %3855 = dma.done [#allocation6], 16
    $region53: #{tpu_custom_call.1} parent=1 // pred_fallthru
      _
    // Predicated region
    $region54: #{tpu_custom_call.1} parent=1 // pred_check
      _
    $region55: #{tpu_custom_call.1} parent=1 // pred_check_branch
      %3857 = sbr.rel (0) target = $region57
    $region56: #{tpu_custom_call.1} parent=1 // pred_region
      _
    $region57: #{tpu_custom_call.1} parent=1 // pred_fallthru
      _
    %3858 = vsyncpa [#allocation6], 1

</llo_original>
